<compile_context>
chip_gen: v5e
topology: v5e:2x2
jax: 0.10.0
libtpu: 0.0.40
codegen_flags: <defaults>
</compile_context>

<pallas_src>
import functools

import jax
import jax.numpy as jnp
import numpy as np
from jax.experimental import pallas as pl
from jax.experimental.pallas import tpu as pltpu

# ----------------------- static network geometry --------------------------- #
C_IN, H_IN, W_IN = 3, 128, 32          # fc1 = Linear(16*29*5, 120) forces this
KH, KW = 5, 5
C1_OUT = 6
HO1, WO1 = H_IN - KH + 1, W_IN - KW + 1        # 124, 28
HP1, WP1 = HO1 // 2, WO1 // 2                  # 62, 14
C2_OUT = 16
HO2, WO2 = HP1 - KH + 1, WP1 - KW + 1          # 58, 10
HP2, WP2 = HO2 // 2, WO2 // 2                  # 29, 5
FC1_IN = C2_OUT * HP2 * WP2                    # 2320

LANE = 128
K1 = KH * C_IN * W_IN                          # 480  (stacked-K conv1)
N1 = 2 * LANE                                  # 256  (even-j half | odd-j half)
R1 = 128                                       # conv1 rows: 4 parity blocks of 32
K2 = 6 * LANE                                  # 768  (six height slabs)
N2 = 4 * LANE                                  # 512  (g-parity x t-parity halves)
FLAT = HP2 * LANE                              # 3712 (lane-padded fc1 K)


# ------------------------------ Pallas kernel ------------------------------ #

def _make_kernel(bblk):
    def kernel(x_ref, a1_ref, b1_ref, w2_ref, b2_ref,
               wfc1_ref, bfc1_ref, wfc2_ref, bfc2_ref, w3_ref, b3_ref, out_ref):
        dot = functools.partial(jnp.dot, preferred_element_type=jnp.float32)

        feats = []
        for b in range(bblk):                      # static unroll over the image block
            # conv1 + ReLU: ONE stacked-K matmul (128, 480) @ (480, 256).
            y1 = jnp.maximum(dot(x_ref[b], a1_ref[...]) + b1_ref[...], 0.0)   # (128,256) f32

            # pool1, width pairs: the two 128-lane halves (tile-aligned split).
            cm1 = jnp.maximum(y1[:, :LANE], y1[:, LANE:])                     # (128,128)

            # pool1, height pairs: rows are parity-grouped -> aligned 32-row blocks.
            # p_top[r] = pooled row 2r, p_bot[r] = pooled row 2r+1 (row 31 = unused pad).
            p_top = jnp.maximum(cm1[0:32], cm1[32:64])                        # (32,128)
            p_bot = jnp.maximum(cm1[64:96], cm1[96:128])                      # (32,128)

            # conv2 stacked-K LHS: six height slabs (pooled rows 2pg+e, e=0..5)
            # side by side in lanes.  All slices are contiguous.
            xs = jnp.concatenate(
                [p_top[0:HP2],     p_bot[0:HP2],
                 p_top[1:HP2 + 1], p_bot[1:HP2 + 1],
                 p_top[2:HP2 + 2], p_bot[2:HP2 + 2]],
                axis=1).astype(jnp.bfloat16)                                   # (29,768)

            # conv2 + ReLU: ONE matmul producing even- and odd-row outputs side by side.
            y2 = jnp.maximum(dot(xs, w2_ref[...]) + b2_ref[...], 0.0)          # (29,512) f32

            # pool2: full 2x2 max = max over four lane-aligned 128-wide slices.
            p2 = jnp.maximum(jnp.maximum(y2[:, 0:128], y2[:, 128:256]),
                             jnp.maximum(y2[:, 256:384], y2[:, 384:512]))      # (29,128)

            # flatten (29,128) -> (1, 3712): plain row slices + lane concat
            # (kept as explicit slices/concat so the lowering is trivially supported).
            feats.append(jnp.concatenate([p2[r:r + 1, :] for r in range(HP2)], axis=1))

        # fc stage batched over the image block (single dots, M = bblk).
        f = jnp.concatenate(feats, axis=0).astype(jnp.bfloat16)                # (bblk,3712)
        h = jnp.maximum(dot(f, wfc1_ref[...]) + bfc1_ref[...], 0.0)            # (bblk,120)
        h = jnp.maximum(dot(h.astype(jnp.bfloat16), wfc2_ref[...])
                        + bfc2_ref[...], 0.0)                                  # (bblk,84)
        # fc3 (no ReLU, matching the torch forward): lane reduction (XLU, off the MXU).
        out = jnp.sum(h * w3_ref[...], axis=1, keepdims=True) + b3_ref[...]    # (bblk,1)
        out_ref[...] = out

    return kernel


# --------------------- host/XLA-side input preprocessing ------------------- #
# Conv1 output-row ordering: 4 blocks of 32 rows; block a, row r -> height 4r+a
# (r < 31), row 31 of each block is a zero pad.  This makes pool1's height
# pairs and conv2's height slabs contiguous slices inside the kernel.

def _conv1_row_order():
    order = np.full((R1,), -1, np.int64)
    for a in range(4):
        for r in range(31):
            order[a * 32 + r] = 4 * r + a
    return order


_ROW_ORDER = _conv1_row_order()
_ROW_VALID = _ROW_ORDER >= 0
_ROW_IDX = np.where(_ROW_VALID, _ROW_ORDER, 0)


def _build_x1cols(x):
    """x: (B, 3, 128, 32) f32 -> (B, 128, 480) bf16 row-im2col (parity-grouped rows)."""
    B = x.shape[0]
    valid = jnp.asarray(_ROW_VALID)[None, None, :, None]
    slabs = []
    for ki in range(KH):
        s = x[:, :, _ROW_IDX + ki, :]                         # (B, 3, 128, 32)
        s = jnp.where(valid, s, 0.0)
        s = jnp.transpose(s, (0, 2, 1, 3)).reshape(B, R1, C_IN * W_IN)
        slabs.append(s)
    return jnp.concatenate(slabs, axis=-1).astype(jnp.bfloat16)   # (B, 128, 480)


@jax.jit
def lenet_forward(x, kp):
    """x: (B, 3, 128, 32) float32 NCHW.  kp: packed params from prepare_params."""
    B = x.shape[0]
    bblk = B if B <= 8 else 8                    # images per grid step
    b_pad = ((B + bblk - 1) // bblk) * bblk
    nblk = b_pad // bblk

    xcols = _build_x1cols(x)
    if b_pad != B:
        xcols = jnp.pad(xcols, ((0, b_pad - B), (0, 0), (0, 0)))

    def full(a):  # whole-array VMEM-resident block (index map is constant -> DMA'd once)
        nd = a.ndim
        return pl.BlockSpec(a.shape, lambda g, _nd=nd: (0,) * _nd)

    out = pl.pallas_call(
        _make_kernel(bblk),
        out_shape=jax.ShapeDtypeStruct((b_pad, 1), jnp.float32),
        grid=(nblk,),
        in_specs=[
            pl.BlockSpec((bblk, R1, K1), lambda g: (g, 0, 0)),
            full(kp["a1"]), full(kp["b1"]),
            full(kp["w2"]), full(kp["b2"]),
            full(kp["wfc1"]), full(kp["bfc1"]),
            full(kp["wfc2"]), full(kp["bfc2"]),
            full(kp["w3"]), full(kp["b3"]),
        ],
        out_specs=pl.BlockSpec((bblk, 1), lambda g: (g, 0)),
        compiler_params=pltpu.CompilerParams(
            dimension_semantics=("parallel",),
            vmem_limit_bytes=32 * 1024 * 1024,
        ),
    )(xcols, kp["a1"], kp["b1"], kp["w2"], kp["b2"],
      kp["wfc1"], kp["bfc1"], kp["wfc2"], kp["bfc2"], kp["w3"], kp["b3"])
    return out[:B, 0]


# ------------------ host-side packing of torch-layout params --------------- #

def prepare_params(raw):
    # Geometry assumptions behind the parity/half-split packing.
    assert WO1 % 2 == 0 and WO2 % 2 == 0 and HO1 % 2 == 0 and HO2 % 2 == 0
    assert C1_OUT * WP1 <= LANE and C2_OUT * WP2 <= LANE

    w1 = np.asarray(raw["conv1_w"], np.float32)   # (6, 3, 5, 5)
    b1 = np.asarray(raw["conv1_b"], np.float32)
    w2 = np.asarray(raw["conv2_w"], np.float32)   # (16, 6, 5, 5)
    b2 = np.asarray(raw["conv2_b"], np.float32)
    fc1_w = np.asarray(raw["fc1_w"], np.float32)  # (120, 2320)
    fc1_b = np.asarray(raw["fc1_b"], np.float32)
    fc2_w = np.asarray(raw["fc2_w"], np.float32)  # (84, 120)
    fc2_b = np.asarray(raw["fc2_b"], np.float32)
    fc3_w = np.asarray(raw["fc3_w"], np.float32)  # (1, 84)
    fc3_b = np.asarray(raw["fc3_b"], np.float32)

    # conv1 Toeplitz (480, 256): row k = ki*96 + c*32 + iw, col = (j%2)*128 + o*14 + j//2.
    a1 = np.zeros((K1, N1), np.float32)
    b1row = np.zeros((1, N1), np.float32)
    for o in range(C1_OUT):
        for j in range(WO1):
            col = (j % 2) * LANE + o * WP1 + j // 2
            b1row[0, col] = b1[o]
            for c in range(C_IN):
                for ki in range(KH):
                    for kj in range(KW):
                        a1[ki * (C_IN * W_IN) + c * W_IN + (j + kj), col] += w1[o, c, ki, kj]

    # conv2 big Toeplitz (768, 512):
    #   rows  : slab e*128 + (o*14 + pooled_width_index)
    #   cols  : [0:256)  even output rows g=2pg   (u2*128 + m*5 + pt)
    #           [256:512) odd  output rows g=2pg+1
    w2big = np.zeros((K2, N2), np.float32)
    b2row = np.zeros((1, N2), np.float32)
    for m in range(C2_OUT):
        for t in range(WO2):
            ncol = (t % 2) * LANE + m * WP2 + t // 2
            b2row[0, ncol] = b2[m]
            b2row[0, 2 * LANE + ncol] = b2[m]
            for o in range(C1_OUT):
                for ki in range(KH):
                    for kj in range(KW):
                        row = o * WP1 + (t + kj)
                        w2big[ki * LANE + row, ncol] += w2[m, o, ki, kj]                # even g
                        w2big[(ki + 1) * LANE + row, 2 * LANE + ncol] += w2[m, o, ki, kj]  # odd g

    # fc1 weights permuted to the kernel's flatten layout: row pg*128 + (m*5 + pt)
    # corresponds to torch flat index m*145 + pg*5 + pt; pad lanes [80:128) are zero.
    wtmp = (fc1_w.reshape(120, C2_OUT, HP2, WP2)
            .transpose(2, 1, 3, 0)
            .reshape(HP2, C2_OUT * WP2, 120))
    wfc1 = np.zeros((HP2, LANE, 120), np.float32)
    wfc1[:, :C2_OUT * WP2, :] = wtmp
    wfc1 = wfc1.reshape(FLAT, 120)

    return dict(
        a1=jnp.asarray(a1, jnp.bfloat16),
        b1=jnp.asarray(b1row),
        w2=jnp.asarray(w2big, jnp.bfloat16),
        b2=jnp.asarray(b2row),
        wfc1=jnp.asarray(wfc1, jnp.bfloat16),
        bfc1=jnp.asarray(fc1_b.reshape(1, -1)),
        wfc2=jnp.asarray(fc2_w.T.copy(), jnp.bfloat16),
        bfc2=jnp.asarray(fc2_b.reshape(1, -1)),
        w3=jnp.asarray(fc3_w),                    # (1, 84) f32, used elementwise
        b3=jnp.asarray(fc3_b.reshape(1, 1)),
    )


# ------------------------- deterministic raw params ------------------------ #

def init_params(key):
    ks = jax.random.split(key, 10)

    def u(k, shape, fan_in):
        bound = 1.0 / np.sqrt(fan_in)
        return jax.random.uniform(k, shape, jnp.float32, -bound, bound)

    return dict(
        conv1_w=u(ks[0], (6, 3, 5, 5), 3 * 25), conv1_b=u(ks[1], (6,), 3 * 25),
        conv2_w=u(ks[2], (16, 6, 5, 5), 6 * 25), conv2_b=u(ks[3], (16,), 6 * 25),
        fc1_w=u(ks[4], (120, FC1_IN), FC1_IN), fc1_b=u(ks[5], (120,), FC1_IN),
        fc2_w=u(ks[6], (84, 120), 120), fc2_b=u(ks[7], (84,), 120),
        fc3_w=u(ks[8], (1, 84), 84), fc3_b=u(ks[9], (1,), 84),
    )


# --------------------------- numpy float64 reference ----------------------- #

def ref_forward_np(x, raw):
    x = np.asarray(x, np.float64)
    g = {k: np.asarray(v, np.float64) for k, v in raw.items()}

    def conv2d(xx, w, b):
        B, C, H, W = xx.shape
        O, _, kh, kw = w.shape
        Ho, Wo = H - kh + 1, W - kw + 1
        cols = np.empty((B, Ho, Wo, C * kh * kw), np.float64)
        i = 0
        for c in range(C):
            for di in range(kh):
                for dj in range(kw):
                    cols[..., i] = xx[:, c, di:di + Ho, dj:dj + Wo]
                    i += 1
        return np.einsum("bhwk,ok->bohw", cols, w.reshape(O, -1)) + b.reshape(1, O, 1, 1)

    def pool2(xx):
        B, C, H, W = xx.shape
        return xx.reshape(B, C, H // 2, 2, W // 2, 2).max(axis=(3, 5))

    y = pool2(np.maximum(conv2d(x, g["conv1_w"], g["conv1_b"]), 0.0))
    y = pool2(np.maximum(conv2d(y, g["conv2_w"], g["conv2_b"]), 0.0))
    f = y.reshape(x.shape[0], -1)
    h = np.maximum(f @ g["fc1_w"].T + g["fc1_b"], 0.0)
    h = np.maximum(h @ g["fc2_w"].T + g["fc2_b"], 0.0)
    out = h @ g["fc3_w"].T + g["fc3_b"]
    return out[:, 0]


if __name__ == "__main__":
    key = jax.random.PRNGKey(0)
    kx, kparam = jax.random.split(key)
    # fc1 = Linear(16*29*5, 120) forces the NCHW input to (B, 3, 128, 32); B = 2.
    x = jax.random.normal(kx, (2, C_IN, H_IN, W_IN), jnp.float32)
    raw = init_params(kparam)
    kp = prepare_params(raw)

    y = lenet_forward(x, kp)
    y = jax.block_until_ready(y)

    y_ref = ref_forward_np(np.asarray(x), raw)
    assert y.shape == (2,)
    # bf16 operands / f32 accumulation (same effective MXU precision as before).
    np.testing.assert_allclose(np.asarray(y, np.float64), y_ref, rtol=3e-2, atol=3e-2)
    print("KERNEL_OK")
</pallas_src>

<mosaic_0001>
module attributes {stable_mosaic.version = 11 : i64} {
  func.func @kernel(%arg0: i32, %arg1: memref<2x128x480xbf16, #tpu.memory_space<vmem>>, %arg2: memref<480x256xbf16, #tpu.memory_space<vmem>>, %arg3: memref<1x256xf32, #tpu.memory_space<vmem>>, %arg4: memref<768x512xbf16, #tpu.memory_space<vmem>>, %arg5: memref<1x512xf32, #tpu.memory_space<vmem>>, %arg6: memref<3712x120xbf16, #tpu.memory_space<vmem>>, %arg7: memref<1x120xf32, #tpu.memory_space<vmem>>, %arg8: memref<120x84xbf16, #tpu.memory_space<vmem>>, %arg9: memref<1x84xf32, #tpu.memory_space<vmem>>, %arg10: memref<1x84xf32, #tpu.memory_space<vmem>>, %arg11: memref<1x1xf32, #tpu.memory_space<vmem>>, %arg12: memref<2x1xf32, #tpu.memory_space<vmem>>) attributes {dimension_semantics = [#tpu.dimension_semantics<parallel>], iteration_bounds = array<i64: 1>, scalar_prefetch = 0 : i64, scratch_operands = 0 : i64, tpu.core_type = #tpu.core_type<tc>, window_params = [{transform_indices = @transform_0, window_bounds = array<i64: 2, 128, 480>}, {pipeline_mode = #tpu.pipeline_mode<synchronous>, transform_indices = @transform_1, window_bounds = array<i64: 480, 256>}, {pipeline_mode = #tpu.pipeline_mode<synchronous>, transform_indices = @transform_2, window_bounds = array<i64: 1, 256>}, {pipeline_mode = #tpu.pipeline_mode<synchronous>, transform_indices = @transform_3, window_bounds = array<i64: 768, 512>}, {pipeline_mode = #tpu.pipeline_mode<synchronous>, transform_indices = @transform_4, window_bounds = array<i64: 1, 512>}, {pipeline_mode = #tpu.pipeline_mode<synchronous>, transform_indices = @transform_5, window_bounds = array<i64: 3712, 120>}, {pipeline_mode = #tpu.pipeline_mode<synchronous>, transform_indices = @transform_6, window_bounds = array<i64: 1, 120>}, {pipeline_mode = #tpu.pipeline_mode<synchronous>, transform_indices = @transform_7, window_bounds = array<i64: 120, 84>}, {pipeline_mode = #tpu.pipeline_mode<synchronous>, transform_indices = @transform_8, window_bounds = array<i64: 1, 84>}, {pipeline_mode = #tpu.pipeline_mode<synchronous>, transform_indices = @transform_9, window_bounds = array<i64: 1, 84>}, {pipeline_mode = #tpu.pipeline_mode<synchronous>, transform_indices = @transform_10, window_bounds = array<i64: 1, 1>}, {transform_indices = @transform_11, window_bounds = array<i64: 2, 1>}]} {
    %c0 = arith.constant 0 : index
    %c0_0 = arith.constant 0 : index
    %c0_1 = arith.constant 0 : index
    %0 = vector.load %arg1[%c0, %c0_0, %c0_1] : memref<2x128x480xbf16, #tpu.memory_space<vmem>>, vector<1x128x480xbf16>
    %1 = vector.shape_cast %0 : vector<1x128x480xbf16> to vector<128x480xbf16>
    %c0_2 = arith.constant 0 : index
    %c0_3 = arith.constant 0 : index
    %2 = vector.load %arg2[%c0_2, %c0_3] : memref<480x256xbf16, #tpu.memory_space<vmem>>, vector<480x256xbf16>
    %cst = arith.constant dense<0.000000e+00> : vector<128x256xf32>
    %3 = tpu.matmul %1, %2, %cst {dimension_numbers = #tpu.dot_dimension_numbers<[1], [0], [0], [1], [0, 0, 1, 1], [], []>} : vector<128x480xbf16>, vector<480x256xbf16>, vector<128x256xf32> -> vector<128x256xf32>
    %c0_4 = arith.constant 0 : index
    %c0_5 = arith.constant 0 : index
    %4 = vector.load %arg3[%c0_4, %c0_5] : memref<1x256xf32, #tpu.memory_space<vmem>>, vector<1x256xf32>
    %5 = vector.broadcast %4 : vector<1x256xf32> to vector<128x256xf32>
    %6 = arith.addf %3, %5 : vector<128x256xf32>
    %cst_6 = arith.constant 0.000000e+00 : f32
    %7 = vector.broadcast %cst_6 : f32 to vector<128x256xf32>
    %8 = arith.maximumf %6, %7 : vector<128x256xf32>
    %9 = vector.extract_strided_slice %8 {offsets = [0, 0], sizes = [128, 128], strides = [1, 1]} : vector<128x256xf32> to vector<128x128xf32>
    %10 = vector.extract_strided_slice %8 {offsets = [0, 128], sizes = [128, 128], strides = [1, 1]} : vector<128x256xf32> to vector<128x128xf32>
    %11 = arith.maximumf %9, %10 : vector<128x128xf32>
    %12 = vector.extract_strided_slice %11 {offsets = [0, 0], sizes = [32, 128], strides = [1, 1]} : vector<128x128xf32> to vector<32x128xf32>
    %13 = vector.extract_strided_slice %11 {offsets = [32, 0], sizes = [32, 128], strides = [1, 1]} : vector<128x128xf32> to vector<32x128xf32>
    %14 = arith.maximumf %12, %13 : vector<32x128xf32>
    %15 = vector.extract_strided_slice %11 {offsets = [64, 0], sizes = [32, 128], strides = [1, 1]} : vector<128x128xf32> to vector<32x128xf32>
    %16 = vector.extract_strided_slice %11 {offsets = [96, 0], sizes = [32, 128], strides = [1, 1]} : vector<128x128xf32> to vector<32x128xf32>
    %17 = arith.maximumf %15, %16 : vector<32x128xf32>
    %18 = vector.extract_strided_slice %14 {offsets = [0, 0], sizes = [29, 128], strides = [1, 1]} : vector<32x128xf32> to vector<29x128xf32>
    %19 = vector.extract_strided_slice %17 {offsets = [0, 0], sizes = [29, 128], strides = [1, 1]} : vector<32x128xf32> to vector<29x128xf32>
    %20 = vector.extract_strided_slice %14 {offsets = [1, 0], sizes = [29, 128], strides = [1, 1]} : vector<32x128xf32> to vector<29x128xf32>
    %21 = vector.extract_strided_slice %17 {offsets = [1, 0], sizes = [29, 128], strides = [1, 1]} : vector<32x128xf32> to vector<29x128xf32>
    %22 = vector.extract_strided_slice %14 {offsets = [2, 0], sizes = [29, 128], strides = [1, 1]} : vector<32x128xf32> to vector<29x128xf32>
    %23 = vector.extract_strided_slice %17 {offsets = [2, 0], sizes = [29, 128], strides = [1, 1]} : vector<32x128xf32> to vector<29x128xf32>
    %24 = tpu.concatenate %18, %19, %20, %21, %22, %23 in 1 : vector<29x128xf32>, vector<29x128xf32>, vector<29x128xf32>, vector<29x128xf32>, vector<29x128xf32>, vector<29x128xf32> -> vector<29x768xf32>
    %25 = arith.truncf %24 : vector<29x768xf32> to vector<29x768xbf16>
    %c0_7 = arith.constant 0 : index
    %c0_8 = arith.constant 0 : index
    %26 = vector.load %arg4[%c0_7, %c0_8] : memref<768x512xbf16, #tpu.memory_space<vmem>>, vector<768x512xbf16>
    %cst_9 = arith.constant dense<0.000000e+00> : vector<29x512xf32>
    %27 = tpu.matmul %25, %26, %cst_9 {dimension_numbers = #tpu.dot_dimension_numbers<[1], [0], [0], [1], [0, 0, 1, 1], [], []>} : vector<29x768xbf16>, vector<768x512xbf16>, vector<29x512xf32> -> vector<29x512xf32>
    %c0_10 = arith.constant 0 : index
    %c0_11 = arith.constant 0 : index
    %28 = vector.load %arg5[%c0_10, %c0_11] : memref<1x512xf32, #tpu.memory_space<vmem>>, vector<1x512xf32>
    %29 = vector.broadcast %28 : vector<1x512xf32> to vector<29x512xf32>
    %30 = arith.addf %27, %29 : vector<29x512xf32>
    %cst_12 = arith.constant 0.000000e+00 : f32
    %31 = vector.broadcast %cst_12 : f32 to vector<29x512xf32>
    %32 = arith.maximumf %30, %31 : vector<29x512xf32>
    %33 = vector.extract_strided_slice %32 {offsets = [0, 0], sizes = [29, 128], strides = [1, 1]} : vector<29x512xf32> to vector<29x128xf32>
    %34 = vector.extract_strided_slice %32 {offsets = [0, 128], sizes = [29, 128], strides = [1, 1]} : vector<29x512xf32> to vector<29x128xf32>
    %35 = arith.maximumf %33, %34 : vector<29x128xf32>
    %36 = vector.extract_strided_slice %32 {offsets = [0, 256], sizes = [29, 128], strides = [1, 1]} : vector<29x512xf32> to vector<29x128xf32>
    %37 = vector.extract_strided_slice %32 {offsets = [0, 384], sizes = [29, 128], strides = [1, 1]} : vector<29x512xf32> to vector<29x128xf32>
    %38 = arith.maximumf %36, %37 : vector<29x128xf32>
    %39 = arith.maximumf %35, %38 : vector<29x128xf32>
    %40 = vector.extract_strided_slice %39 {offsets = [0, 0], sizes = [1, 128], strides = [1, 1]} : vector<29x128xf32> to vector<1x128xf32>
    %41 = vector.extract_strided_slice %39 {offsets = [1, 0], sizes = [1, 128], strides = [1, 1]} : vector<29x128xf32> to vector<1x128xf32>
    %42 = vector.extract_strided_slice %39 {offsets = [2, 0], sizes = [1, 128], strides = [1, 1]} : vector<29x128xf32> to vector<1x128xf32>
    %43 = vector.extract_strided_slice %39 {offsets = [3, 0], sizes = [1, 128], strides = [1, 1]} : vector<29x128xf32> to vector<1x128xf32>
    %44 = vector.extract_strided_slice %39 {offsets = [4, 0], sizes = [1, 128], strides = [1, 1]} : vector<29x128xf32> to vector<1x128xf32>
    %45 = vector.extract_strided_slice %39 {offsets = [5, 0], sizes = [1, 128], strides = [1, 1]} : vector<29x128xf32> to vector<1x128xf32>
    %46 = vector.extract_strided_slice %39 {offsets = [6, 0], sizes = [1, 128], strides = [1, 1]} : vector<29x128xf32> to vector<1x128xf32>
    %47 = vector.extract_strided_slice %39 {offsets = [7, 0], sizes = [1, 128], strides = [1, 1]} : vector<29x128xf32> to vector<1x128xf32>
    %48 = vector.extract_strided_slice %39 {offsets = [8, 0], sizes = [1, 128], strides = [1, 1]} : vector<29x128xf32> to vector<1x128xf32>
    %49 = vector.extract_strided_slice %39 {offsets = [9, 0], sizes = [1, 128], strides = [1, 1]} : vector<29x128xf32> to vector<1x128xf32>
    %50 = vector.extract_strided_slice %39 {offsets = [10, 0], sizes = [1, 128], strides = [1, 1]} : vector<29x128xf32> to vector<1x128xf32>
    %51 = vector.extract_strided_slice %39 {offsets = [11, 0], sizes = [1, 128], strides = [1, 1]} : vector<29x128xf32> to vector<1x128xf32>
    %52 = vector.extract_strided_slice %39 {offsets = [12, 0], sizes = [1, 128], strides = [1, 1]} : vector<29x128xf32> to vector<1x128xf32>
    %53 = vector.extract_strided_slice %39 {offsets = [13, 0], sizes = [1, 128], strides = [1, 1]} : vector<29x128xf32> to vector<1x128xf32>
    %54 = vector.extract_strided_slice %39 {offsets = [14, 0], sizes = [1, 128], strides = [1, 1]} : vector<29x128xf32> to vector<1x128xf32>
    %55 = vector.extract_strided_slice %39 {offsets = [15, 0], sizes = [1, 128], strides = [1, 1]} : vector<29x128xf32> to vector<1x128xf32>
    %56 = vector.extract_strided_slice %39 {offsets = [16, 0], sizes = [1, 128], strides = [1, 1]} : vector<29x128xf32> to vector<1x128xf32>
    %57 = vector.extract_strided_slice %39 {offsets = [17, 0], sizes = [1, 128], strides = [1, 1]} : vector<29x128xf32> to vector<1x128xf32>
    %58 = vector.extract_strided_slice %39 {offsets = [18, 0], sizes = [1, 128], strides = [1, 1]} : vector<29x128xf32> to vector<1x128xf32>
    %59 = vector.extract_strided_slice %39 {offsets = [19, 0], sizes = [1, 128], strides = [1, 1]} : vector<29x128xf32> to vector<1x128xf32>
    %60 = vector.extract_strided_slice %39 {offsets = [20, 0], sizes = [1, 128], strides = [1, 1]} : vector<29x128xf32> to vector<1x128xf32>
    %61 = vector.extract_strided_slice %39 {offsets = [21, 0], sizes = [1, 128], strides = [1, 1]} : vector<29x128xf32> to vector<1x128xf32>
    %62 = vector.extract_strided_slice %39 {offsets = [22, 0], sizes = [1, 128], strides = [1, 1]} : vector<29x128xf32> to vector<1x128xf32>
    %63 = vector.extract_strided_slice %39 {offsets = [23, 0], sizes = [1, 128], strides = [1, 1]} : vector<29x128xf32> to vector<1x128xf32>
    %64 = vector.extract_strided_slice %39 {offsets = [24, 0], sizes = [1, 128], strides = [1, 1]} : vector<29x128xf32> to vector<1x128xf32>
    %65 = vector.extract_strided_slice %39 {offsets = [25, 0], sizes = [1, 128], strides = [1, 1]} : vector<29x128xf32> to vector<1x128xf32>
    %66 = vector.extract_strided_slice %39 {offsets = [26, 0], sizes = [1, 128], strides = [1, 1]} : vector<29x128xf32> to vector<1x128xf32>
    %67 = vector.extract_strided_slice %39 {offsets = [27, 0], sizes = [1, 128], strides = [1, 1]} : vector<29x128xf32> to vector<1x128xf32>
    %68 = vector.extract_strided_slice %39 {offsets = [28, 0], sizes = [1, 128], strides = [1, 1]} : vector<29x128xf32> to vector<1x128xf32>
    %69 = tpu.concatenate %40, %41, %42, %43, %44, %45, %46, %47, %48, %49, %50, %51, %52, %53, %54, %55 in 1 : vector<1x128xf32>, vector<1x128xf32>, vector<1x128xf32>, vector<1x128xf32>, vector<1x128xf32>, vector<1x128xf32>, vector<1x128xf32>, vector<1x128xf32>, vector<1x128xf32>, vector<1x128xf32>, vector<1x128xf32>, vector<1x128xf32>, vector<1x128xf32>, vector<1x128xf32>, vector<1x128xf32>, vector<1x128xf32> -> vector<1x2048xf32>
    %70 = tpu.concatenate %56, %57, %58, %59, %60, %61, %62, %63, %64, %65, %66, %67, %68 in 1 : vector<1x128xf32>, vector<1x128xf32>, vector<1x128xf32>, vector<1x128xf32>, vector<1x128xf32>, vector<1x128xf32>, vector<1x128xf32>, vector<1x128xf32>, vector<1x128xf32>, vector<1x128xf32>, vector<1x128xf32>, vector<1x128xf32>, vector<1x128xf32> -> vector<1x1664xf32>
    %71 = tpu.concatenate %69, %70 in 1 : vector<1x2048xf32>, vector<1x1664xf32> -> vector<1x3712xf32>
    %c1 = arith.constant 1 : index
    %c0_13 = arith.constant 0 : index
    %c0_14 = arith.constant 0 : index
    %72 = vector.load %arg1[%c1, %c0_13, %c0_14] : memref<2x128x480xbf16, #tpu.memory_space<vmem>>, vector<1x128x480xbf16>
    %73 = vector.shape_cast %72 : vector<1x128x480xbf16> to vector<128x480xbf16>
    %c0_15 = arith.constant 0 : index
    %c0_16 = arith.constant 0 : index
    %74 = vector.load %arg2[%c0_15, %c0_16] : memref<480x256xbf16, #tpu.memory_space<vmem>>, vector<480x256xbf16>
    %cst_17 = arith.constant dense<0.000000e+00> : vector<128x256xf32>
    %75 = tpu.matmul %73, %74, %cst_17 {dimension_numbers = #tpu.dot_dimension_numbers<[1], [0], [0], [1], [0, 0, 1, 1], [], []>} : vector<128x480xbf16>, vector<480x256xbf16>, vector<128x256xf32> -> vector<128x256xf32>
    %c0_18 = arith.constant 0 : index
    %c0_19 = arith.constant 0 : index
    %76 = vector.load %arg3[%c0_18, %c0_19] : memref<1x256xf32, #tpu.memory_space<vmem>>, vector<1x256xf32>
    %77 = vector.broadcast %76 : vector<1x256xf32> to vector<128x256xf32>
    %78 = arith.addf %75, %77 : vector<128x256xf32>
    %cst_20 = arith.constant 0.000000e+00 : f32
    %79 = vector.broadcast %cst_20 : f32 to vector<128x256xf32>
    %80 = arith.maximumf %78, %79 : vector<128x256xf32>
    %81 = vector.extract_strided_slice %80 {offsets = [0, 0], sizes = [128, 128], strides = [1, 1]} : vector<128x256xf32> to vector<128x128xf32>
    %82 = vector.extract_strided_slice %80 {offsets = [0, 128], sizes = [128, 128], strides = [1, 1]} : vector<128x256xf32> to vector<128x128xf32>
    %83 = arith.maximumf %81, %82 : vector<128x128xf32>
    %84 = vector.extract_strided_slice %83 {offsets = [0, 0], sizes = [32, 128], strides = [1, 1]} : vector<128x128xf32> to vector<32x128xf32>
    %85 = vector.extract_strided_slice %83 {offsets = [32, 0], sizes = [32, 128], strides = [1, 1]} : vector<128x128xf32> to vector<32x128xf32>
    %86 = arith.maximumf %84, %85 : vector<32x128xf32>
    %87 = vector.extract_strided_slice %83 {offsets = [64, 0], sizes = [32, 128], strides = [1, 1]} : vector<128x128xf32> to vector<32x128xf32>
    %88 = vector.extract_strided_slice %83 {offsets = [96, 0], sizes = [32, 128], strides = [1, 1]} : vector<128x128xf32> to vector<32x128xf32>
    %89 = arith.maximumf %87, %88 : vector<32x128xf32>
    %90 = vector.extract_strided_slice %86 {offsets = [0, 0], sizes = [29, 128], strides = [1, 1]} : vector<32x128xf32> to vector<29x128xf32>
    %91 = vector.extract_strided_slice %89 {offsets = [0, 0], sizes = [29, 128], strides = [1, 1]} : vector<32x128xf32> to vector<29x128xf32>
    %92 = vector.extract_strided_slice %86 {offsets = [1, 0], sizes = [29, 128], strides = [1, 1]} : vector<32x128xf32> to vector<29x128xf32>
    %93 = vector.extract_strided_slice %89 {offsets = [1, 0], sizes = [29, 128], strides = [1, 1]} : vector<32x128xf32> to vector<29x128xf32>
    %94 = vector.extract_strided_slice %86 {offsets = [2, 0], sizes = [29, 128], strides = [1, 1]} : vector<32x128xf32> to vector<29x128xf32>
    %95 = vector.extract_strided_slice %89 {offsets = [2, 0], sizes = [29, 128], strides = [1, 1]} : vector<32x128xf32> to vector<29x128xf32>
    %96 = tpu.concatenate %90, %91, %92, %93, %94, %95 in 1 : vector<29x128xf32>, vector<29x128xf32>, vector<29x128xf32>, vector<29x128xf32>, vector<29x128xf32>, vector<29x128xf32> -> vector<29x768xf32>
    %97 = arith.truncf %96 : vector<29x768xf32> to vector<29x768xbf16>
    %c0_21 = arith.constant 0 : index
    %c0_22 = arith.constant 0 : index
    %98 = vector.load %arg4[%c0_21, %c0_22] : memref<768x512xbf16, #tpu.memory_space<vmem>>, vector<768x512xbf16>
    %cst_23 = arith.constant dense<0.000000e+00> : vector<29x512xf32>
    %99 = tpu.matmul %97, %98, %cst_23 {dimension_numbers = #tpu.dot_dimension_numbers<[1], [0], [0], [1], [0, 0, 1, 1], [], []>} : vector<29x768xbf16>, vector<768x512xbf16>, vector<29x512xf32> -> vector<29x512xf32>
    %c0_24 = arith.constant 0 : index
    %c0_25 = arith.constant 0 : index
    %100 = vector.load %arg5[%c0_24, %c0_25] : memref<1x512xf32, #tpu.memory_space<vmem>>, vector<1x512xf32>
    %101 = vector.broadcast %100 : vector<1x512xf32> to vector<29x512xf32>
    %102 = arith.addf %99, %101 : vector<29x512xf32>
    %cst_26 = arith.constant 0.000000e+00 : f32
    %103 = vector.broadcast %cst_26 : f32 to vector<29x512xf32>
    %104 = arith.maximumf %102, %103 : vector<29x512xf32>
    %105 = vector.extract_strided_slice %104 {offsets = [0, 0], sizes = [29, 128], strides = [1, 1]} : vector<29x512xf32> to vector<29x128xf32>
    %106 = vector.extract_strided_slice %104 {offsets = [0, 128], sizes = [29, 128], strides = [1, 1]} : vector<29x512xf32> to vector<29x128xf32>
    %107 = arith.maximumf %105, %106 : vector<29x128xf32>
    %108 = vector.extract_strided_slice %104 {offsets = [0, 256], sizes = [29, 128], strides = [1, 1]} : vector<29x512xf32> to vector<29x128xf32>
    %109 = vector.extract_strided_slice %104 {offsets = [0, 384], sizes = [29, 128], strides = [1, 1]} : vector<29x512xf32> to vector<29x128xf32>
    %110 = arith.maximumf %108, %109 : vector<29x128xf32>
    %111 = arith.maximumf %107, %110 : vector<29x128xf32>
    %112 = vector.extract_strided_slice %111 {offsets = [0, 0], sizes = [1, 128], strides = [1, 1]} : vector<29x128xf32> to vector<1x128xf32>
    %113 = vector.extract_strided_slice %111 {offsets = [1, 0], sizes = [1, 128], strides = [1, 1]} : vector<29x128xf32> to vector<1x128xf32>
    %114 = vector.extract_strided_slice %111 {offsets = [2, 0], sizes = [1, 128], strides = [1, 1]} : vector<29x128xf32> to vector<1x128xf32>
    %115 = vector.extract_strided_slice %111 {offsets = [3, 0], sizes = [1, 128], strides = [1, 1]} : vector<29x128xf32> to vector<1x128xf32>
    %116 = vector.extract_strided_slice %111 {offsets = [4, 0], sizes = [1, 128], strides = [1, 1]} : vector<29x128xf32> to vector<1x128xf32>
    %117 = vector.extract_strided_slice %111 {offsets = [5, 0], sizes = [1, 128], strides = [1, 1]} : vector<29x128xf32> to vector<1x128xf32>
    %118 = vector.extract_strided_slice %111 {offsets = [6, 0], sizes = [1, 128], strides = [1, 1]} : vector<29x128xf32> to vector<1x128xf32>
    %119 = vector.extract_strided_slice %111 {offsets = [7, 0], sizes = [1, 128], strides = [1, 1]} : vector<29x128xf32> to vector<1x128xf32>
    %120 = vector.extract_strided_slice %111 {offsets = [8, 0], sizes = [1, 128], strides = [1, 1]} : vector<29x128xf32> to vector<1x128xf32>
    %121 = vector.extract_strided_slice %111 {offsets = [9, 0], sizes = [1, 128], strides = [1, 1]} : vector<29x128xf32> to vector<1x128xf32>
    %122 = vector.extract_strided_slice %111 {offsets = [10, 0], sizes = [1, 128], strides = [1, 1]} : vector<29x128xf32> to vector<1x128xf32>
    %123 = vector.extract_strided_slice %111 {offsets = [11, 0], sizes = [1, 128], strides = [1, 1]} : vector<29x128xf32> to vector<1x128xf32>
    %124 = vector.extract_strided_slice %111 {offsets = [12, 0], sizes = [1, 128], strides = [1, 1]} : vector<29x128xf32> to vector<1x128xf32>
    %125 = vector.extract_strided_slice %111 {offsets = [13, 0], sizes = [1, 128], strides = [1, 1]} : vector<29x128xf32> to vector<1x128xf32>
    %126 = vector.extract_strided_slice %111 {offsets = [14, 0], sizes = [1, 128], strides = [1, 1]} : vector<29x128xf32> to vector<1x128xf32>
    %127 = vector.extract_strided_slice %111 {offsets = [15, 0], sizes = [1, 128], strides = [1, 1]} : vector<29x128xf32> to vector<1x128xf32>
    %128 = vector.extract_strided_slice %111 {offsets = [16, 0], sizes = [1, 128], strides = [1, 1]} : vector<29x128xf32> to vector<1x128xf32>
    %129 = vector.extract_strided_slice %111 {offsets = [17, 0], sizes = [1, 128], strides = [1, 1]} : vector<29x128xf32> to vector<1x128xf32>
    %130 = vector.extract_strided_slice %111 {offsets = [18, 0], sizes = [1, 128], strides = [1, 1]} : vector<29x128xf32> to vector<1x128xf32>
    %131 = vector.extract_strided_slice %111 {offsets = [19, 0], sizes = [1, 128], strides = [1, 1]} : vector<29x128xf32> to vector<1x128xf32>
    %132 = vector.extract_strided_slice %111 {offsets = [20, 0], sizes = [1, 128], strides = [1, 1]} : vector<29x128xf32> to vector<1x128xf32>
    %133 = vector.extract_strided_slice %111 {offsets = [21, 0], sizes = [1, 128], strides = [1, 1]} : vector<29x128xf32> to vector<1x128xf32>
    %134 = vector.extract_strided_slice %111 {offsets = [22, 0], sizes = [1, 128], strides = [1, 1]} : vector<29x128xf32> to vector<1x128xf32>
    %135 = vector.extract_strided_slice %111 {offsets = [23, 0], sizes = [1, 128], strides = [1, 1]} : vector<29x128xf32> to vector<1x128xf32>
    %136 = vector.extract_strided_slice %111 {offsets = [24, 0], sizes = [1, 128], strides = [1, 1]} : vector<29x128xf32> to vector<1x128xf32>
    %137 = vector.extract_strided_slice %111 {offsets = [25, 0], sizes = [1, 128], strides = [1, 1]} : vector<29x128xf32> to vector<1x128xf32>
    %138 = vector.extract_strided_slice %111 {offsets = [26, 0], sizes = [1, 128], strides = [1, 1]} : vector<29x128xf32> to vector<1x128xf32>
    %139 = vector.extract_strided_slice %111 {offsets = [27, 0], sizes = [1, 128], strides = [1, 1]} : vector<29x128xf32> to vector<1x128xf32>
    %140 = vector.extract_strided_slice %111 {offsets = [28, 0], sizes = [1, 128], strides = [1, 1]} : vector<29x128xf32> to vector<1x128xf32>
    %141 = tpu.concatenate %112, %113, %114, %115, %116, %117, %118, %119, %120, %121, %122, %123, %124, %125, %126, %127 in 1 : vector<1x128xf32>, vector<1x128xf32>, vector<1x128xf32>, vector<1x128xf32>, vector<1x128xf32>, vector<1x128xf32>, vector<1x128xf32>, vector<1x128xf32>, vector<1x128xf32>, vector<1x128xf32>, vector<1x128xf32>, vector<1x128xf32>, vector<1x128xf32>, vector<1x128xf32>, vector<1x128xf32>, vector<1x128xf32> -> vector<1x2048xf32>
    %142 = tpu.concatenate %128, %129, %130, %131, %132, %133, %134, %135, %136, %137, %138, %139, %140 in 1 : vector<1x128xf32>, vector<1x128xf32>, vector<1x128xf32>, vector<1x128xf32>, vector<1x128xf32>, vector<1x128xf32>, vector<1x128xf32>, vector<1x128xf32>, vector<1x128xf32>, vector<1x128xf32>, vector<1x128xf32>, vector<1x128xf32>, vector<1x128xf32> -> vector<1x1664xf32>
    %143 = tpu.concatenate %141, %142 in 1 : vector<1x2048xf32>, vector<1x1664xf32> -> vector<1x3712xf32>
    %144 = tpu.concatenate %71, %143 in 0 : vector<1x3712xf32>, vector<1x3712xf32> -> vector<2x3712xf32>
    %145 = arith.truncf %144 : vector<2x3712xf32> to vector<2x3712xbf16>
    %c0_27 = arith.constant 0 : index
    %c0_28 = arith.constant 0 : index
    %146 = vector.load %arg6[%c0_27, %c0_28] : memref<3712x120xbf16, #tpu.memory_space<vmem>>, vector<3712x120xbf16>
    %cst_29 = arith.constant dense<0.000000e+00> : vector<2x120xf32>
    %147 = tpu.matmul %145, %146, %cst_29 {dimension_numbers = #tpu.dot_dimension_numbers<[1], [0], [0], [1], [0, 0, 1, 1], [], []>} : vector<2x3712xbf16>, vector<3712x120xbf16>, vector<2x120xf32> -> vector<2x120xf32>
    %c0_30 = arith.constant 0 : index
    %c0_31 = arith.constant 0 : index
    %148 = vector.load %arg7[%c0_30, %c0_31] : memref<1x120xf32, #tpu.memory_space<vmem>>, vector<1x120xf32>
    %149 = vector.broadcast %148 : vector<1x120xf32> to vector<2x120xf32>
    %150 = arith.addf %147, %149 : vector<2x120xf32>
    %cst_32 = arith.constant 0.000000e+00 : f32
    %151 = vector.broadcast %cst_32 : f32 to vector<2x120xf32>
    %152 = arith.maximumf %150, %151 : vector<2x120xf32>
    %153 = arith.truncf %152 : vector<2x120xf32> to vector<2x120xbf16>
    %c0_33 = arith.constant 0 : index
    %c0_34 = arith.constant 0 : index
    %154 = vector.load %arg8[%c0_33, %c0_34] : memref<120x84xbf16, #tpu.memory_space<vmem>>, vector<120x84xbf16>
    %cst_35 = arith.constant dense<0.000000e+00> : vector<2x84xf32>
    %155 = tpu.matmul %153, %154, %cst_35 {dimension_numbers = #tpu.dot_dimension_numbers<[1], [0], [0], [1], [0, 0, 1, 1], [], []>} : vector<2x120xbf16>, vector<120x84xbf16>, vector<2x84xf32> -> vector<2x84xf32>
    %c0_36 = arith.constant 0 : index
    %c0_37 = arith.constant 0 : index
    %156 = vector.load %arg9[%c0_36, %c0_37] : memref<1x84xf32, #tpu.memory_space<vmem>>, vector<1x84xf32>
    %157 = vector.broadcast %156 : vector<1x84xf32> to vector<2x84xf32>
    %158 = arith.addf %155, %157 : vector<2x84xf32>
    %cst_38 = arith.constant 0.000000e+00 : f32
    %159 = vector.broadcast %cst_38 : f32 to vector<2x84xf32>
    %160 = arith.maximumf %158, %159 : vector<2x84xf32>
    %c0_39 = arith.constant 0 : index
    %c0_40 = arith.constant 0 : index
    %161 = vector.load %arg10[%c0_39, %c0_40] : memref<1x84xf32, #tpu.memory_space<vmem>>, vector<1x84xf32>
    %162 = vector.broadcast %161 : vector<1x84xf32> to vector<2x84xf32>
    %163 = arith.mulf %160, %162 : vector<2x84xf32>
    %cst_41 = arith.constant dense<0.000000e+00> : vector<2xf32>
    %164 = vector.multi_reduction <add>, %163, %cst_41 [1] : vector<2x84xf32> to vector<2xf32>
    %165 = vector.shape_cast %164 : vector<2xf32> to vector<2x1xf32>
    %c0_42 = arith.constant 0 : index
    %c0_43 = arith.constant 0 : index
    %166 = vector.load %arg11[%c0_42, %c0_43] : memref<1x1xf32, #tpu.memory_space<vmem>>, vector<1x1xf32>
    %167 = vector.broadcast %166 : vector<1x1xf32> to vector<2x1xf32>
    %168 = arith.addf %165, %167 : vector<2x1xf32>
    %c0_44 = arith.constant 0 : index
    %c0_45 = arith.constant 0 : index
    %169 = vector.load %arg12[%c0_44, %c0_45] : memref<2x1xf32, #tpu.memory_space<vmem>>, vector<2x1xf32>
    tpu.vector_store %arg12[%c0_44, %c0_45], %168 {strides = array<i32>} : memref<2x1xf32, #tpu.memory_space<vmem>>, vector<2x1xf32>,
    return
  }
  func.func @transform_0(%arg0: i32) -> (i32, i32, i32) {
    %c0_i32 = arith.constant 0 : i32
    %c0_i32_0 = arith.constant 0 : i32
    %c0_i32_1 = arith.constant 0 : i32
    return %arg0, %c0_i32, %c0_i32_0 : i32, i32, i32
  }
  func.func @transform_1(%arg0: i32) -> (i32, i32) {
    %c0_i32 = arith.constant 0 : i32
    %c0_i32_0 = arith.constant 0 : i32
    %c0_i32_1 = arith.constant 0 : i32
    return %c0_i32, %c0_i32_0 : i32, i32
  }
  func.func @transform_2(%arg0: i32) -> (i32, i32) {
    %c0_i32 = arith.constant 0 : i32
    %c0_i32_0 = arith.constant 0 : i32
    %c0_i32_1 = arith.constant 0 : i32
    return %c0_i32, %c0_i32_0 : i32, i32
  }
  func.func @transform_3(%arg0: i32) -> (i32, i32) {
    %c0_i32 = arith.constant 0 : i32
    %c0_i32_0 = arith.constant 0 : i32
    %c0_i32_1 = arith.constant 0 : i32
    return %c0_i32, %c0_i32_0 : i32, i32
  }
  func.func @transform_4(%arg0: i32) -> (i32, i32) {
    %c0_i32 = arith.constant 0 : i32
    %c0_i32_0 = arith.constant 0 : i32
    %c0_i32_1 = arith.constant 0 : i32
    return %c0_i32, %c0_i32_0 : i32, i32
  }
  func.func @transform_5(%arg0: i32) -> (i32, i32) {
    %c0_i32 = arith.constant 0 : i32
    %c0_i32_0 = arith.constant 0 : i32
    %c0_i32_1 = arith.constant 0 : i32
    return %c0_i32, %c0_i32_0 : i32, i32
  }
  func.func @transform_6(%arg0: i32) -> (i32, i32) {
    %c0_i32 = arith.constant 0 : i32
    %c0_i32_0 = arith.constant 0 : i32
    %c0_i32_1 = arith.constant 0 : i32
    return %c0_i32, %c0_i32_0 : i32, i32
  }
  func.func @transform_7(%arg0: i32) -> (i32, i32) {
    %c0_i32 = arith.constant 0 : i32
    %c0_i32_0 = arith.constant 0 : i32
    %c0_i32_1 = arith.constant 0 : i32
    return %c0_i32, %c0_i32_0 : i32, i32
  }
  func.func @transform_8(%arg0: i32) -> (i32, i32) {
    %c0_i32 = arith.constant 0 : i32
    %c0_i32_0 = arith.constant 0 : i32
    %c0_i32_1 = arith.constant 0 : i32
    return %c0_i32, %c0_i32_0 : i32, i32
  }
  func.func @transform_9(%arg0: i32) -> (i32, i32) {
    %c0_i32 = arith.constant 0 : i32
    %c0_i32_0 = arith.constant 0 : i32
    %c0_i32_1 = arith.constant 0 : i32
    return %c0_i32, %c0_i32_0 : i32, i32
  }
  func.func @transform_10(%arg0: i32) -> (i32, i32) {
    %c0_i32 = arith.constant 0 : i32
    %c0_i32_0 = arith.constant 0 : i32
    %c0_i32_1 = arith.constant 0 : i32
    return %c0_i32, %c0_i32_0 : i32, i32
  }
  func.func @transform_11(%arg0: i32) -> (i32, i32) {
    %c0_i32 = arith.constant 0 : i32
    %c0_i32_0 = arith.constant 0 : i32
    return %arg0, %c0_i32 : i32, i32
  }
}

</mosaic_0001>

<llo_original>
// kernel: lenet_forward.1
$region0: #{lenet_forward.1}
  #allocation0 [shape = 'u32[]', space=smem, size = 0x4, offset = 0x4, fixed_abs, tag = 'smem constant byte address 0x4 - core index']
  #allocation1 [shape = 'u32[72,128]{1,0:T(1,128)}', space=vmem, size = 0x9000, scoped, tag = 'internal scratch']
  #allocation2 [shape = 'f32[1,1]{1,0:T(1,128)S(1)}', space=vmem, size = 0x200, scoped, tag = 'scoped memory for lenet_forward.1']
  %s0 = inlined_call_operand.vmem [shape: bf16[2,128,480], index: 0, kind: input, shape index: {}]
  %s1 = inlined_call_operand.vmem [shape: bf16[480,256], index: 1, kind: input, shape index: {}]
  %s2 = inlined_call_operand.vmem [shape: f32[1,256], index: 2, kind: input, shape index: {}]
  %s3 = inlined_call_operand.vmem [shape: bf16[768,512], index: 3, kind: input, shape index: {}]
  %s4 = inlined_call_operand.vmem [shape: f32[1,512], index: 4, kind: input, shape index: {}]
  %s5 = inlined_call_operand.vmem [shape: bf16[3712,120], index: 5, kind: input, shape index: {}]
  %s6 = inlined_call_operand.vmem [shape: f32[1,120], index: 6, kind: input, shape index: {}]
  %s7 = inlined_call_operand.vmem [shape: bf16[120,84], index: 7, kind: input, shape index: {}]
  %s8 = inlined_call_operand.vmem [shape: f32[1,84], index: 8, kind: input, shape index: {}]
  %s9 = inlined_call_operand.vmem [shape: f32[1,84], index: 9, kind: input, shape index: {}]
  %s10 = inlined_call_operand.<no memory space> [shape: f32[1,1], index: 10, kind: input, shape index: {}]
  %s11 = inlined_call_operand.vmem [shape: f32[2,1], index: 11, kind: output, shape index: {}]
  %s12 = sld [smem:[#allocation0]]
  $region54: #{lenet_forward.1} parent=0
    _
  %s14 = ssub.s32 1, %s12
  %s15 = scalar_select 0, %s14, %s12
  %v16 = vstv %s10
  %17 = vst [vmem:[#allocation2] sm:$0x1] %v16
  // Predicated region
  $region2: #{lenet_forward.1} parent=0 // pred_check
    _
  $region3: #{lenet_forward.1} parent=0 // pred_check_branch
    %19 = sbr.rel (0) target = $region5
  $region4: #{lenet_forward.1} parent=0 // pred_region
    _
  $region5: #{lenet_forward.1} parent=0 // pred_fallthru
    _
  // Predicated region
  $region6: #{lenet_forward.1} parent=0 // pred_check
    _
  $region7: #{lenet_forward.1} parent=0 // pred_check_branch
    %21 = sbr.rel (0) target = $region9
  $region8: #{lenet_forward.1} parent=0 // pred_region
    _
  $region9: #{lenet_forward.1} parent=0 // pred_fallthru
    _
  // Predicated region
  $region10: #{lenet_forward.1} parent=0 // pred_check
    _
  $region11: #{lenet_forward.1} parent=0 // pred_check_branch
    %23 = sbr.rel (0) target = $region13
  $region12: #{lenet_forward.1} parent=0 // pred_region
    _
  $region13: #{lenet_forward.1} parent=0 // pred_fallthru
    _
  // Predicated region
  $region14: #{lenet_forward.1} parent=0 // pred_check
    _
  $region15: #{lenet_forward.1} parent=0 // pred_check_branch
    %25 = sbr.rel (0) target = $region17
  $region16: #{lenet_forward.1} parent=0 // pred_region
    _
  $region17: #{lenet_forward.1} parent=0 // pred_fallthru
    _
  // Predicated region
  $region18: #{lenet_forward.1} parent=0 // pred_check
    _
  $region19: #{lenet_forward.1} parent=0 // pred_check_branch
    %27 = sbr.rel (0) target = $region21
  $region20: #{lenet_forward.1} parent=0 // pred_region
    _
  $region21: #{lenet_forward.1} parent=0 // pred_fallthru
    _
  // Predicated region
  $region22: #{lenet_forward.1} parent=0 // pred_check
    _
  $region23: #{lenet_forward.1} parent=0 // pred_check_branch
    %29 = sbr.rel (0) target = $region25
  $region24: #{lenet_forward.1} parent=0 // pred_region
    _
  $region25: #{lenet_forward.1} parent=0 // pred_fallthru
    _
  // Predicated region
  $region26: #{lenet_forward.1} parent=0 // pred_check
    _
  $region27: #{lenet_forward.1} parent=0 // pred_check_branch
    %31 = sbr.rel (0) target = $region29
  $region28: #{lenet_forward.1} parent=0 // pred_region
    _
  $region29: #{lenet_forward.1} parent=0 // pred_fallthru
    _
  // Predicated region
  $region30: #{lenet_forward.1} parent=0 // pred_check
    _
  $region31: #{lenet_forward.1} parent=0 // pred_check_branch
    %33 = sbr.rel (0) target = $region33
  $region32: #{lenet_forward.1} parent=0 // pred_region
    _
  $region33: #{lenet_forward.1} parent=0 // pred_fallthru
    _
  // Predicated region
  $region34: #{lenet_forward.1} parent=0 // pred_check
    _
  $region35: #{lenet_forward.1} parent=0 // pred_check_branch
    %35 = sbr.rel (0) target = $region37
  $region36: #{lenet_forward.1} parent=0 // pred_region
    _
  $region37: #{lenet_forward.1} parent=0 // pred_fallthru
    _
  // Predicated region
  $region38: #{lenet_forward.1} parent=0 // pred_check
    _
  $region39: #{lenet_forward.1} parent=0 // pred_check_branch
    %37 = sbr.rel (0) target = $region41
  $region40: #{lenet_forward.1} parent=0 // pred_region
    _
  $region41: #{lenet_forward.1} parent=0 // pred_fallthru
    _
  // Predicated region
  $region42: #{lenet_forward.1} parent=0 // pred_check
    _
  $region43: #{lenet_forward.1} parent=0 // pred_check_branch
    %39 = sbr.rel (0) target = $region45
  $region44: #{lenet_forward.1} parent=0 // pred_region
    _
  $region45: #{lenet_forward.1} parent=0 // pred_fallthru
    _
  %v41 = vld [vmem:[%s0] sm:$0xff]
  %v42 = vld [vmem:[%s0 + $0x8] sm:$0xff]
  %v43 = vld [vmem:[%s0 + $0x10] sm:$0xff]
  %v44 = vld [vmem:[%s0 + $0x18] sm:$0xff]
  %v45 = vld [vmem:[%s0 + $0x20] sm:$0xff]
  %v46 = vld [vmem:[%s0 + $0x28] sm:$0xff]
  %v47 = vld [vmem:[%s0 + $0x30] sm:$0xff]
  %v48 = vld [vmem:[%s0 + $0x38] sm:$0xff]
  %v49 = vld [vmem:[%s0 + $0x40] sm:$0xff]
  %v50 = vld [vmem:[%s0 + $0x48] sm:$0xff]
  %v51 = vld [vmem:[%s0 + $0x50] sm:$0xff]
  %v52 = vld [vmem:[%s0 + $0x58] sm:$0xff]
  %v53 = vld [vmem:[%s0 + $0x60] sm:$0xff]
  %v54 = vld [vmem:[%s0 + $0x68] sm:$0xff]
  %v55 = vld [vmem:[%s0 + $0x70] sm:$0xff]
  %v56 = vld [vmem:[%s0 + $0x78] sm:$0xff]
  %v57 = vld [vmem:[%s0 + $0x80] sm:$0xff]
  %v58 = vld [vmem:[%s0 + $0x88] sm:$0xff]
  %v59 = vld [vmem:[%s0 + $0x90] sm:$0xff]
  %v60 = vld [vmem:[%s0 + $0x98] sm:$0xff]
  %v61 = vld [vmem:[%s0 + $0xa0] sm:$0xff]
  %v62 = vld [vmem:[%s0 + $0xa8] sm:$0xff]
  %v63 = vld [vmem:[%s0 + $0xb0] sm:$0xff]
  %v64 = vld [vmem:[%s0 + $0xb8] sm:$0xff]
  %v65 = vld [vmem:[%s0 + $0xc0] sm:$0xff]
  %v66 = vld [vmem:[%s0 + $0xc8] sm:$0xff]
  %v67 = vld [vmem:[%s0 + $0xd0] sm:$0xff]
  %v68 = vld [vmem:[%s0 + $0xd8] sm:$0xff]
  %v69 = vld [vmem:[%s0 + $0xe0] sm:$0xff]
  %v70 = vld [vmem:[%s0 + $0xe8] sm:$0xff]
  %v71 = vld [vmem:[%s0 + $0xf0] sm:$0xff]
  %v72 = vld [vmem:[%s0 + $0xf8] sm:$0xff]
  %v73 = vld [vmem:[%s1] sm:$0xff]
  %v74 = vld [vmem:[%s1 + $0x8] sm:$0xff]
  %v75 = vld [vmem:[%s1 + $0x10] sm:$0xff]
  %v76 = vld [vmem:[%s1 + $0x18] sm:$0xff]
  %v77 = vld [vmem:[%s1 + $0x20] sm:$0xff]
  %v78 = vld [vmem:[%s1 + $0x28] sm:$0xff]
  %v79 = vld [vmem:[%s1 + $0x30] sm:$0xff]
  %v80 = vld [vmem:[%s1 + $0x38] sm:$0xff]
  %v81 = vld [vmem:[%s1 + $0x40] sm:$0xff]
  %v82 = vld [vmem:[%s1 + $0x48] sm:$0xff]
  %v83 = vld [vmem:[%s1 + $0x50] sm:$0xff]
  %v84 = vld [vmem:[%s1 + $0x58] sm:$0xff]
  %v85 = vld [vmem:[%s1 + $0x60] sm:$0xff]
  %v86 = vld [vmem:[%s1 + $0x68] sm:$0xff]
  %v87 = vld [vmem:[%s1 + $0x70] sm:$0xff]
  %v88 = vld [vmem:[%s1 + $0x78] sm:$0xff]
  %v89 = vld [vmem:[%s1 + $0x80] sm:$0xff]
  %v90 = vld [vmem:[%s1 + $0x88] sm:$0xff]
  %v91 = vld [vmem:[%s1 + $0x90] sm:$0xff]
  %v92 = vld [vmem:[%s1 + $0x98] sm:$0xff]
  %v93 = vld [vmem:[%s1 + $0xa0] sm:$0xff]
  %v94 = vld [vmem:[%s1 + $0xa8] sm:$0xff]
  %v95 = vld [vmem:[%s1 + $0xb0] sm:$0xff]
  %v96 = vld [vmem:[%s1 + $0xb8] sm:$0xff]
  %v97 = vld [vmem:[%s1 + $0xc0] sm:$0xff]
  %v98 = vld [vmem:[%s1 + $0xc8] sm:$0xff]
  %v99 = vld [vmem:[%s1 + $0xd0] sm:$0xff]
  %v100 = vld [vmem:[%s1 + $0xd8] sm:$0xff]
  %v101 = vld [vmem:[%s1 + $0xe0] sm:$0xff]
  %v102 = vld [vmem:[%s1 + $0xe8] sm:$0xff]
  %v103 = vld [vmem:[%s1 + $0xf0] sm:$0xff]
  %v104 = vld [vmem:[%s1 + $0xf8] sm:$0xff]
  %v105 = vld [vmem:[%s1 + $0x100] sm:$0xff]
  %v106 = vld [vmem:[%s1 + $0x108] sm:$0xff]
  %v107 = vld [vmem:[%s1 + $0x110] sm:$0xff]
  %v108 = vld [vmem:[%s1 + $0x118] sm:$0xff]
  %v109 = vld [vmem:[%s1 + $0x120] sm:$0xff]
  %v110 = vld [vmem:[%s1 + $0x128] sm:$0xff]
  %v111 = vld [vmem:[%s1 + $0x130] sm:$0xff]
  %v112 = vld [vmem:[%s1 + $0x138] sm:$0xff]
  %v113 = vld [vmem:[%s1 + $0x140] sm:$0xff]
  %v114 = vld [vmem:[%s1 + $0x148] sm:$0xff]
  %v115 = vld [vmem:[%s1 + $0x150] sm:$0xff]
  %v116 = vld [vmem:[%s1 + $0x158] sm:$0xff]
  %v117 = vld [vmem:[%s1 + $0x160] sm:$0xff]
  %v118 = vld [vmem:[%s1 + $0x168] sm:$0xff]
  %v119 = vld [vmem:[%s1 + $0x170] sm:$0xff]
  %v120 = vld [vmem:[%s1 + $0x178] sm:$0xff]
  %v121 = vld [vmem:[%s1 + $0x180] sm:$0xff]
  %v122 = vld [vmem:[%s1 + $0x188] sm:$0xff]
  %v123 = vld [vmem:[%s1 + $0x190] sm:$0xff]
  %v124 = vld [vmem:[%s1 + $0x198] sm:$0xff]
  %v125 = vld [vmem:[%s1 + $0x1a0] sm:$0xff]
  %v126 = vld [vmem:[%s1 + $0x1a8] sm:$0xff]
  %v127 = vld [vmem:[%s1 + $0x1b0] sm:$0xff]
  %v128 = vld [vmem:[%s1 + $0x1b8] sm:$0xff]
  %v129 = vld [vmem:[%s1 + $0x1c0] sm:$0xff]
  %v130 = vld [vmem:[%s1 + $0x1c8] sm:$0xff]
  %v131 = vld [vmem:[%s1 + $0x1d0] sm:$0xff]
  %v132 = vld [vmem:[%s1 + $0x1d8] sm:$0xff]
  %v133 = vld [vmem:[%s2] sm:$0x3]
  %v135 = vperm.slane %v133, 0
  %v136 = vperm.slane %v133, 1
  %v171 = vunpack.c.l.b16 %v41
  %v172 = vunpack.c.h.b16 %v41
  %v173 = vunpack.c.l.b16 %v42
  %v174 = vunpack.c.h.b16 %v42
  %v175 = vunpack.c.l.b16 %v43
  %v176 = vunpack.c.h.b16 %v43
  %v177 = vunpack.c.l.b16 %v44
  %v178 = vunpack.c.h.b16 %v44
  %v179 = vunpack.c.l.b16 %v45
  %v180 = vunpack.c.h.b16 %v45
  %v181 = vunpack.c.l.b16 %v46
  %v182 = vunpack.c.h.b16 %v46
  %v183 = vunpack.c.l.b16 %v47
  %v184 = vunpack.c.h.b16 %v47
  %v185 = vunpack.c.l.b16 %v48
  %v186 = vunpack.c.h.b16 %v48
  %v187 = vunpack.c.l.b16 %v49
  %v188 = vunpack.c.h.b16 %v49
  %v189 = vunpack.c.l.b16 %v50
  %v190 = vunpack.c.h.b16 %v50
  %v191 = vunpack.c.l.b16 %v51
  %v192 = vunpack.c.h.b16 %v51
  %v193 = vunpack.c.l.b16 %v52
  %v194 = vunpack.c.h.b16 %v52
  %v195 = vunpack.c.l.b16 %v53
  %v196 = vunpack.c.h.b16 %v53
  %v197 = vunpack.c.l.b16 %v54
  %v198 = vunpack.c.h.b16 %v54
  %v199 = vunpack.c.l.b16 %v55
  %v200 = vunpack.c.h.b16 %v55
  %v201 = vunpack.c.l.b16 %v56
  %v202 = vunpack.c.h.b16 %v56
  %v203 = vunpack.c.l.b16 %v57
  %v204 = vunpack.c.h.b16 %v57
  %v205 = vunpack.c.l.b16 %v58
  %v206 = vunpack.c.h.b16 %v58
  %v207 = vunpack.c.l.b16 %v59
  %v208 = vunpack.c.h.b16 %v59
  %v209 = vunpack.c.l.b16 %v60
  %v210 = vunpack.c.h.b16 %v60
  %v211 = vunpack.c.l.b16 %v61
  %v212 = vunpack.c.h.b16 %v61
  %v213 = vunpack.c.l.b16 %v62
  %v214 = vunpack.c.h.b16 %v62
  %v215 = vunpack.c.l.b16 %v63
  %v216 = vunpack.c.h.b16 %v63
  %v217 = vunpack.c.l.b16 %v64
  %v218 = vunpack.c.h.b16 %v64
  %v219 = vunpack.c.l.b16 %v65
  %v220 = vunpack.c.h.b16 %v65
  %v221 = vunpack.c.l.b16 %v66
  %v222 = vunpack.c.h.b16 %v66
  %v223 = vunpack.c.l.b16 %v67
  %v224 = vunpack.c.h.b16 %v67
  %v225 = vunpack.c.l.b16 %v68
  %v226 = vunpack.c.h.b16 %v68
  %v227 = vunpack.c.l.b16 %v69
  %v228 = vunpack.c.h.b16 %v69
  %v229 = vunpack.c.l.b16 %v70
  %v230 = vunpack.c.h.b16 %v70
  %v231 = vunpack.c.l.b16 %v71
  %v232 = vunpack.c.h.b16 %v71
  %v233 = vunpack.c.l.b16 %v72
  %v234 = vunpack.c.h.b16 %v72
  %v235 = vpack.c.b16 %v175, %v171
  %v236 = vpack.c.b16 %v176, %v172
  %v237 = vpack.c.b16 %v177, %v173
  %v238 = vpack.c.b16 %v178, %v174
  %v239 = vpack.c.b16 %v183, %v179
  %v240 = vpack.c.b16 %v184, %v180
  %v241 = vpack.c.b16 %v185, %v181
  %v242 = vpack.c.b16 %v186, %v182
  %v243 = vpack.c.b16 %v191, %v187
  %v244 = vpack.c.b16 %v192, %v188
  %v245 = vpack.c.b16 %v193, %v189
  %v246 = vpack.c.b16 %v194, %v190
  %v247 = vpack.c.b16 %v199, %v195
  %v248 = vpack.c.b16 %v200, %v196
  %v249 = vpack.c.b16 %v201, %v197
  %v250 = vpack.c.b16 %v202, %v198
  %v251 = vpack.c.b16 %v207, %v203
  %v252 = vpack.c.b16 %v208, %v204
  %v253 = vpack.c.b16 %v209, %v205
  %v254 = vpack.c.b16 %v210, %v206
  %v255 = vpack.c.b16 %v215, %v211
  %v256 = vpack.c.b16 %v216, %v212
  %v257 = vpack.c.b16 %v217, %v213
  %v258 = vpack.c.b16 %v218, %v214
  %v259 = vpack.c.b16 %v223, %v219
  %v260 = vpack.c.b16 %v224, %v220
  %v261 = vpack.c.b16 %v225, %v221
  %v262 = vpack.c.b16 %v226, %v222
  %v263 = vpack.c.b16 %v231, %v227
  %v264 = vpack.c.b16 %v232, %v228
  %v265 = vpack.c.b16 %v233, %v229
  %v266 = vpack.c.b16 %v234, %v230
  %v351 = vunpack.c.l.b16 %v73
  %v352 = vunpack.c.h.b16 %v73
  %v353 = vunpack.c.l.b16 %v74
  %v354 = vunpack.c.h.b16 %v74
  %v355 = vunpack.c.l.b16 %v75
  %v356 = vunpack.c.h.b16 %v75
  %v357 = vunpack.c.l.b16 %v76
  %v358 = vunpack.c.h.b16 %v76
  %v359 = vunpack.c.l.b16 %v77
  %v360 = vunpack.c.h.b16 %v77
  %v361 = vunpack.c.l.b16 %v78
  %v362 = vunpack.c.h.b16 %v78
  %v363 = vunpack.c.l.b16 %v79
  %v364 = vunpack.c.h.b16 %v79
  %v365 = vunpack.c.l.b16 %v80
  %v366 = vunpack.c.h.b16 %v80
  %v367 = vunpack.c.l.b16 %v81
  %v368 = vunpack.c.h.b16 %v81
  %v369 = vunpack.c.l.b16 %v82
  %v370 = vunpack.c.h.b16 %v82
  %v371 = vunpack.c.l.b16 %v83
  %v372 = vunpack.c.h.b16 %v83
  %v373 = vunpack.c.l.b16 %v84
  %v374 = vunpack.c.h.b16 %v84
  %v375 = vunpack.c.l.b16 %v85
  %v376 = vunpack.c.h.b16 %v85
  %v377 = vunpack.c.l.b16 %v86
  %v378 = vunpack.c.h.b16 %v86
  %v379 = vunpack.c.l.b16 %v87
  %v380 = vunpack.c.h.b16 %v87
  %v381 = vunpack.c.l.b16 %v88
  %v382 = vunpack.c.h.b16 %v88
  %v383 = vunpack.c.l.b16 %v89
  %v384 = vunpack.c.h.b16 %v89
  %v385 = vunpack.c.l.b16 %v90
  %v386 = vunpack.c.h.b16 %v90
  %v387 = vunpack.c.l.b16 %v91
  %v388 = vunpack.c.h.b16 %v91
  %v389 = vunpack.c.l.b16 %v92
  %v390 = vunpack.c.h.b16 %v92
  %v391 = vunpack.c.l.b16 %v93
  %v392 = vunpack.c.h.b16 %v93
  %v393 = vunpack.c.l.b16 %v94
  %v394 = vunpack.c.h.b16 %v94
  %v395 = vunpack.c.l.b16 %v95
  %v396 = vunpack.c.h.b16 %v95
  %v397 = vunpack.c.l.b16 %v96
  %v398 = vunpack.c.h.b16 %v96
  %v399 = vunpack.c.l.b16 %v97
  %v400 = vunpack.c.h.b16 %v97
  %v401 = vunpack.c.l.b16 %v98
  %v402 = vunpack.c.h.b16 %v98
  %v403 = vunpack.c.l.b16 %v99
  %v404 = vunpack.c.h.b16 %v99
  %v405 = vunpack.c.l.b16 %v100
  %v406 = vunpack.c.h.b16 %v100
  %v407 = vunpack.c.l.b16 %v101
  %v408 = vunpack.c.h.b16 %v101
  %v409 = vunpack.c.l.b16 %v102
  %v410 = vunpack.c.h.b16 %v102
  %v411 = vunpack.c.l.b16 %v103
  %v412 = vunpack.c.h.b16 %v103
  %v413 = vunpack.c.l.b16 %v104
  %v414 = vunpack.c.h.b16 %v104
  %v415 = vunpack.c.l.b16 %v105
  %v416 = vunpack.c.h.b16 %v105
  %v417 = vunpack.c.l.b16 %v106
  %v418 = vunpack.c.h.b16 %v106
  %v419 = vunpack.c.l.b16 %v107
  %v420 = vunpack.c.h.b16 %v107
  %v421 = vunpack.c.l.b16 %v108
  %v422 = vunpack.c.h.b16 %v108
  %v423 = vunpack.c.l.b16 %v109
  %v424 = vunpack.c.h.b16 %v109
  %v425 = vunpack.c.l.b16 %v110
  %v426 = vunpack.c.h.b16 %v110
  %v427 = vunpack.c.l.b16 %v111
  %v428 = vunpack.c.h.b16 %v111
  %v429 = vunpack.c.l.b16 %v112
  %v430 = vunpack.c.h.b16 %v112
  %v431 = vunpack.c.l.b16 %v113
  %v432 = vunpack.c.h.b16 %v113
  %v433 = vunpack.c.l.b16 %v114
  %v434 = vunpack.c.h.b16 %v114
  %v435 = vunpack.c.l.b16 %v115
  %v436 = vunpack.c.h.b16 %v115
  %v437 = vunpack.c.l.b16 %v116
  %v438 = vunpack.c.h.b16 %v116
  %v439 = vunpack.c.l.b16 %v117
  %v440 = vunpack.c.h.b16 %v117
  %v441 = vunpack.c.l.b16 %v118
  %v442 = vunpack.c.h.b16 %v118
  %v443 = vunpack.c.l.b16 %v119
  %v444 = vunpack.c.h.b16 %v119
  %v445 = vunpack.c.l.b16 %v120
  %v446 = vunpack.c.h.b16 %v120
  %v447 = vunpack.c.l.b16 %v121
  %v448 = vunpack.c.h.b16 %v121
  %v449 = vunpack.c.l.b16 %v122
  %v450 = vunpack.c.h.b16 %v122
  %v451 = vunpack.c.l.b16 %v123
  %v452 = vunpack.c.h.b16 %v123
  %v453 = vunpack.c.l.b16 %v124
  %v454 = vunpack.c.h.b16 %v124
  %v455 = vunpack.c.l.b16 %v125
  %v456 = vunpack.c.h.b16 %v125
  %v457 = vunpack.c.l.b16 %v126
  %v458 = vunpack.c.h.b16 %v126
  %v459 = vunpack.c.l.b16 %v127
  %v460 = vunpack.c.h.b16 %v127
  %v461 = vunpack.c.l.b16 %v128
  %v462 = vunpack.c.h.b16 %v128
  %v463 = vunpack.c.l.b16 %v129
  %v464 = vunpack.c.h.b16 %v129
  %v465 = vunpack.c.l.b16 %v130
  %v466 = vunpack.c.h.b16 %v130
  %v467 = vunpack.c.l.b16 %v131
  %v468 = vunpack.c.h.b16 %v131
  %v469 = vunpack.c.l.b16 %v132
  %v470 = vunpack.c.h.b16 %v132
  %v471 = vpack.c.b16 %v353, %v351
  %v472 = vpack.c.b16 %v354, %v352
  %v473 = vpack.c.b16 %v357, %v355
  %v474 = vpack.c.b16 %v358, %v356
  %v475 = vpack.c.b16 %v361, %v359
  %v476 = vpack.c.b16 %v362, %v360
  %v477 = vpack.c.b16 %v365, %v363
  %v478 = vpack.c.b16 %v366, %v364
  %v479 = vpack.c.b16 %v369, %v367
  %v480 = vpack.c.b16 %v370, %v368
  %v481 = vpack.c.b16 %v373, %v371
  %v482 = vpack.c.b16 %v374, %v372
  %v483 = vpack.c.b16 %v377, %v375
  %v484 = vpack.c.b16 %v378, %v376
  %v485 = vpack.c.b16 %v381, %v379
  %v486 = vpack.c.b16 %v382, %v380
  %v487 = vpack.c.b16 %v385, %v383
  %v488 = vpack.c.b16 %v386, %v384
  %v489 = vpack.c.b16 %v389, %v387
  %v490 = vpack.c.b16 %v390, %v388
  %v491 = vpack.c.b16 %v393, %v391
  %v492 = vpack.c.b16 %v394, %v392
  %v493 = vpack.c.b16 %v397, %v395
  %v494 = vpack.c.b16 %v398, %v396
  %v495 = vpack.c.b16 %v401, %v399
  %v496 = vpack.c.b16 %v402, %v400
  %v497 = vpack.c.b16 %v405, %v403
  %v498 = vpack.c.b16 %v406, %v404
  %v499 = vpack.c.b16 %v409, %v407
  %v500 = vpack.c.b16 %v410, %v408
  %v501 = vpack.c.b16 %v413, %v411
  %v502 = vpack.c.b16 %v414, %v412
  %v503 = vpack.c.b16 %v417, %v415
  %v504 = vpack.c.b16 %v418, %v416
  %v505 = vpack.c.b16 %v421, %v419
  %v506 = vpack.c.b16 %v422, %v420
  %v507 = vpack.c.b16 %v425, %v423
  %v508 = vpack.c.b16 %v426, %v424
  %v509 = vpack.c.b16 %v429, %v427
  %v510 = vpack.c.b16 %v430, %v428
  %v511 = vpack.c.b16 %v433, %v431
  %v512 = vpack.c.b16 %v434, %v432
  %v513 = vpack.c.b16 %v437, %v435
  %v514 = vpack.c.b16 %v438, %v436
  %v515 = vpack.c.b16 %v441, %v439
  %v516 = vpack.c.b16 %v442, %v440
  %v517 = vpack.c.b16 %v445, %v443
  %v518 = vpack.c.b16 %v446, %v444
  %v519 = vpack.c.b16 %v449, %v447
  %v520 = vpack.c.b16 %v450, %v448
  %v521 = vpack.c.b16 %v453, %v451
  %v522 = vpack.c.b16 %v454, %v452
  %v523 = vpack.c.b16 %v457, %v455
  %v524 = vpack.c.b16 %v458, %v456
  %v525 = vpack.c.b16 %v461, %v459
  %v526 = vpack.c.b16 %v462, %v460
  %v527 = vpack.c.b16 %v465, %v463
  %v528 = vpack.c.b16 %v466, %v464
  %v529 = vpack.c.b16 %v469, %v467
  %v530 = vpack.c.b16 %v470, %v468
  %vm591 = vcmask 785408
  %v593 = vsel %vm591, %v238, 0
  %v596 = vsel %vm591, %v242, 0
  %v599 = vsel %vm591, %v246, 0
  %v602 = vsel %vm591, %v250, 0
  %v605 = vsel %vm591, %v254, 0
  %v608 = vsel %vm591, %v258, 0
  %v611 = vsel %vm591, %v262, 0
  %v614 = vsel %vm591, %v266, 0
  %616 = vmatpush.bf16.msra.mxu0 %v485
  %617 = vmatpush.bf16.msra.mxu0 %v483
  %618 = vmatpush.bf16.msra.mxu0 %v481
  %619 = vmatpush.bf16.msra.mxu0 %v479
  %620 = vmatpush.bf16.msra.mxu0 %v477
  %621 = vmatpush.bf16.msra.mxu0 %v475
  %622 = vmatpush.bf16.msra.mxu0 %v473
  %623 = vmatpush.bf16.msra.mxu0 %v471
  %624 = vmatmul.bf16.gmra.mxu0 %v235
  %v625 = vpop.f32.mrf.mxu0
  %v626 = vadd.f32 %v135, %v625
  %v627 = vpop.f32.mrf.mxu0
  %v628 = vadd.f32 %v135, %v627
  %629 = vmatmul.bf16.gmra.mxu0 %v239
  %v630 = vpop.f32.mrf.mxu0
  %v631 = vadd.f32 %v135, %v630
  %v632 = vpop.f32.mrf.mxu0
  %v633 = vadd.f32 %v135, %v632
  %634 = vmatmul.bf16.gmra.mxu0 %v243
  %v635 = vpop.f32.mrf.mxu0
  %v636 = vadd.f32 %v135, %v635
  %v637 = vpop.f32.mrf.mxu0
  %v638 = vadd.f32 %v135, %v637
  %639 = vmatmul.bf16.gmra.mxu0 %v247
  %v640 = vpop.f32.mrf.mxu0
  %v641 = vadd.f32 %v135, %v640
  %v642 = vpop.f32.mrf.mxu0
  %v643 = vadd.f32 %v135, %v642
  %644 = vmatmul.bf16.gmra.mxu0 %v251
  %v645 = vpop.f32.mrf.mxu0
  %v646 = vadd.f32 %v135, %v645
  %v647 = vpop.f32.mrf.mxu0
  %v648 = vadd.f32 %v135, %v647
  %649 = vmatmul.bf16.gmra.mxu0 %v255
  %v650 = vpop.f32.mrf.mxu0
  %v651 = vadd.f32 %v135, %v650
  %v652 = vpop.f32.mrf.mxu0
  %v653 = vadd.f32 %v135, %v652
  %654 = vmatmul.bf16.gmra.mxu0 %v259
  %v655 = vpop.f32.mrf.mxu0
  %v656 = vadd.f32 %v135, %v655
  %v657 = vpop.f32.mrf.mxu0
  %v658 = vadd.f32 %v135, %v657
  %659 = vmatmul.bf16.gmra.mxu0 %v263
  %v660 = vpop.f32.mrf.mxu0
  %v661 = vadd.f32 %v135, %v660
  %v662 = vpop.f32.mrf.mxu0
  %v663 = vadd.f32 %v135, %v662
  %664 = vdwg.mxu0
  %665 = vmatpush.bf16.msra.mxu0 %v501
  %666 = vmatpush.bf16.msra.mxu0 %v499
  %667 = vmatpush.bf16.msra.mxu0 %v497
  %668 = vmatpush.bf16.msra.mxu0 %v495
  %669 = vmatpush.bf16.msra.mxu0 %v493
  %670 = vmatpush.bf16.msra.mxu0 %v491
  %671 = vmatpush.bf16.msra.mxu0 %v489
  %672 = vmatpush.bf16.msra.mxu0 %v487
  %673 = vmatmul.bf16.gmra.mxu0 %v236
  %v674 = vpop.f32.mrf.mxu0
  %v675 = vadd.f32 %v626, %v674
  %v676 = vpop.f32.mrf.mxu0
  %v677 = vadd.f32 %v628, %v676
  %678 = vmatmul.bf16.gmra.mxu0 %v240
  %v679 = vpop.f32.mrf.mxu0
  %v680 = vadd.f32 %v631, %v679
  %v681 = vpop.f32.mrf.mxu0
  %v682 = vadd.f32 %v633, %v681
  %683 = vmatmul.bf16.gmra.mxu0 %v244
  %v684 = vpop.f32.mrf.mxu0
  %v685 = vadd.f32 %v636, %v684
  %v686 = vpop.f32.mrf.mxu0
  %v687 = vadd.f32 %v638, %v686
  %688 = vmatmul.bf16.gmra.mxu0 %v248
  %v689 = vpop.f32.mrf.mxu0
  %v690 = vadd.f32 %v641, %v689
  %v691 = vpop.f32.mrf.mxu0
  %v692 = vadd.f32 %v643, %v691
  %693 = vmatmul.bf16.gmra.mxu0 %v252
  %v694 = vpop.f32.mrf.mxu0
  %v695 = vadd.f32 %v646, %v694
  %v696 = vpop.f32.mrf.mxu0
  %v697 = vadd.f32 %v648, %v696
  %698 = vmatmul.bf16.gmra.mxu0 %v256
  %v699 = vpop.f32.mrf.mxu0
  %v700 = vadd.f32 %v651, %v699
  %v701 = vpop.f32.mrf.mxu0
  %v702 = vadd.f32 %v653, %v701
  %703 = vmatmul.bf16.gmra.mxu0 %v260
  %v704 = vpop.f32.mrf.mxu0
  %v705 = vadd.f32 %v656, %v704
  %v706 = vpop.f32.mrf.mxu0
  %v707 = vadd.f32 %v658, %v706
  %708 = vmatmul.bf16.gmra.mxu0 %v264
  %v709 = vpop.f32.mrf.mxu0
  %v710 = vadd.f32 %v661, %v709
  %v711 = vpop.f32.mrf.mxu0
  %v712 = vadd.f32 %v663, %v711
  %713 = vdwg.mxu0
  %714 = vmatpush.bf16.msra.mxu0 %v517
  %715 = vmatpush.bf16.msra.mxu0 %v515
  %716 = vmatpush.bf16.msra.mxu0 %v513
  %717 = vmatpush.bf16.msra.mxu0 %v511
  %718 = vmatpush.bf16.msra.mxu0 %v509
  %719 = vmatpush.bf16.msra.mxu0 %v507
  %720 = vmatpush.bf16.msra.mxu0 %v505
  %721 = vmatpush.bf16.msra.mxu0 %v503
  %722 = vmatmul.bf16.gmra.mxu0 %v237
  %v723 = vpop.f32.mrf.mxu0
  %v724 = vadd.f32 %v675, %v723
  %v725 = vpop.f32.mrf.mxu0
  %v726 = vadd.f32 %v677, %v725
  %727 = vmatmul.bf16.gmra.mxu0 %v241
  %v728 = vpop.f32.mrf.mxu0
  %v729 = vadd.f32 %v680, %v728
  %v730 = vpop.f32.mrf.mxu0
  %v731 = vadd.f32 %v682, %v730
  %732 = vmatmul.bf16.gmra.mxu0 %v245
  %v733 = vpop.f32.mrf.mxu0
  %v734 = vadd.f32 %v685, %v733
  %v735 = vpop.f32.mrf.mxu0
  %v736 = vadd.f32 %v687, %v735
  %737 = vmatmul.bf16.gmra.mxu0 %v249
  %v738 = vpop.f32.mrf.mxu0
  %v739 = vadd.f32 %v690, %v738
  %v740 = vpop.f32.mrf.mxu0
  %v741 = vadd.f32 %v692, %v740
  %742 = vmatmul.bf16.gmra.mxu0 %v253
  %v743 = vpop.f32.mrf.mxu0
  %v744 = vadd.f32 %v695, %v743
  %v745 = vpop.f32.mrf.mxu0
  %v746 = vadd.f32 %v697, %v745
  %747 = vmatmul.bf16.gmra.mxu0 %v257
  %v748 = vpop.f32.mrf.mxu0
  %v749 = vadd.f32 %v700, %v748
  %v750 = vpop.f32.mrf.mxu0
  %v751 = vadd.f32 %v702, %v750
  %752 = vmatmul.bf16.gmra.mxu0 %v261
  %v753 = vpop.f32.mrf.mxu0
  %v754 = vadd.f32 %v705, %v753
  %v755 = vpop.f32.mrf.mxu0
  %v756 = vadd.f32 %v707, %v755
  %757 = vmatmul.bf16.gmra.mxu0 %v265
  %v758 = vpop.f32.mrf.mxu0
  %v759 = vadd.f32 %v710, %v758
  %v760 = vpop.f32.mrf.mxu0
  %v761 = vadd.f32 %v712, %v760
  %762 = vdwg.mxu0
  %763 = vmatpush.bf16.msra.mxu0 0
  %764 = vmatpush.bf16.msra.mxu0 0
  %765 = vmatpush.bf16.msra.mxu0 %v529
  %766 = vmatpush.bf16.msra.mxu0 %v527
  %767 = vmatpush.bf16.msra.mxu0 %v525
  %768 = vmatpush.bf16.msra.mxu0 %v523
  %769 = vmatpush.bf16.msra.mxu0 %v521
  %770 = vmatpush.bf16.msra.mxu0 %v519
  %771 = vmatmul.bf16.gmra.mxu0 %v593
  %v772 = vpop.f32.mrf.mxu0
  %v773 = vadd.f32 %v724, %v772
  %v774 = vpop.f32.mrf.mxu0
  %v775 = vadd.f32 %v726, %v774
  %776 = vmatmul.bf16.gmra.mxu0 %v596
  %v777 = vpop.f32.mrf.mxu0
  %v778 = vadd.f32 %v729, %v777
  %v779 = vpop.f32.mrf.mxu0
  %v780 = vadd.f32 %v731, %v779
  %781 = vmatmul.bf16.gmra.mxu0 %v599
  %v782 = vpop.f32.mrf.mxu0
  %v783 = vadd.f32 %v734, %v782
  %v784 = vpop.f32.mrf.mxu0
  %v785 = vadd.f32 %v736, %v784
  %786 = vmatmul.bf16.gmra.mxu0 %v602
  %v787 = vpop.f32.mrf.mxu0
  %v788 = vadd.f32 %v739, %v787
  %v789 = vpop.f32.mrf.mxu0
  %v790 = vadd.f32 %v741, %v789
  %791 = vmatmul.bf16.gmra.mxu0 %v605
  %v792 = vpop.f32.mrf.mxu0
  %v793 = vadd.f32 %v744, %v792
  %v794 = vpop.f32.mrf.mxu0
  %v795 = vadd.f32 %v746, %v794
  %796 = vmatmul.bf16.gmra.mxu0 %v608
  %v797 = vpop.f32.mrf.mxu0
  %v798 = vadd.f32 %v749, %v797
  %v799 = vpop.f32.mrf.mxu0
  %v800 = vadd.f32 %v751, %v799
  %801 = vmatmul.bf16.gmra.mxu0 %v611
  %v802 = vpop.f32.mrf.mxu0
  %v803 = vadd.f32 %v754, %v802
  %v804 = vpop.f32.mrf.mxu0
  %v805 = vadd.f32 %v756, %v804
  %806 = vmatmul.bf16.gmra.mxu0 %v614
  %v807 = vpop.f32.mrf.mxu0
  %v808 = vadd.f32 %v759, %v807
  %v809 = vpop.f32.mrf.mxu0
  %v810 = vadd.f32 %v761, %v809
  %811 = vdwg.mxu0
  %812 = vmatpush.bf16.msra.mxu0 %v486
  %813 = vmatpush.bf16.msra.mxu0 %v484
  %814 = vmatpush.bf16.msra.mxu0 %v482
  %815 = vmatpush.bf16.msra.mxu0 %v480
  %816 = vmatpush.bf16.msra.mxu0 %v478
  %817 = vmatpush.bf16.msra.mxu0 %v476
  %818 = vmatpush.bf16.msra.mxu0 %v474
  %819 = vmatpush.bf16.msra.mxu0 %v472
  %820 = vmatmul.bf16.gmra.mxu0 %v235
  %v821 = vpop.f32.mrf.mxu0
  %v822 = vadd.f32 %v136, %v821
  %v823 = vpop.f32.mrf.mxu0
  %v824 = vadd.f32 %v136, %v823
  %825 = vmatmul.bf16.gmra.mxu0 %v239
  %v826 = vpop.f32.mrf.mxu0
  %v827 = vadd.f32 %v136, %v826
  %v828 = vpop.f32.mrf.mxu0
  %v829 = vadd.f32 %v136, %v828
  %830 = vmatmul.bf16.gmra.mxu0 %v243
  %v831 = vpop.f32.mrf.mxu0
  %v832 = vadd.f32 %v136, %v831
  %v833 = vpop.f32.mrf.mxu0
  %v834 = vadd.f32 %v136, %v833
  %835 = vmatmul.bf16.gmra.mxu0 %v247
  %v836 = vpop.f32.mrf.mxu0
  %v837 = vadd.f32 %v136, %v836
  %v838 = vpop.f32.mrf.mxu0
  %v839 = vadd.f32 %v136, %v838
  %840 = vmatmul.bf16.gmra.mxu0 %v251
  %v841 = vpop.f32.mrf.mxu0
  %v842 = vadd.f32 %v136, %v841
  %v843 = vpop.f32.mrf.mxu0
  %v844 = vadd.f32 %v136, %v843
  %845 = vmatmul.bf16.gmra.mxu0 %v255
  %v846 = vpop.f32.mrf.mxu0
  %v847 = vadd.f32 %v136, %v846
  %v848 = vpop.f32.mrf.mxu0
  %v849 = vadd.f32 %v136, %v848
  %850 = vmatmul.bf16.gmra.mxu0 %v259
  %v851 = vpop.f32.mrf.mxu0
  %v852 = vadd.f32 %v136, %v851
  %v853 = vpop.f32.mrf.mxu0
  %v854 = vadd.f32 %v136, %v853
  %855 = vmatmul.bf16.gmra.mxu0 %v263
  %v856 = vpop.f32.mrf.mxu0
  %v857 = vadd.f32 %v136, %v856
  %v858 = vpop.f32.mrf.mxu0
  %v859 = vadd.f32 %v136, %v858
  %860 = vdwg.mxu0
  %861 = vmatpush.bf16.msra.mxu0 %v502
  %862 = vmatpush.bf16.msra.mxu0 %v500
  %863 = vmatpush.bf16.msra.mxu0 %v498
  %864 = vmatpush.bf16.msra.mxu0 %v496
  %865 = vmatpush.bf16.msra.mxu0 %v494
  %866 = vmatpush.bf16.msra.mxu0 %v492
  %867 = vmatpush.bf16.msra.mxu0 %v490
  %868 = vmatpush.bf16.msra.mxu0 %v488
  %869 = vmatmul.bf16.gmra.mxu0 %v236
  %v870 = vpop.f32.mrf.mxu0
  %v871 = vadd.f32 %v822, %v870
  %v872 = vpop.f32.mrf.mxu0
  %v873 = vadd.f32 %v824, %v872
  %874 = vmatmul.bf16.gmra.mxu0 %v240
  %v875 = vpop.f32.mrf.mxu0
  %v876 = vadd.f32 %v827, %v875
  %v877 = vpop.f32.mrf.mxu0
  %v878 = vadd.f32 %v829, %v877
  %879 = vmatmul.bf16.gmra.mxu0 %v244
  %v880 = vpop.f32.mrf.mxu0
  %v881 = vadd.f32 %v832, %v880
  %v882 = vpop.f32.mrf.mxu0
  %v883 = vadd.f32 %v834, %v882
  %884 = vmatmul.bf16.gmra.mxu0 %v248
  %v885 = vpop.f32.mrf.mxu0
  %v886 = vadd.f32 %v837, %v885
  %v887 = vpop.f32.mrf.mxu0
  %v888 = vadd.f32 %v839, %v887
  %889 = vmatmul.bf16.gmra.mxu0 %v252
  %v890 = vpop.f32.mrf.mxu0
  %v891 = vadd.f32 %v842, %v890
  %v892 = vpop.f32.mrf.mxu0
  %v893 = vadd.f32 %v844, %v892
  %894 = vmatmul.bf16.gmra.mxu0 %v256
  %v895 = vpop.f32.mrf.mxu0
  %v896 = vadd.f32 %v847, %v895
  %v897 = vpop.f32.mrf.mxu0
  %v898 = vadd.f32 %v849, %v897
  %899 = vmatmul.bf16.gmra.mxu0 %v260
  %v900 = vpop.f32.mrf.mxu0
  %v901 = vadd.f32 %v852, %v900
  %v902 = vpop.f32.mrf.mxu0
  %v903 = vadd.f32 %v854, %v902
  %904 = vmatmul.bf16.gmra.mxu0 %v264
  %v905 = vpop.f32.mrf.mxu0
  %v906 = vadd.f32 %v857, %v905
  %v907 = vpop.f32.mrf.mxu0
  %v908 = vadd.f32 %v859, %v907
  %909 = vdwg.mxu0
  %910 = vmatpush.bf16.msra.mxu0 %v518
  %911 = vmatpush.bf16.msra.mxu0 %v516
  %912 = vmatpush.bf16.msra.mxu0 %v514
  %913 = vmatpush.bf16.msra.mxu0 %v512
  %914 = vmatpush.bf16.msra.mxu0 %v510
  %915 = vmatpush.bf16.msra.mxu0 %v508
  %916 = vmatpush.bf16.msra.mxu0 %v506
  %917 = vmatpush.bf16.msra.mxu0 %v504
  %918 = vmatmul.bf16.gmra.mxu0 %v237
  %v919 = vpop.f32.mrf.mxu0
  %v920 = vadd.f32 %v871, %v919
  %v921 = vpop.f32.mrf.mxu0
  %v922 = vadd.f32 %v873, %v921
  %923 = vmatmul.bf16.gmra.mxu0 %v241
  %v924 = vpop.f32.mrf.mxu0
  %v925 = vadd.f32 %v876, %v924
  %v926 = vpop.f32.mrf.mxu0
  %v927 = vadd.f32 %v878, %v926
  %928 = vmatmul.bf16.gmra.mxu0 %v245
  %v929 = vpop.f32.mrf.mxu0
  %v930 = vadd.f32 %v881, %v929
  %v931 = vpop.f32.mrf.mxu0
  %v932 = vadd.f32 %v883, %v931
  %933 = vmatmul.bf16.gmra.mxu0 %v249
  %v934 = vpop.f32.mrf.mxu0
  %v935 = vadd.f32 %v886, %v934
  %v936 = vpop.f32.mrf.mxu0
  %v937 = vadd.f32 %v888, %v936
  %938 = vmatmul.bf16.gmra.mxu0 %v253
  %v939 = vpop.f32.mrf.mxu0
  %v940 = vadd.f32 %v891, %v939
  %v941 = vpop.f32.mrf.mxu0
  %v942 = vadd.f32 %v893, %v941
  %943 = vmatmul.bf16.gmra.mxu0 %v257
  %v944 = vpop.f32.mrf.mxu0
  %v945 = vadd.f32 %v896, %v944
  %v946 = vpop.f32.mrf.mxu0
  %v947 = vadd.f32 %v898, %v946
  %948 = vmatmul.bf16.gmra.mxu0 %v261
  %v949 = vpop.f32.mrf.mxu0
  %v950 = vadd.f32 %v901, %v949
  %v951 = vpop.f32.mrf.mxu0
  %v952 = vadd.f32 %v903, %v951
  %953 = vmatmul.bf16.gmra.mxu0 %v265
  %v954 = vpop.f32.mrf.mxu0
  %v955 = vadd.f32 %v906, %v954
  %v956 = vpop.f32.mrf.mxu0
  %v957 = vadd.f32 %v908, %v956
  %958 = vdwg.mxu0
  %959 = vmatpush.bf16.msra.mxu0 0
  %960 = vmatpush.bf16.msra.mxu0 0
  %961 = vmatpush.bf16.msra.mxu0 %v530
  %962 = vmatpush.bf16.msra.mxu0 %v528
  %963 = vmatpush.bf16.msra.mxu0 %v526
  %964 = vmatpush.bf16.msra.mxu0 %v524
  %965 = vmatpush.bf16.msra.mxu0 %v522
  %966 = vmatpush.bf16.msra.mxu0 %v520
  %967 = vmatmul.bf16.gmra.mxu0 %v593
  %v968 = vpop.f32.mrf.mxu0
  %v969 = vadd.f32 %v920, %v968
  %v970 = vpop.f32.mrf.mxu0
  %v971 = vadd.f32 %v922, %v970
  %972 = vmatmul.bf16.gmra.mxu0 %v596
  %v973 = vpop.f32.mrf.mxu0
  %v974 = vadd.f32 %v925, %v973
  %v975 = vpop.f32.mrf.mxu0
  %v976 = vadd.f32 %v927, %v975
  %977 = vmatmul.bf16.gmra.mxu0 %v599
  %v978 = vpop.f32.mrf.mxu0
  %v979 = vadd.f32 %v930, %v978
  %v980 = vpop.f32.mrf.mxu0
  %v981 = vadd.f32 %v932, %v980
  %982 = vmatmul.bf16.gmra.mxu0 %v602
  %v983 = vpop.f32.mrf.mxu0
  %v984 = vadd.f32 %v935, %v983
  %v985 = vpop.f32.mrf.mxu0
  %v986 = vadd.f32 %v937, %v985
  %987 = vmatmul.bf16.gmra.mxu0 %v605
  %v988 = vpop.f32.mrf.mxu0
  %v989 = vadd.f32 %v940, %v988
  %v990 = vpop.f32.mrf.mxu0
  %v991 = vadd.f32 %v942, %v990
  %992 = vmatmul.bf16.gmra.mxu0 %v608
  %v993 = vpop.f32.mrf.mxu0
  %v994 = vadd.f32 %v945, %v993
  %v995 = vpop.f32.mrf.mxu0
  %v996 = vadd.f32 %v947, %v995
  %997 = vmatmul.bf16.gmra.mxu0 %v611
  %v998 = vpop.f32.mrf.mxu0
  %v999 = vadd.f32 %v950, %v998
  %v1000 = vpop.f32.mrf.mxu0
  %v1001 = vadd.f32 %v952, %v1000
  %1002 = vmatmul.bf16.gmra.mxu0 %v614
  %v1003 = vpop.f32.mrf.mxu0
  %v1004 = vadd.f32 %v955, %v1003
  %v1005 = vpop.f32.mrf.mxu0
  %v1006 = vadd.f32 %v957, %v1005
  %1007 = vdwg.mxu0
  %v1008 = vmax.f32 %v773, 0.0
  %v1009 = vmax.f32 %v969, 0.0
  %v1010 = vmax.f32 %v775, 0.0
  %v1011 = vmax.f32 %v971, 0.0
  %v1012 = vmax.f32 %v778, 0.0
  %v1013 = vmax.f32 %v974, 0.0
  %v1014 = vmax.f32 %v780, 0.0
  %v1015 = vmax.f32 %v976, 0.0
  %v1016 = vmax.f32 %v783, 0.0
  %v1017 = vmax.f32 %v979, 0.0
  %v1018 = vmax.f32 %v785, 0.0
  %v1019 = vmax.f32 %v981, 0.0
  %v1020 = vmax.f32 %v788, 0.0
  %v1021 = vmax.f32 %v984, 0.0
  %v1022 = vmax.f32 %v790, 0.0
  %v1023 = vmax.f32 %v986, 0.0
  %v1024 = vmax.f32 %v793, 0.0
  %v1025 = vmax.f32 %v989, 0.0
  %v1026 = vmax.f32 %v795, 0.0
  %v1027 = vmax.f32 %v991, 0.0
  %v1028 = vmax.f32 %v798, 0.0
  %v1029 = vmax.f32 %v994, 0.0
  %v1030 = vmax.f32 %v800, 0.0
  %v1031 = vmax.f32 %v996, 0.0
  %v1032 = vmax.f32 %v803, 0.0
  %v1033 = vmax.f32 %v999, 0.0
  %v1034 = vmax.f32 %v805, 0.0
  %v1035 = vmax.f32 %v1001, 0.0
  %v1036 = vmax.f32 %v808, 0.0
  %v1037 = vmax.f32 %v1004, 0.0
  %v1038 = vmax.f32 %v810, 0.0
  %v1039 = vmax.f32 %v1006, 0.0
  %v1040 = vmax.f32 %v1008, %v1009
  %v1041 = vmax.f32 %v1010, %v1011
  %v1042 = vmax.f32 %v1012, %v1013
  %v1043 = vmax.f32 %v1014, %v1015
  %v1044 = vmax.f32 %v1016, %v1017
  %v1045 = vmax.f32 %v1018, %v1019
  %v1046 = vmax.f32 %v1020, %v1021
  %v1047 = vmax.f32 %v1022, %v1023
  %v1048 = vmax.f32 %v1024, %v1025
  %v1049 = vmax.f32 %v1026, %v1027
  %v1050 = vmax.f32 %v1028, %v1029
  %v1051 = vmax.f32 %v1030, %v1031
  %v1052 = vmax.f32 %v1032, %v1033
  %v1053 = vmax.f32 %v1034, %v1035
  %v1054 = vmax.f32 %v1036, %v1037
  %v1055 = vmax.f32 %v1038, %v1039
  %v1056 = vmax.f32 %v1040, %v1044
  %v1057 = vmax.f32 %v1041, %v1045
  %v1058 = vmax.f32 %v1042, %v1046
  %v1059 = vmax.f32 %v1043, %v1047
  %v1060 = vmax.f32 %v1048, %v1052
  %v1061 = vmax.f32 %v1049, %v1053
  %v1062 = vmax.f32 %v1050, %v1054
  %v1063 = vmax.f32 %v1051, %v1055
  %vm1068 = vcmask 1046528
  %v1069 = vrot.slane %v1056, 1
  %v1070 = vrot.slane %v1057, 1
  %v1071 = vsel %vm1068, %v1069, %v1070
  %v1072 = vrot.slane %v1058, 1
  %v1073 = vsel %vm1068, %v1070, %v1072
  %v1074 = vrot.slane %v1059, 1
  %v1075 = vsel %vm1068, %v1072, %v1074
  %v1084 = vrot.slane %v1060, 1
  %v1085 = vrot.slane %v1061, 1
  %v1086 = vsel %vm1068, %v1084, %v1085
  %v1087 = vrot.slane %v1062, 1
  %v1088 = vsel %vm1068, %v1085, %v1087
  %v1089 = vrot.slane %v1063, 1
  %v1090 = vsel %vm1068, %v1087, %v1089
  %vm1095 = vcmask 1045504
  %v1096 = vrot.slane %v1056, 2
  %v1097 = vrot.slane %v1057, 2
  %v1098 = vsel %vm1095, %v1096, %v1097
  %v1099 = vrot.slane %v1058, 2
  %v1100 = vsel %vm1095, %v1097, %v1099
  %v1101 = vrot.slane %v1059, 2
  %v1102 = vsel %vm1095, %v1099, %v1101
  %v1107 = vrot.slane %v1060, 2
  %v1108 = vrot.slane %v1061, 2
  %v1109 = vsel %vm1095, %v1107, %v1108
  %v1110 = vrot.slane %v1062, 2
  %v1111 = vsel %vm1095, %v1108, %v1110
  %v1112 = vrot.slane %v1063, 2
  %v1113 = vsel %vm1095, %v1110, %v1112
  %v1118 = vpack.c.bf16 %v1057, %v1056
  %v1119 = vpack.c.bf16 %v1061, %v1060
  %v1120 = vpack.c.bf16 %v1073, %v1071
  %v1121 = vpack.c.bf16 %v1088, %v1086
  %v1122 = vpack.c.bf16 %v1100, %v1098
  %v1123 = vpack.c.bf16 %v1111, %v1109
  %v1124 = vpack.c.bf16 %v1059, %v1058
  %v1125 = vpack.c.bf16 %v1063, %v1062
  %v1126 = vpack.c.bf16 %v1074, %v1075
  %v1127 = vpack.c.bf16 %v1089, %v1090
  %v1128 = vpack.c.bf16 %v1101, %v1102
  %v1129 = vpack.c.bf16 %v1112, %v1113
  %v1130 = vld [vmem:[%s3] sm:$0xff]
  %v1131 = vld [vmem:[%s3 + $0x8] sm:$0xff]
  %v1132 = vld [vmem:[%s3 + $0x10] sm:$0xff]
  %v1133 = vld [vmem:[%s3 + $0x18] sm:$0xff]
  %v1134 = vld [vmem:[%s3 + $0x20] sm:$0xff]
  %v1135 = vld [vmem:[%s3 + $0x28] sm:$0xff]
  %v1136 = vld [vmem:[%s3 + $0x30] sm:$0xff]
  %v1137 = vld [vmem:[%s3 + $0x38] sm:$0xff]
  %v1138 = vld [vmem:[%s3 + $0x40] sm:$0xff]
  %v1139 = vld [vmem:[%s3 + $0x48] sm:$0xff]
  %v1140 = vld [vmem:[%s3 + $0x50] sm:$0xff]
  %v1141 = vld [vmem:[%s3 + $0x58] sm:$0xff]
  %v1142 = vld [vmem:[%s3 + $0x60] sm:$0xff]
  %v1143 = vld [vmem:[%s3 + $0x68] sm:$0xff]
  %v1144 = vld [vmem:[%s3 + $0x70] sm:$0xff]
  %v1145 = vld [vmem:[%s3 + $0x78] sm:$0xff]
  %v1146 = vld [vmem:[%s3 + $0x80] sm:$0xff]
  %v1147 = vld [vmem:[%s3 + $0x88] sm:$0xff]
  %v1148 = vld [vmem:[%s3 + $0x90] sm:$0xff]
  %v1149 = vld [vmem:[%s3 + $0x98] sm:$0xff]
  %v1150 = vld [vmem:[%s3 + $0xa0] sm:$0xff]
  %v1151 = vld [vmem:[%s3 + $0xa8] sm:$0xff]
  %v1152 = vld [vmem:[%s3 + $0xb0] sm:$0xff]
  %v1153 = vld [vmem:[%s3 + $0xb8] sm:$0xff]
  %v1154 = vld [vmem:[%s3 + $0xc0] sm:$0xff]
  %v1155 = vld [vmem:[%s3 + $0xc8] sm:$0xff]
  %v1156 = vld [vmem:[%s3 + $0xd0] sm:$0xff]
  %v1157 = vld [vmem:[%s3 + $0xd8] sm:$0xff]
  %v1158 = vld [vmem:[%s3 + $0xe0] sm:$0xff]
  %v1159 = vld [vmem:[%s3 + $0xe8] sm:$0xff]
  %v1160 = vld [vmem:[%s3 + $0xf0] sm:$0xff]
  %v1161 = vld [vmem:[%s3 + $0xf8] sm:$0xff]
  %v1162 = vld [vmem:[%s3 + $0x100] sm:$0xff]
  %v1163 = vld [vmem:[%s3 + $0x108] sm:$0xff]
  %v1164 = vld [vmem:[%s3 + $0x110] sm:$0xff]
  %v1165 = vld [vmem:[%s3 + $0x118] sm:$0xff]
  %v1166 = vld [vmem:[%s3 + $0x120] sm:$0xff]
  %v1167 = vld [vmem:[%s3 + $0x128] sm:$0xff]
  %v1168 = vld [vmem:[%s3 + $0x130] sm:$0xff]
  %v1169 = vld [vmem:[%s3 + $0x138] sm:$0xff]
  %v1170 = vld [vmem:[%s3 + $0x140] sm:$0xff]
  %v1171 = vld [vmem:[%s3 + $0x148] sm:$0xff]
  %v1172 = vld [vmem:[%s3 + $0x150] sm:$0xff]
  %v1173 = vld [vmem:[%s3 + $0x158] sm:$0xff]
  %v1174 = vld [vmem:[%s3 + $0x160] sm:$0xff]
  %v1175 = vld [vmem:[%s3 + $0x168] sm:$0xff]
  %v1176 = vld [vmem:[%s3 + $0x170] sm:$0xff]
  %v1177 = vld [vmem:[%s3 + $0x178] sm:$0xff]
  %v1178 = vld [vmem:[%s3 + $0x180] sm:$0xff]
  %v1179 = vld [vmem:[%s3 + $0x188] sm:$0xff]
  %v1180 = vld [vmem:[%s3 + $0x190] sm:$0xff]
  %v1181 = vld [vmem:[%s3 + $0x198] sm:$0xff]
  %v1182 = vld [vmem:[%s3 + $0x1a0] sm:$0xff]
  %v1183 = vld [vmem:[%s3 + $0x1a8] sm:$0xff]
  %v1184 = vld [vmem:[%s3 + $0x1b0] sm:$0xff]
  %v1185 = vld [vmem:[%s3 + $0x1b8] sm:$0xff]
  %v1186 = vld [vmem:[%s3 + $0x1c0] sm:$0xff]
  %v1187 = vld [vmem:[%s3 + $0x1c8] sm:$0xff]
  %v1188 = vld [vmem:[%s3 + $0x1d0] sm:$0xff]
  %v1189 = vld [vmem:[%s3 + $0x1d8] sm:$0xff]
  %v1190 = vld [vmem:[%s3 + $0x1e0] sm:$0xff]
  %v1191 = vld [vmem:[%s3 + $0x1e8] sm:$0xff]
  %v1192 = vld [vmem:[%s3 + $0x1f0] sm:$0xff]
  %v1193 = vld [vmem:[%s3 + $0x1f8] sm:$0xff]
  %v1194 = vld [vmem:[%s3 + $0x200] sm:$0xff]
  %v1195 = vld [vmem:[%s3 + $0x208] sm:$0xff]
  %v1196 = vld [vmem:[%s3 + $0x210] sm:$0xff]
  %v1197 = vld [vmem:[%s3 + $0x218] sm:$0xff]
  %v1198 = vld [vmem:[%s3 + $0x220] sm:$0xff]
  %v1199 = vld [vmem:[%s3 + $0x228] sm:$0xff]
  %v1200 = vld [vmem:[%s3 + $0x230] sm:$0xff]
  %v1201 = vld [vmem:[%s3 + $0x238] sm:$0xff]
  %v1202 = vld [vmem:[%s3 + $0x240] sm:$0xff]
  %v1203 = vld [vmem:[%s3 + $0x248] sm:$0xff]
  %v1204 = vld [vmem:[%s3 + $0x250] sm:$0xff]
  %v1205 = vld [vmem:[%s3 + $0x258] sm:$0xff]
  %v1206 = vld [vmem:[%s3 + $0x260] sm:$0xff]
  %v1207 = vld [vmem:[%s3 + $0x268] sm:$0xff]
  %v1208 = vld [vmem:[%s3 + $0x270] sm:$0xff]
  %v1209 = vld [vmem:[%s3 + $0x278] sm:$0xff]
  %v1210 = vld [vmem:[%s3 + $0x280] sm:$0xff]
  %v1211 = vld [vmem:[%s3 + $0x288] sm:$0xff]
  %v1212 = vld [vmem:[%s3 + $0x290] sm:$0xff]
  %v1213 = vld [vmem:[%s3 + $0x298] sm:$0xff]
  %v1214 = vld [vmem:[%s3 + $0x2a0] sm:$0xff]
  %v1215 = vld [vmem:[%s3 + $0x2a8] sm:$0xff]
  %v1216 = vld [vmem:[%s3 + $0x2b0] sm:$0xff]
  %v1217 = vld [vmem:[%s3 + $0x2b8] sm:$0xff]
  %v1218 = vld [vmem:[%s3 + $0x2c0] sm:$0xff]
  %v1219 = vld [vmem:[%s3 + $0x2c8] sm:$0xff]
  %v1220 = vld [vmem:[%s3 + $0x2d0] sm:$0xff]
  %v1221 = vld [vmem:[%s3 + $0x2d8] sm:$0xff]
  %v1222 = vld [vmem:[%s3 + $0x2e0] sm:$0xff]
  %v1223 = vld [vmem:[%s3 + $0x2e8] sm:$0xff]
  %v1224 = vld [vmem:[%s3 + $0x2f0] sm:$0xff]
  %v1225 = vld [vmem:[%s3 + $0x2f8] sm:$0xff]
  %v1226 = vld [vmem:[%s3 + $0x300] sm:$0xff]
  %v1227 = vld [vmem:[%s3 + $0x308] sm:$0xff]
  %v1228 = vld [vmem:[%s3 + $0x310] sm:$0xff]
  %v1229 = vld [vmem:[%s3 + $0x318] sm:$0xff]
  %v1230 = vld [vmem:[%s3 + $0x320] sm:$0xff]
  %v1231 = vld [vmem:[%s3 + $0x328] sm:$0xff]
  %v1232 = vld [vmem:[%s3 + $0x330] sm:$0xff]
  %v1233 = vld [vmem:[%s3 + $0x338] sm:$0xff]
  %v1234 = vld [vmem:[%s3 + $0x340] sm:$0xff]
  %v1235 = vld [vmem:[%s3 + $0x348] sm:$0xff]
  %v1236 = vld [vmem:[%s3 + $0x350] sm:$0xff]
  %v1237 = vld [vmem:[%s3 + $0x358] sm:$0xff]
  %v1238 = vld [vmem:[%s3 + $0x360] sm:$0xff]
  %v1239 = vld [vmem:[%s3 + $0x368] sm:$0xff]
  %v1240 = vld [vmem:[%s3 + $0x370] sm:$0xff]
  %v1241 = vld [vmem:[%s3 + $0x378] sm:$0xff]
  %v1242 = vld [vmem:[%s3 + $0x380] sm:$0xff]
  %v1243 = vld [vmem:[%s3 + $0x388] sm:$0xff]
  %v1244 = vld [vmem:[%s3 + $0x390] sm:$0xff]
  %v1245 = vld [vmem:[%s3 + $0x398] sm:$0xff]
  %v1246 = vld [vmem:[%s3 + $0x3a0] sm:$0xff]
  %v1247 = vld [vmem:[%s3 + $0x3a8] sm:$0xff]
  %v1248 = vld [vmem:[%s3 + $0x3b0] sm:$0xff]
  %v1249 = vld [vmem:[%s3 + $0x3b8] sm:$0xff]
  %v1250 = vld [vmem:[%s3 + $0x3c0] sm:$0xff]
  %v1251 = vld [vmem:[%s3 + $0x3c8] sm:$0xff]
  %v1252 = vld [vmem:[%s3 + $0x3d0] sm:$0xff]
  %v1253 = vld [vmem:[%s3 + $0x3d8] sm:$0xff]
  %v1254 = vld [vmem:[%s3 + $0x3e0] sm:$0xff]
  %v1255 = vld [vmem:[%s3 + $0x3e8] sm:$0xff]
  %v1256 = vld [vmem:[%s3 + $0x3f0] sm:$0xff]
  %v1257 = vld [vmem:[%s3 + $0x3f8] sm:$0xff]
  %v1258 = vld [vmem:[%s3 + $0x400] sm:$0xff]
  %v1259 = vld [vmem:[%s3 + $0x408] sm:$0xff]
  %v1260 = vld [vmem:[%s3 + $0x410] sm:$0xff]
  %v1261 = vld [vmem:[%s3 + $0x418] sm:$0xff]
  %v1262 = vld [vmem:[%s3 + $0x420] sm:$0xff]
  %v1263 = vld [vmem:[%s3 + $0x428] sm:$0xff]
  %v1264 = vld [vmem:[%s3 + $0x430] sm:$0xff]
  %v1265 = vld [vmem:[%s3 + $0x438] sm:$0xff]
  %v1266 = vld [vmem:[%s3 + $0x440] sm:$0xff]
  %v1267 = vld [vmem:[%s3 + $0x448] sm:$0xff]
  %v1268 = vld [vmem:[%s3 + $0x450] sm:$0xff]
  %v1269 = vld [vmem:[%s3 + $0x458] sm:$0xff]
  %v1270 = vld [vmem:[%s3 + $0x460] sm:$0xff]
  %v1271 = vld [vmem:[%s3 + $0x468] sm:$0xff]
  %v1272 = vld [vmem:[%s3 + $0x470] sm:$0xff]
  %v1273 = vld [vmem:[%s3 + $0x478] sm:$0xff]
  %v1274 = vld [vmem:[%s3 + $0x480] sm:$0xff]
  %v1275 = vld [vmem:[%s3 + $0x488] sm:$0xff]
  %v1276 = vld [vmem:[%s3 + $0x490] sm:$0xff]
  %v1277 = vld [vmem:[%s3 + $0x498] sm:$0xff]
  %v1278 = vld [vmem:[%s3 + $0x4a0] sm:$0xff]
  %v1279 = vld [vmem:[%s3 + $0x4a8] sm:$0xff]
  %v1280 = vld [vmem:[%s3 + $0x4b0] sm:$0xff]
  %v1281 = vld [vmem:[%s3 + $0x4b8] sm:$0xff]
  %v1282 = vld [vmem:[%s3 + $0x4c0] sm:$0xff]
  %v1283 = vld [vmem:[%s3 + $0x4c8] sm:$0xff]
  %v1284 = vld [vmem:[%s3 + $0x4d0] sm:$0xff]
  %v1285 = vld [vmem:[%s3 + $0x4d8] sm:$0xff]
  %v1286 = vld [vmem:[%s3 + $0x4e0] sm:$0xff]
  %v1287 = vld [vmem:[%s3 + $0x4e8] sm:$0xff]
  %v1288 = vld [vmem:[%s3 + $0x4f0] sm:$0xff]
  %v1289 = vld [vmem:[%s3 + $0x4f8] sm:$0xff]
  %v1290 = vld [vmem:[%s3 + $0x500] sm:$0xff]
  %v1291 = vld [vmem:[%s3 + $0x508] sm:$0xff]
  %v1292 = vld [vmem:[%s3 + $0x510] sm:$0xff]
  %v1293 = vld [vmem:[%s3 + $0x518] sm:$0xff]
  %v1294 = vld [vmem:[%s3 + $0x520] sm:$0xff]
  %v1295 = vld [vmem:[%s3 + $0x528] sm:$0xff]
  %v1296 = vld [vmem:[%s3 + $0x530] sm:$0xff]
  %v1297 = vld [vmem:[%s3 + $0x538] sm:$0xff]
  %v1298 = vld [vmem:[%s3 + $0x540] sm:$0xff]
  %v1299 = vld [vmem:[%s3 + $0x548] sm:$0xff]
  %v1300 = vld [vmem:[%s3 + $0x550] sm:$0xff]
  %v1301 = vld [vmem:[%s3 + $0x558] sm:$0xff]
  %v1302 = vld [vmem:[%s3 + $0x560] sm:$0xff]
  %v1303 = vld [vmem:[%s3 + $0x568] sm:$0xff]
  %v1304 = vld [vmem:[%s3 + $0x570] sm:$0xff]
  %v1305 = vld [vmem:[%s3 + $0x578] sm:$0xff]
  %v1306 = vld [vmem:[%s3 + $0x580] sm:$0xff]
  %v1307 = vld [vmem:[%s3 + $0x588] sm:$0xff]
  %v1308 = vld [vmem:[%s3 + $0x590] sm:$0xff]
  %v1309 = vld [vmem:[%s3 + $0x598] sm:$0xff]
  %v1310 = vld [vmem:[%s3 + $0x5a0] sm:$0xff]
  %v1311 = vld [vmem:[%s3 + $0x5a8] sm:$0xff]
  %v1312 = vld [vmem:[%s3 + $0x5b0] sm:$0xff]
  %v1313 = vld [vmem:[%s3 + $0x5b8] sm:$0xff]
  %v1314 = vld [vmem:[%s3 + $0x5c0] sm:$0xff]
  %v1315 = vld [vmem:[%s3 + $0x5c8] sm:$0xff]
  %v1316 = vld [vmem:[%s3 + $0x5d0] sm:$0xff]
  %v1317 = vld [vmem:[%s3 + $0x5d8] sm:$0xff]
  %v1318 = vld [vmem:[%s3 + $0x5e0] sm:$0xff]
  %v1319 = vld [vmem:[%s3 + $0x5e8] sm:$0xff]
  %v1320 = vld [vmem:[%s3 + $0x5f0] sm:$0xff]
  %v1321 = vld [vmem:[%s3 + $0x5f8] sm:$0xff]
  %v1322 = vld [vmem:[%s4] sm:$0xf]
  %v1324 = vperm.slane %v1322, 0
  %v1325 = vperm.slane %v1322, 1
  %v1326 = vperm.slane %v1322, 2
  %v1327 = vperm.slane %v1322, 3
  %v1524 = vunpack.c.l.b16 %v1130
  %v1525 = vunpack.c.h.b16 %v1130
  %v1526 = vunpack.c.l.b16 %v1131
  %v1527 = vunpack.c.h.b16 %v1131
  %v1528 = vunpack.c.l.b16 %v1132
  %v1529 = vunpack.c.h.b16 %v1132
  %v1530 = vunpack.c.l.b16 %v1133
  %v1531 = vunpack.c.h.b16 %v1133
  %v1532 = vunpack.c.l.b16 %v1134
  %v1533 = vunpack.c.h.b16 %v1134
  %v1534 = vunpack.c.l.b16 %v1135
  %v1535 = vunpack.c.h.b16 %v1135
  %v1536 = vunpack.c.l.b16 %v1136
  %v1537 = vunpack.c.h.b16 %v1136
  %v1538 = vunpack.c.l.b16 %v1137
  %v1539 = vunpack.c.h.b16 %v1137
  %v1540 = vunpack.c.l.b16 %v1138
  %v1541 = vunpack.c.h.b16 %v1138
  %v1542 = vunpack.c.l.b16 %v1139
  %v1543 = vunpack.c.h.b16 %v1139
  %v1544 = vunpack.c.l.b16 %v1140
  %v1545 = vunpack.c.h.b16 %v1140
  %v1546 = vunpack.c.l.b16 %v1141
  %v1547 = vunpack.c.h.b16 %v1141
  %v1548 = vunpack.c.l.b16 %v1142
  %v1549 = vunpack.c.h.b16 %v1142
  %v1550 = vunpack.c.l.b16 %v1143
  %v1551 = vunpack.c.h.b16 %v1143
  %v1552 = vunpack.c.l.b16 %v1144
  %v1553 = vunpack.c.h.b16 %v1144
  %v1554 = vunpack.c.l.b16 %v1145
  %v1555 = vunpack.c.h.b16 %v1145
  %v1556 = vunpack.c.l.b16 %v1146
  %v1557 = vunpack.c.h.b16 %v1146
  %v1558 = vunpack.c.l.b16 %v1147
  %v1559 = vunpack.c.h.b16 %v1147
  %v1560 = vunpack.c.l.b16 %v1148
  %v1561 = vunpack.c.h.b16 %v1148
  %v1562 = vunpack.c.l.b16 %v1149
  %v1563 = vunpack.c.h.b16 %v1149
  %v1564 = vunpack.c.l.b16 %v1150
  %v1565 = vunpack.c.h.b16 %v1150
  %v1566 = vunpack.c.l.b16 %v1151
  %v1567 = vunpack.c.h.b16 %v1151
  %v1568 = vunpack.c.l.b16 %v1152
  %v1569 = vunpack.c.h.b16 %v1152
  %v1570 = vunpack.c.l.b16 %v1153
  %v1571 = vunpack.c.h.b16 %v1153
  %v1572 = vunpack.c.l.b16 %v1154
  %v1573 = vunpack.c.h.b16 %v1154
  %v1574 = vunpack.c.l.b16 %v1155
  %v1575 = vunpack.c.h.b16 %v1155
  %v1576 = vunpack.c.l.b16 %v1156
  %v1577 = vunpack.c.h.b16 %v1156
  %v1578 = vunpack.c.l.b16 %v1157
  %v1579 = vunpack.c.h.b16 %v1157
  %v1580 = vunpack.c.l.b16 %v1158
  %v1581 = vunpack.c.h.b16 %v1158
  %v1582 = vunpack.c.l.b16 %v1159
  %v1583 = vunpack.c.h.b16 %v1159
  %v1584 = vunpack.c.l.b16 %v1160
  %v1585 = vunpack.c.h.b16 %v1160
  %v1586 = vunpack.c.l.b16 %v1161
  %v1587 = vunpack.c.h.b16 %v1161
  %v1588 = vunpack.c.l.b16 %v1162
  %v1589 = vunpack.c.h.b16 %v1162
  %v1590 = vunpack.c.l.b16 %v1163
  %v1591 = vunpack.c.h.b16 %v1163
  %v1592 = vunpack.c.l.b16 %v1164
  %v1593 = vunpack.c.h.b16 %v1164
  %v1594 = vunpack.c.l.b16 %v1165
  %v1595 = vunpack.c.h.b16 %v1165
  %v1596 = vunpack.c.l.b16 %v1166
  %v1597 = vunpack.c.h.b16 %v1166
  %v1598 = vunpack.c.l.b16 %v1167
  %v1599 = vunpack.c.h.b16 %v1167
  %v1600 = vunpack.c.l.b16 %v1168
  %v1601 = vunpack.c.h.b16 %v1168
  %v1602 = vunpack.c.l.b16 %v1169
  %v1603 = vunpack.c.h.b16 %v1169
  %v1604 = vunpack.c.l.b16 %v1170
  %v1605 = vunpack.c.h.b16 %v1170
  %v1606 = vunpack.c.l.b16 %v1171
  %v1607 = vunpack.c.h.b16 %v1171
  %v1608 = vunpack.c.l.b16 %v1172
  %v1609 = vunpack.c.h.b16 %v1172
  %v1610 = vunpack.c.l.b16 %v1173
  %v1611 = vunpack.c.h.b16 %v1173
  %v1612 = vunpack.c.l.b16 %v1174
  %v1613 = vunpack.c.h.b16 %v1174
  %v1614 = vunpack.c.l.b16 %v1175
  %v1615 = vunpack.c.h.b16 %v1175
  %v1616 = vunpack.c.l.b16 %v1176
  %v1617 = vunpack.c.h.b16 %v1176
  %v1618 = vunpack.c.l.b16 %v1177
  %v1619 = vunpack.c.h.b16 %v1177
  %v1620 = vunpack.c.l.b16 %v1178
  %v1621 = vunpack.c.h.b16 %v1178
  %v1622 = vunpack.c.l.b16 %v1179
  %v1623 = vunpack.c.h.b16 %v1179
  %v1624 = vunpack.c.l.b16 %v1180
  %v1625 = vunpack.c.h.b16 %v1180
  %v1626 = vunpack.c.l.b16 %v1181
  %v1627 = vunpack.c.h.b16 %v1181
  %v1628 = vunpack.c.l.b16 %v1182
  %v1629 = vunpack.c.h.b16 %v1182
  %v1630 = vunpack.c.l.b16 %v1183
  %v1631 = vunpack.c.h.b16 %v1183
  %v1632 = vunpack.c.l.b16 %v1184
  %v1633 = vunpack.c.h.b16 %v1184
  %v1634 = vunpack.c.l.b16 %v1185
  %v1635 = vunpack.c.h.b16 %v1185
  %v1636 = vunpack.c.l.b16 %v1186
  %v1637 = vunpack.c.h.b16 %v1186
  %v1638 = vunpack.c.l.b16 %v1187
  %v1639 = vunpack.c.h.b16 %v1187
  %v1640 = vunpack.c.l.b16 %v1188
  %v1641 = vunpack.c.h.b16 %v1188
  %v1642 = vunpack.c.l.b16 %v1189
  %v1643 = vunpack.c.h.b16 %v1189
  %v1644 = vunpack.c.l.b16 %v1190
  %v1645 = vunpack.c.h.b16 %v1190
  %v1646 = vunpack.c.l.b16 %v1191
  %v1647 = vunpack.c.h.b16 %v1191
  %v1648 = vunpack.c.l.b16 %v1192
  %v1649 = vunpack.c.h.b16 %v1192
  %v1650 = vunpack.c.l.b16 %v1193
  %v1651 = vunpack.c.h.b16 %v1193
  %v1652 = vunpack.c.l.b16 %v1194
  %v1653 = vunpack.c.h.b16 %v1194
  %v1654 = vunpack.c.l.b16 %v1195
  %v1655 = vunpack.c.h.b16 %v1195
  %v1656 = vunpack.c.l.b16 %v1196
  %v1657 = vunpack.c.h.b16 %v1196
  %v1658 = vunpack.c.l.b16 %v1197
  %v1659 = vunpack.c.h.b16 %v1197
  %v1660 = vunpack.c.l.b16 %v1198
  %v1661 = vunpack.c.h.b16 %v1198
  %v1662 = vunpack.c.l.b16 %v1199
  %v1663 = vunpack.c.h.b16 %v1199
  %v1664 = vunpack.c.l.b16 %v1200
  %v1665 = vunpack.c.h.b16 %v1200
  %v1666 = vunpack.c.l.b16 %v1201
  %v1667 = vunpack.c.h.b16 %v1201
  %v1668 = vunpack.c.l.b16 %v1202
  %v1669 = vunpack.c.h.b16 %v1202
  %v1670 = vunpack.c.l.b16 %v1203
  %v1671 = vunpack.c.h.b16 %v1203
  %v1672 = vunpack.c.l.b16 %v1204
  %v1673 = vunpack.c.h.b16 %v1204
  %v1674 = vunpack.c.l.b16 %v1205
  %v1675 = vunpack.c.h.b16 %v1205
  %v1676 = vunpack.c.l.b16 %v1206
  %v1677 = vunpack.c.h.b16 %v1206
  %v1678 = vunpack.c.l.b16 %v1207
  %v1679 = vunpack.c.h.b16 %v1207
  %v1680 = vunpack.c.l.b16 %v1208
  %v1681 = vunpack.c.h.b16 %v1208
  %v1682 = vunpack.c.l.b16 %v1209
  %v1683 = vunpack.c.h.b16 %v1209
  %v1684 = vunpack.c.l.b16 %v1210
  %v1685 = vunpack.c.h.b16 %v1210
  %v1686 = vunpack.c.l.b16 %v1211
  %v1687 = vunpack.c.h.b16 %v1211
  %v1688 = vunpack.c.l.b16 %v1212
  %v1689 = vunpack.c.h.b16 %v1212
  %v1690 = vunpack.c.l.b16 %v1213
  %v1691 = vunpack.c.h.b16 %v1213
  %v1692 = vunpack.c.l.b16 %v1214
  %v1693 = vunpack.c.h.b16 %v1214
  %v1694 = vunpack.c.l.b16 %v1215
  %v1695 = vunpack.c.h.b16 %v1215
  %v1696 = vunpack.c.l.b16 %v1216
  %v1697 = vunpack.c.h.b16 %v1216
  %v1698 = vunpack.c.l.b16 %v1217
  %v1699 = vunpack.c.h.b16 %v1217
  %v1700 = vunpack.c.l.b16 %v1218
  %v1701 = vunpack.c.h.b16 %v1218
  %v1702 = vunpack.c.l.b16 %v1219
  %v1703 = vunpack.c.h.b16 %v1219
  %v1704 = vunpack.c.l.b16 %v1220
  %v1705 = vunpack.c.h.b16 %v1220
  %v1706 = vunpack.c.l.b16 %v1221
  %v1707 = vunpack.c.h.b16 %v1221
  %v1708 = vunpack.c.l.b16 %v1222
  %v1709 = vunpack.c.h.b16 %v1222
  %v1710 = vunpack.c.l.b16 %v1223
  %v1711 = vunpack.c.h.b16 %v1223
  %v1712 = vunpack.c.l.b16 %v1224
  %v1713 = vunpack.c.h.b16 %v1224
  %v1714 = vunpack.c.l.b16 %v1225
  %v1715 = vunpack.c.h.b16 %v1225
  %v1716 = vunpack.c.l.b16 %v1226
  %v1717 = vunpack.c.h.b16 %v1226
  %v1718 = vunpack.c.l.b16 %v1227
  %v1719 = vunpack.c.h.b16 %v1227
  %v1720 = vunpack.c.l.b16 %v1228
  %v1721 = vunpack.c.h.b16 %v1228
  %v1722 = vunpack.c.l.b16 %v1229
  %v1723 = vunpack.c.h.b16 %v1229
  %v1724 = vunpack.c.l.b16 %v1230
  %v1725 = vunpack.c.h.b16 %v1230
  %v1726 = vunpack.c.l.b16 %v1231
  %v1727 = vunpack.c.h.b16 %v1231
  %v1728 = vunpack.c.l.b16 %v1232
  %v1729 = vunpack.c.h.b16 %v1232
  %v1730 = vunpack.c.l.b16 %v1233
  %v1731 = vunpack.c.h.b16 %v1233
  %v1732 = vunpack.c.l.b16 %v1234
  %v1733 = vunpack.c.h.b16 %v1234
  %v1734 = vunpack.c.l.b16 %v1235
  %v1735 = vunpack.c.h.b16 %v1235
  %v1736 = vunpack.c.l.b16 %v1236
  %v1737 = vunpack.c.h.b16 %v1236
  %v1738 = vunpack.c.l.b16 %v1237
  %v1739 = vunpack.c.h.b16 %v1237
  %v1740 = vunpack.c.l.b16 %v1238
  %v1741 = vunpack.c.h.b16 %v1238
  %v1742 = vunpack.c.l.b16 %v1239
  %v1743 = vunpack.c.h.b16 %v1239
  %v1744 = vunpack.c.l.b16 %v1240
  %v1745 = vunpack.c.h.b16 %v1240
  %v1746 = vunpack.c.l.b16 %v1241
  %v1747 = vunpack.c.h.b16 %v1241
  %v1748 = vunpack.c.l.b16 %v1242
  %v1749 = vunpack.c.h.b16 %v1242
  %v1750 = vunpack.c.l.b16 %v1243
  %v1751 = vunpack.c.h.b16 %v1243
  %v1752 = vunpack.c.l.b16 %v1244
  %v1753 = vunpack.c.h.b16 %v1244
  %v1754 = vunpack.c.l.b16 %v1245
  %v1755 = vunpack.c.h.b16 %v1245
  %v1756 = vunpack.c.l.b16 %v1246
  %v1757 = vunpack.c.h.b16 %v1246
  %v1758 = vunpack.c.l.b16 %v1247
  %v1759 = vunpack.c.h.b16 %v1247
  %v1760 = vunpack.c.l.b16 %v1248
  %v1761 = vunpack.c.h.b16 %v1248
  %v1762 = vunpack.c.l.b16 %v1249
  %v1763 = vunpack.c.h.b16 %v1249
  %v1764 = vunpack.c.l.b16 %v1250
  %v1765 = vunpack.c.h.b16 %v1250
  %v1766 = vunpack.c.l.b16 %v1251
  %v1767 = vunpack.c.h.b16 %v1251
  %v1768 = vunpack.c.l.b16 %v1252
  %v1769 = vunpack.c.h.b16 %v1252
  %v1770 = vunpack.c.l.b16 %v1253
  %v1771 = vunpack.c.h.b16 %v1253
  %v1772 = vunpack.c.l.b16 %v1254
  %v1773 = vunpack.c.h.b16 %v1254
  %v1774 = vunpack.c.l.b16 %v1255
  %v1775 = vunpack.c.h.b16 %v1255
  %v1776 = vunpack.c.l.b16 %v1256
  %v1777 = vunpack.c.h.b16 %v1256
  %v1778 = vunpack.c.l.b16 %v1257
  %v1779 = vunpack.c.h.b16 %v1257
  %v1780 = vunpack.c.l.b16 %v1258
  %v1781 = vunpack.c.h.b16 %v1258
  %v1782 = vunpack.c.l.b16 %v1259
  %v1783 = vunpack.c.h.b16 %v1259
  %v1784 = vunpack.c.l.b16 %v1260
  %v1785 = vunpack.c.h.b16 %v1260
  %v1786 = vunpack.c.l.b16 %v1261
  %v1787 = vunpack.c.h.b16 %v1261
  %v1788 = vunpack.c.l.b16 %v1262
  %v1789 = vunpack.c.h.b16 %v1262
  %v1790 = vunpack.c.l.b16 %v1263
  %v1791 = vunpack.c.h.b16 %v1263
  %v1792 = vunpack.c.l.b16 %v1264
  %v1793 = vunpack.c.h.b16 %v1264
  %v1794 = vunpack.c.l.b16 %v1265
  %v1795 = vunpack.c.h.b16 %v1265
  %v1796 = vunpack.c.l.b16 %v1266
  %v1797 = vunpack.c.h.b16 %v1266
  %v1798 = vunpack.c.l.b16 %v1267
  %v1799 = vunpack.c.h.b16 %v1267
  %v1800 = vunpack.c.l.b16 %v1268
  %v1801 = vunpack.c.h.b16 %v1268
  %v1802 = vunpack.c.l.b16 %v1269
  %v1803 = vunpack.c.h.b16 %v1269
  %v1804 = vunpack.c.l.b16 %v1270
  %v1805 = vunpack.c.h.b16 %v1270
  %v1806 = vunpack.c.l.b16 %v1271
  %v1807 = vunpack.c.h.b16 %v1271
  %v1808 = vunpack.c.l.b16 %v1272
  %v1809 = vunpack.c.h.b16 %v1272
  %v1810 = vunpack.c.l.b16 %v1273
  %v1811 = vunpack.c.h.b16 %v1273
  %v1812 = vunpack.c.l.b16 %v1274
  %v1813 = vunpack.c.h.b16 %v1274
  %v1814 = vunpack.c.l.b16 %v1275
  %v1815 = vunpack.c.h.b16 %v1275
  %v1816 = vunpack.c.l.b16 %v1276
  %v1817 = vunpack.c.h.b16 %v1276
  %v1818 = vunpack.c.l.b16 %v1277
  %v1819 = vunpack.c.h.b16 %v1277
  %v1820 = vunpack.c.l.b16 %v1278
  %v1821 = vunpack.c.h.b16 %v1278
  %v1822 = vunpack.c.l.b16 %v1279
  %v1823 = vunpack.c.h.b16 %v1279
  %v1824 = vunpack.c.l.b16 %v1280
  %v1825 = vunpack.c.h.b16 %v1280
  %v1826 = vunpack.c.l.b16 %v1281
  %v1827 = vunpack.c.h.b16 %v1281
  %v1828 = vunpack.c.l.b16 %v1282
  %v1829 = vunpack.c.h.b16 %v1282
  %v1830 = vunpack.c.l.b16 %v1283
  %v1831 = vunpack.c.h.b16 %v1283
  %v1832 = vunpack.c.l.b16 %v1284
  %v1833 = vunpack.c.h.b16 %v1284
  %v1834 = vunpack.c.l.b16 %v1285
  %v1835 = vunpack.c.h.b16 %v1285
  %v1836 = vunpack.c.l.b16 %v1286
  %v1837 = vunpack.c.h.b16 %v1286
  %v1838 = vunpack.c.l.b16 %v1287
  %v1839 = vunpack.c.h.b16 %v1287
  %v1840 = vunpack.c.l.b16 %v1288
  %v1841 = vunpack.c.h.b16 %v1288
  %v1842 = vunpack.c.l.b16 %v1289
  %v1843 = vunpack.c.h.b16 %v1289
  %v1844 = vunpack.c.l.b16 %v1290
  %v1845 = vunpack.c.h.b16 %v1290
  %v1846 = vunpack.c.l.b16 %v1291
  %v1847 = vunpack.c.h.b16 %v1291
  %v1848 = vunpack.c.l.b16 %v1292
  %v1849 = vunpack.c.h.b16 %v1292
  %v1850 = vunpack.c.l.b16 %v1293
  %v1851 = vunpack.c.h.b16 %v1293
  %v1852 = vunpack.c.l.b16 %v1294
  %v1853 = vunpack.c.h.b16 %v1294
  %v1854 = vunpack.c.l.b16 %v1295
  %v1855 = vunpack.c.h.b16 %v1295
  %v1856 = vunpack.c.l.b16 %v1296
  %v1857 = vunpack.c.h.b16 %v1296
  %v1858 = vunpack.c.l.b16 %v1297
  %v1859 = vunpack.c.h.b16 %v1297
  %v1860 = vunpack.c.l.b16 %v1298
  %v1861 = vunpack.c.h.b16 %v1298
  %v1862 = vunpack.c.l.b16 %v1299
  %v1863 = vunpack.c.h.b16 %v1299
  %v1864 = vunpack.c.l.b16 %v1300
  %v1865 = vunpack.c.h.b16 %v1300
  %v1866 = vunpack.c.l.b16 %v1301
  %v1867 = vunpack.c.h.b16 %v1301
  %v1868 = vunpack.c.l.b16 %v1302
  %v1869 = vunpack.c.h.b16 %v1302
  %v1870 = vunpack.c.l.b16 %v1303
  %v1871 = vunpack.c.h.b16 %v1303
  %v1872 = vunpack.c.l.b16 %v1304
  %v1873 = vunpack.c.h.b16 %v1304
  %v1874 = vunpack.c.l.b16 %v1305
  %v1875 = vunpack.c.h.b16 %v1305
  %v1876 = vunpack.c.l.b16 %v1306
  %v1877 = vunpack.c.h.b16 %v1306
  %v1878 = vunpack.c.l.b16 %v1307
  %v1879 = vunpack.c.h.b16 %v1307
  %v1880 = vunpack.c.l.b16 %v1308
  %v1881 = vunpack.c.h.b16 %v1308
  %v1882 = vunpack.c.l.b16 %v1309
  %v1883 = vunpack.c.h.b16 %v1309
  %v1884 = vunpack.c.l.b16 %v1310
  %v1885 = vunpack.c.h.b16 %v1310
  %v1886 = vunpack.c.l.b16 %v1311
  %v1887 = vunpack.c.h.b16 %v1311
  %v1888 = vunpack.c.l.b16 %v1312
  %v1889 = vunpack.c.h.b16 %v1312
  %v1890 = vunpack.c.l.b16 %v1313
  %v1891 = vunpack.c.h.b16 %v1313
  %v1892 = vunpack.c.l.b16 %v1314
  %v1893 = vunpack.c.h.b16 %v1314
  %v1894 = vunpack.c.l.b16 %v1315
  %v1895 = vunpack.c.h.b16 %v1315
  %v1896 = vunpack.c.l.b16 %v1316
  %v1897 = vunpack.c.h.b16 %v1316
  %v1898 = vunpack.c.l.b16 %v1317
  %v1899 = vunpack.c.h.b16 %v1317
  %v1900 = vunpack.c.l.b16 %v1318
  %v1901 = vunpack.c.h.b16 %v1318
  %v1902 = vunpack.c.l.b16 %v1319
  %v1903 = vunpack.c.h.b16 %v1319
  %v1904 = vunpack.c.l.b16 %v1320
  %v1905 = vunpack.c.h.b16 %v1320
  %v1906 = vunpack.c.l.b16 %v1321
  %v1907 = vunpack.c.h.b16 %v1321
  %v1908 = vpack.c.b16 %v1528, %v1524
  %v1909 = vpack.c.b16 %v1529, %v1525
  %v1910 = vpack.c.b16 %v1530, %v1526
  %v1911 = vpack.c.b16 %v1531, %v1527
  %v1912 = vpack.c.b16 %v1536, %v1532
  %v1913 = vpack.c.b16 %v1537, %v1533
  %v1914 = vpack.c.b16 %v1538, %v1534
  %v1915 = vpack.c.b16 %v1539, %v1535
  %v1916 = vpack.c.b16 %v1544, %v1540
  %v1917 = vpack.c.b16 %v1545, %v1541
  %v1918 = vpack.c.b16 %v1546, %v1542
  %v1919 = vpack.c.b16 %v1547, %v1543
  %v1920 = vpack.c.b16 %v1552, %v1548
  %v1921 = vpack.c.b16 %v1553, %v1549
  %v1922 = vpack.c.b16 %v1554, %v1550
  %v1923 = vpack.c.b16 %v1555, %v1551
  %v1924 = vpack.c.b16 %v1560, %v1556
  %v1925 = vpack.c.b16 %v1561, %v1557
  %v1926 = vpack.c.b16 %v1562, %v1558
  %v1927 = vpack.c.b16 %v1563, %v1559
  %v1928 = vpack.c.b16 %v1568, %v1564
  %v1929 = vpack.c.b16 %v1569, %v1565
  %v1930 = vpack.c.b16 %v1570, %v1566
  %v1931 = vpack.c.b16 %v1571, %v1567
  %v1932 = vpack.c.b16 %v1576, %v1572
  %v1933 = vpack.c.b16 %v1577, %v1573
  %v1934 = vpack.c.b16 %v1578, %v1574
  %v1935 = vpack.c.b16 %v1579, %v1575
  %v1936 = vpack.c.b16 %v1584, %v1580
  %v1937 = vpack.c.b16 %v1585, %v1581
  %v1938 = vpack.c.b16 %v1586, %v1582
  %v1939 = vpack.c.b16 %v1587, %v1583
  %v1940 = vpack.c.b16 %v1592, %v1588
  %v1941 = vpack.c.b16 %v1593, %v1589
  %v1942 = vpack.c.b16 %v1594, %v1590
  %v1943 = vpack.c.b16 %v1595, %v1591
  %v1944 = vpack.c.b16 %v1600, %v1596
  %v1945 = vpack.c.b16 %v1601, %v1597
  %v1946 = vpack.c.b16 %v1602, %v1598
  %v1947 = vpack.c.b16 %v1603, %v1599
  %v1948 = vpack.c.b16 %v1608, %v1604
  %v1949 = vpack.c.b16 %v1609, %v1605
  %v1950 = vpack.c.b16 %v1610, %v1606
  %v1951 = vpack.c.b16 %v1611, %v1607
  %v1952 = vpack.c.b16 %v1616, %v1612
  %v1953 = vpack.c.b16 %v1617, %v1613
  %v1954 = vpack.c.b16 %v1618, %v1614
  %v1955 = vpack.c.b16 %v1619, %v1615
  %v1956 = vpack.c.b16 %v1624, %v1620
  %v1957 = vpack.c.b16 %v1625, %v1621
  %v1958 = vpack.c.b16 %v1626, %v1622
  %v1959 = vpack.c.b16 %v1627, %v1623
  %v1960 = vpack.c.b16 %v1632, %v1628
  %v1961 = vpack.c.b16 %v1633, %v1629
  %v1962 = vpack.c.b16 %v1634, %v1630
  %v1963 = vpack.c.b16 %v1635, %v1631
  %v1964 = vpack.c.b16 %v1640, %v1636
  %v1965 = vpack.c.b16 %v1641, %v1637
  %v1966 = vpack.c.b16 %v1642, %v1638
  %v1967 = vpack.c.b16 %v1643, %v1639
  %v1968 = vpack.c.b16 %v1648, %v1644
  %v1969 = vpack.c.b16 %v1649, %v1645
  %v1970 = vpack.c.b16 %v1650, %v1646
  %v1971 = vpack.c.b16 %v1651, %v1647
  %v1972 = vpack.c.b16 %v1656, %v1652
  %v1973 = vpack.c.b16 %v1657, %v1653
  %v1974 = vpack.c.b16 %v1658, %v1654
  %v1975 = vpack.c.b16 %v1659, %v1655
  %v1976 = vpack.c.b16 %v1664, %v1660
  %v1977 = vpack.c.b16 %v1665, %v1661
  %v1978 = vpack.c.b16 %v1666, %v1662
  %v1979 = vpack.c.b16 %v1667, %v1663
  %v1980 = vpack.c.b16 %v1672, %v1668
  %v1981 = vpack.c.b16 %v1673, %v1669
  %v1982 = vpack.c.b16 %v1674, %v1670
  %v1983 = vpack.c.b16 %v1675, %v1671
  %v1984 = vpack.c.b16 %v1680, %v1676
  %v1985 = vpack.c.b16 %v1681, %v1677
  %v1986 = vpack.c.b16 %v1682, %v1678
  %v1987 = vpack.c.b16 %v1683, %v1679
  %v1988 = vpack.c.b16 %v1688, %v1684
  %v1989 = vpack.c.b16 %v1689, %v1685
  %v1990 = vpack.c.b16 %v1690, %v1686
  %v1991 = vpack.c.b16 %v1691, %v1687
  %v1992 = vpack.c.b16 %v1696, %v1692
  %v1993 = vpack.c.b16 %v1697, %v1693
  %v1994 = vpack.c.b16 %v1698, %v1694
  %v1995 = vpack.c.b16 %v1699, %v1695
  %v1996 = vpack.c.b16 %v1704, %v1700
  %v1997 = vpack.c.b16 %v1705, %v1701
  %v1998 = vpack.c.b16 %v1706, %v1702
  %v1999 = vpack.c.b16 %v1707, %v1703
  %v2000 = vpack.c.b16 %v1712, %v1708
  %v2001 = vpack.c.b16 %v1713, %v1709
  %v2002 = vpack.c.b16 %v1714, %v1710
  %v2003 = vpack.c.b16 %v1715, %v1711
  %v2004 = vpack.c.b16 %v1720, %v1716
  %v2005 = vpack.c.b16 %v1721, %v1717
  %v2006 = vpack.c.b16 %v1722, %v1718
  %v2007 = vpack.c.b16 %v1723, %v1719
  %v2008 = vpack.c.b16 %v1728, %v1724
  %v2009 = vpack.c.b16 %v1729, %v1725
  %v2010 = vpack.c.b16 %v1730, %v1726
  %v2011 = vpack.c.b16 %v1731, %v1727
  %v2012 = vpack.c.b16 %v1736, %v1732
  %v2013 = vpack.c.b16 %v1737, %v1733
  %v2014 = vpack.c.b16 %v1738, %v1734
  %v2015 = vpack.c.b16 %v1739, %v1735
  %v2016 = vpack.c.b16 %v1744, %v1740
  %v2017 = vpack.c.b16 %v1745, %v1741
  %v2018 = vpack.c.b16 %v1746, %v1742
  %v2019 = vpack.c.b16 %v1747, %v1743
  %v2020 = vpack.c.b16 %v1752, %v1748
  %v2021 = vpack.c.b16 %v1753, %v1749
  %v2022 = vpack.c.b16 %v1754, %v1750
  %v2023 = vpack.c.b16 %v1755, %v1751
  %v2024 = vpack.c.b16 %v1760, %v1756
  %v2025 = vpack.c.b16 %v1761, %v1757
  %v2026 = vpack.c.b16 %v1762, %v1758
  %v2027 = vpack.c.b16 %v1763, %v1759
  %v2028 = vpack.c.b16 %v1768, %v1764
  %v2029 = vpack.c.b16 %v1769, %v1765
  %v2030 = vpack.c.b16 %v1770, %v1766
  %v2031 = vpack.c.b16 %v1771, %v1767
  %v2032 = vpack.c.b16 %v1776, %v1772
  %v2033 = vpack.c.b16 %v1777, %v1773
  %v2034 = vpack.c.b16 %v1778, %v1774
  %v2035 = vpack.c.b16 %v1779, %v1775
  %v2036 = vpack.c.b16 %v1784, %v1780
  %v2037 = vpack.c.b16 %v1785, %v1781
  %v2038 = vpack.c.b16 %v1786, %v1782
  %v2039 = vpack.c.b16 %v1787, %v1783
  %v2040 = vpack.c.b16 %v1792, %v1788
  %v2041 = vpack.c.b16 %v1793, %v1789
  %v2042 = vpack.c.b16 %v1794, %v1790
  %v2043 = vpack.c.b16 %v1795, %v1791
  %v2044 = vpack.c.b16 %v1800, %v1796
  %v2045 = vpack.c.b16 %v1801, %v1797
  %v2046 = vpack.c.b16 %v1802, %v1798
  %v2047 = vpack.c.b16 %v1803, %v1799
  %v2048 = vpack.c.b16 %v1808, %v1804
  %v2049 = vpack.c.b16 %v1809, %v1805
  %v2050 = vpack.c.b16 %v1810, %v1806
  %v2051 = vpack.c.b16 %v1811, %v1807
  %v2052 = vpack.c.b16 %v1816, %v1812
  %v2053 = vpack.c.b16 %v1817, %v1813
  %v2054 = vpack.c.b16 %v1818, %v1814
  %v2055 = vpack.c.b16 %v1819, %v1815
  %v2056 = vpack.c.b16 %v1824, %v1820
  %v2057 = vpack.c.b16 %v1825, %v1821
  %v2058 = vpack.c.b16 %v1826, %v1822
  %v2059 = vpack.c.b16 %v1827, %v1823
  %v2060 = vpack.c.b16 %v1832, %v1828
  %v2061 = vpack.c.b16 %v1833, %v1829
  %v2062 = vpack.c.b16 %v1834, %v1830
  %v2063 = vpack.c.b16 %v1835, %v1831
  %v2064 = vpack.c.b16 %v1840, %v1836
  %v2065 = vpack.c.b16 %v1841, %v1837
  %v2066 = vpack.c.b16 %v1842, %v1838
  %v2067 = vpack.c.b16 %v1843, %v1839
  %v2068 = vpack.c.b16 %v1848, %v1844
  %v2069 = vpack.c.b16 %v1849, %v1845
  %v2070 = vpack.c.b16 %v1850, %v1846
  %v2071 = vpack.c.b16 %v1851, %v1847
  %v2072 = vpack.c.b16 %v1856, %v1852
  %v2073 = vpack.c.b16 %v1857, %v1853
  %v2074 = vpack.c.b16 %v1858, %v1854
  %v2075 = vpack.c.b16 %v1859, %v1855
  %v2076 = vpack.c.b16 %v1864, %v1860
  %v2077 = vpack.c.b16 %v1865, %v1861
  %v2078 = vpack.c.b16 %v1866, %v1862
  %v2079 = vpack.c.b16 %v1867, %v1863
  %v2080 = vpack.c.b16 %v1872, %v1868
  %v2081 = vpack.c.b16 %v1873, %v1869
  %v2082 = vpack.c.b16 %v1874, %v1870
  %v2083 = vpack.c.b16 %v1875, %v1871
  %v2084 = vpack.c.b16 %v1880, %v1876
  %v2085 = vpack.c.b16 %v1881, %v1877
  %v2086 = vpack.c.b16 %v1882, %v1878
  %v2087 = vpack.c.b16 %v1883, %v1879
  %v2088 = vpack.c.b16 %v1888, %v1884
  %v2089 = vpack.c.b16 %v1889, %v1885
  %v2090 = vpack.c.b16 %v1890, %v1886
  %v2091 = vpack.c.b16 %v1891, %v1887
  %v2092 = vpack.c.b16 %v1896, %v1892
  %v2093 = vpack.c.b16 %v1897, %v1893
  %v2094 = vpack.c.b16 %v1898, %v1894
  %v2095 = vpack.c.b16 %v1899, %v1895
  %v2096 = vpack.c.b16 %v1904, %v1900
  %v2097 = vpack.c.b16 %v1905, %v1901
  %v2098 = vpack.c.b16 %v1906, %v1902
  %v2099 = vpack.c.b16 %v1907, %v1903
  %2292 = vmatpush.bf16.msra.mxu0 %v1936
  %2293 = vmatpush.bf16.msra.mxu0 %v1932
  %2294 = vmatpush.bf16.msra.mxu0 %v1928
  %2295 = vmatpush.bf16.msra.mxu0 %v1924
  %2296 = vmatpush.bf16.msra.mxu0 %v1920
  %2297 = vmatpush.bf16.msra.mxu0 %v1916
  %2298 = vmatpush.bf16.msra.mxu0 %v1912
  %2299 = vmatpush.bf16.msra.mxu0 %v1908
  %2300 = vmatmul.bf16.gmra.mxu0 %v1118
  %v2301 = vpop.f32.mrf.mxu0
  %v2302 = vadd.f32 %v1324, %v2301
  %v2303 = vpop.f32.mrf.mxu0
  %v2304 = vadd.f32 %v1324, %v2303
  %2305 = vmatmul.bf16.gmra.mxu0 %v1124
  %v2306 = vpop.f32.mrf.mxu0
  %v2307 = vadd.f32 %v1324, %v2306
  %v2308 = vpop.f32.mrf.mxu0
  %v2309 = vadd.f32 %v1324, %v2308
  %2310 = vdwg.mxu0
  %2311 = vmatpush.bf16.msra.mxu0 %v1968
  %2312 = vmatpush.bf16.msra.mxu0 %v1964
  %2313 = vmatpush.bf16.msra.mxu0 %v1960
  %2314 = vmatpush.bf16.msra.mxu0 %v1956
  %2315 = vmatpush.bf16.msra.mxu0 %v1952
  %2316 = vmatpush.bf16.msra.mxu0 %v1948
  %2317 = vmatpush.bf16.msra.mxu0 %v1944
  %2318 = vmatpush.bf16.msra.mxu0 %v1940
  %2319 = vmatmul.bf16.gmra.mxu0 %v1119
  %v2320 = vpop.f32.mrf.mxu0
  %v2321 = vadd.f32 %v2302, %v2320
  %v2322 = vpop.f32.mrf.mxu0
  %v2323 = vadd.f32 %v2304, %v2322
  %2324 = vmatmul.bf16.gmra.mxu0 %v1125
  %v2325 = vpop.f32.mrf.mxu0
  %v2326 = vadd.f32 %v2307, %v2325
  %v2327 = vpop.f32.mrf.mxu0
  %v2328 = vadd.f32 %v2309, %v2327
  %2329 = vdwg.mxu0
  %2330 = vmatpush.bf16.msra.mxu0 %v2000
  %2331 = vmatpush.bf16.msra.mxu0 %v1996
  %2332 = vmatpush.bf16.msra.mxu0 %v1992
  %2333 = vmatpush.bf16.msra.mxu0 %v1988
  %2334 = vmatpush.bf16.msra.mxu0 %v1984
  %2335 = vmatpush.bf16.msra.mxu0 %v1980
  %2336 = vmatpush.bf16.msra.mxu0 %v1976
  %2337 = vmatpush.bf16.msra.mxu0 %v1972
  %2338 = vmatmul.bf16.gmra.mxu0 %v1120
  %v2339 = vpop.f32.mrf.mxu0
  %v2340 = vadd.f32 %v2321, %v2339
  %v2341 = vpop.f32.mrf.mxu0
  %v2342 = vadd.f32 %v2323, %v2341
  %2343 = vmatmul.bf16.gmra.mxu0 %v1126
  %v2344 = vpop.f32.mrf.mxu0
  %v2345 = vadd.f32 %v2326, %v2344
  %v2346 = vpop.f32.mrf.mxu0
  %v2347 = vadd.f32 %v2328, %v2346
  %2348 = vdwg.mxu0
  %2349 = vmatpush.bf16.msra.mxu0 %v2032
  %2350 = vmatpush.bf16.msra.mxu0 %v2028
  %2351 = vmatpush.bf16.msra.mxu0 %v2024
  %2352 = vmatpush.bf16.msra.mxu0 %v2020
  %2353 = vmatpush.bf16.msra.mxu0 %v2016
  %2354 = vmatpush.bf16.msra.mxu0 %v2012
  %2355 = vmatpush.bf16.msra.mxu0 %v2008
  %2356 = vmatpush.bf16.msra.mxu0 %v2004
  %2357 = vmatmul.bf16.gmra.mxu0 %v1121
  %v2358 = vpop.f32.mrf.mxu0
  %v2359 = vadd.f32 %v2340, %v2358
  %v2360 = vpop.f32.mrf.mxu0
  %v2361 = vadd.f32 %v2342, %v2360
  %2362 = vmatmul.bf16.gmra.mxu0 %v1127
  %v2363 = vpop.f32.mrf.mxu0
  %v2364 = vadd.f32 %v2345, %v2363
  %v2365 = vpop.f32.mrf.mxu0
  %v2366 = vadd.f32 %v2347, %v2365
  %2367 = vdwg.mxu0
  %2368 = vmatpush.bf16.msra.mxu0 %v2064
  %2369 = vmatpush.bf16.msra.mxu0 %v2060
  %2370 = vmatpush.bf16.msra.mxu0 %v2056
  %2371 = vmatpush.bf16.msra.mxu0 %v2052
  %2372 = vmatpush.bf16.msra.mxu0 %v2048
  %2373 = vmatpush.bf16.msra.mxu0 %v2044
  %2374 = vmatpush.bf16.msra.mxu0 %v2040
  %2375 = vmatpush.bf16.msra.mxu0 %v2036
  %2376 = vmatmul.bf16.gmra.mxu0 %v1122
  %v2377 = vpop.f32.mrf.mxu0
  %v2378 = vadd.f32 %v2359, %v2377
  %v2379 = vpop.f32.mrf.mxu0
  %v2380 = vadd.f32 %v2361, %v2379
  %2381 = vmatmul.bf16.gmra.mxu0 %v1128
  %v2382 = vpop.f32.mrf.mxu0
  %v2383 = vadd.f32 %v2364, %v2382
  %v2384 = vpop.f32.mrf.mxu0
  %v2385 = vadd.f32 %v2366, %v2384
  %2386 = vdwg.mxu0
  %2387 = vmatpush.bf16.msra.mxu0 %v2096
  %2388 = vmatpush.bf16.msra.mxu0 %v2092
  %2389 = vmatpush.bf16.msra.mxu0 %v2088
  %2390 = vmatpush.bf16.msra.mxu0 %v2084
  %2391 = vmatpush.bf16.msra.mxu0 %v2080
  %2392 = vmatpush.bf16.msra.mxu0 %v2076
  %2393 = vmatpush.bf16.msra.mxu0 %v2072
  %2394 = vmatpush.bf16.msra.mxu0 %v2068
  %2395 = vmatmul.bf16.gmra.mxu0 %v1123
  %v2396 = vpop.f32.mrf.mxu0
  %v2397 = vadd.f32 %v2378, %v2396
  %v2398 = vpop.f32.mrf.mxu0
  %v2399 = vadd.f32 %v2380, %v2398
  %2400 = vmatmul.bf16.gmra.mxu0 %v1129
  %v2401 = vpop.f32.mrf.mxu0
  %v2402 = vadd.f32 %v2383, %v2401
  %v2403 = vpop.f32.mrf.mxu0
  %v2404 = vadd.f32 %v2385, %v2403
  %2405 = vdwg.mxu0
  %2406 = vmatpush.bf16.msra.mxu0 %v1937
  %2407 = vmatpush.bf16.msra.mxu0 %v1933
  %2408 = vmatpush.bf16.msra.mxu0 %v1929
  %2409 = vmatpush.bf16.msra.mxu0 %v1925
  %2410 = vmatpush.bf16.msra.mxu0 %v1921
  %2411 = vmatpush.bf16.msra.mxu0 %v1917
  %2412 = vmatpush.bf16.msra.mxu0 %v1913
  %2413 = vmatpush.bf16.msra.mxu0 %v1909
  %2414 = vmatmul.bf16.gmra.mxu0 %v1118
  %v2415 = vpop.f32.mrf.mxu0
  %v2416 = vadd.f32 %v1325, %v2415
  %v2417 = vpop.f32.mrf.mxu0
  %v2418 = vadd.f32 %v1325, %v2417
  %2419 = vmatmul.bf16.gmra.mxu0 %v1124
  %v2420 = vpop.f32.mrf.mxu0
  %v2421 = vadd.f32 %v1325, %v2420
  %v2422 = vpop.f32.mrf.mxu0
  %v2423 = vadd.f32 %v1325, %v2422
  %2424 = vdwg.mxu0
  %2425 = vmatpush.bf16.msra.mxu0 %v1969
  %2426 = vmatpush.bf16.msra.mxu0 %v1965
  %2427 = vmatpush.bf16.msra.mxu0 %v1961
  %2428 = vmatpush.bf16.msra.mxu0 %v1957
  %2429 = vmatpush.bf16.msra.mxu0 %v1953
  %2430 = vmatpush.bf16.msra.mxu0 %v1949
  %2431 = vmatpush.bf16.msra.mxu0 %v1945
  %2432 = vmatpush.bf16.msra.mxu0 %v1941
  %2433 = vmatmul.bf16.gmra.mxu0 %v1119
  %v2434 = vpop.f32.mrf.mxu0
  %v2435 = vadd.f32 %v2416, %v2434
  %v2436 = vpop.f32.mrf.mxu0
  %v2437 = vadd.f32 %v2418, %v2436
  %2438 = vmatmul.bf16.gmra.mxu0 %v1125
  %v2439 = vpop.f32.mrf.mxu0
  %v2440 = vadd.f32 %v2421, %v2439
  %v2441 = vpop.f32.mrf.mxu0
  %v2442 = vadd.f32 %v2423, %v2441
  %2443 = vdwg.mxu0
  %2444 = vmatpush.bf16.msra.mxu0 %v2001
  %2445 = vmatpush.bf16.msra.mxu0 %v1997
  %2446 = vmatpush.bf16.msra.mxu0 %v1993
  %2447 = vmatpush.bf16.msra.mxu0 %v1989
  %2448 = vmatpush.bf16.msra.mxu0 %v1985
  %2449 = vmatpush.bf16.msra.mxu0 %v1981
  %2450 = vmatpush.bf16.msra.mxu0 %v1977
  %2451 = vmatpush.bf16.msra.mxu0 %v1973
  %2452 = vmatmul.bf16.gmra.mxu0 %v1120
  %v2453 = vpop.f32.mrf.mxu0
  %v2454 = vadd.f32 %v2435, %v2453
  %v2455 = vpop.f32.mrf.mxu0
  %v2456 = vadd.f32 %v2437, %v2455
  %2457 = vmatmul.bf16.gmra.mxu0 %v1126
  %v2458 = vpop.f32.mrf.mxu0
  %v2459 = vadd.f32 %v2440, %v2458
  %v2460 = vpop.f32.mrf.mxu0
  %v2461 = vadd.f32 %v2442, %v2460
  %2462 = vdwg.mxu0
  %2463 = vmatpush.bf16.msra.mxu0 %v2033
  %2464 = vmatpush.bf16.msra.mxu0 %v2029
  %2465 = vmatpush.bf16.msra.mxu0 %v2025
  %2466 = vmatpush.bf16.msra.mxu0 %v2021
  %2467 = vmatpush.bf16.msra.mxu0 %v2017
  %2468 = vmatpush.bf16.msra.mxu0 %v2013
  %2469 = vmatpush.bf16.msra.mxu0 %v2009
  %2470 = vmatpush.bf16.msra.mxu0 %v2005
  %2471 = vmatmul.bf16.gmra.mxu0 %v1121
  %v2472 = vpop.f32.mrf.mxu0
  %v2473 = vadd.f32 %v2454, %v2472
  %v2474 = vpop.f32.mrf.mxu0
  %v2475 = vadd.f32 %v2456, %v2474
  %2476 = vmatmul.bf16.gmra.mxu0 %v1127
  %v2477 = vpop.f32.mrf.mxu0
  %v2478 = vadd.f32 %v2459, %v2477
  %v2479 = vpop.f32.mrf.mxu0
  %v2480 = vadd.f32 %v2461, %v2479
  %2481 = vdwg.mxu0
  %2482 = vmatpush.bf16.msra.mxu0 %v2065
  %2483 = vmatpush.bf16.msra.mxu0 %v2061
  %2484 = vmatpush.bf16.msra.mxu0 %v2057
  %2485 = vmatpush.bf16.msra.mxu0 %v2053
  %2486 = vmatpush.bf16.msra.mxu0 %v2049
  %2487 = vmatpush.bf16.msra.mxu0 %v2045
  %2488 = vmatpush.bf16.msra.mxu0 %v2041
  %2489 = vmatpush.bf16.msra.mxu0 %v2037
  %2490 = vmatmul.bf16.gmra.mxu0 %v1122
  %v2491 = vpop.f32.mrf.mxu0
  %v2492 = vadd.f32 %v2473, %v2491
  %v2493 = vpop.f32.mrf.mxu0
  %v2494 = vadd.f32 %v2475, %v2493
  %2495 = vmatmul.bf16.gmra.mxu0 %v1128
  %v2496 = vpop.f32.mrf.mxu0
  %v2497 = vadd.f32 %v2478, %v2496
  %v2498 = vpop.f32.mrf.mxu0
  %v2499 = vadd.f32 %v2480, %v2498
  %2500 = vdwg.mxu0
  %2501 = vmatpush.bf16.msra.mxu0 %v2097
  %2502 = vmatpush.bf16.msra.mxu0 %v2093
  %2503 = vmatpush.bf16.msra.mxu0 %v2089
  %2504 = vmatpush.bf16.msra.mxu0 %v2085
  %2505 = vmatpush.bf16.msra.mxu0 %v2081
  %2506 = vmatpush.bf16.msra.mxu0 %v2077
  %2507 = vmatpush.bf16.msra.mxu0 %v2073
  %2508 = vmatpush.bf16.msra.mxu0 %v2069
  %2509 = vmatmul.bf16.gmra.mxu0 %v1123
  %v2510 = vpop.f32.mrf.mxu0
  %v2511 = vadd.f32 %v2492, %v2510
  %v2512 = vpop.f32.mrf.mxu0
  %v2513 = vadd.f32 %v2494, %v2512
  %2514 = vmatmul.bf16.gmra.mxu0 %v1129
  %v2515 = vpop.f32.mrf.mxu0
  %v2516 = vadd.f32 %v2497, %v2515
  %v2517 = vpop.f32.mrf.mxu0
  %v2518 = vadd.f32 %v2499, %v2517
  %2519 = vdwg.mxu0
  %2520 = vmatpush.bf16.msra.mxu0 %v1938
  %2521 = vmatpush.bf16.msra.mxu0 %v1934
  %2522 = vmatpush.bf16.msra.mxu0 %v1930
  %2523 = vmatpush.bf16.msra.mxu0 %v1926
  %2524 = vmatpush.bf16.msra.mxu0 %v1922
  %2525 = vmatpush.bf16.msra.mxu0 %v1918
  %2526 = vmatpush.bf16.msra.mxu0 %v1914
  %2527 = vmatpush.bf16.msra.mxu0 %v1910
  %2528 = vmatmul.bf16.gmra.mxu0 %v1118
  %v2529 = vpop.f32.mrf.mxu0
  %v2530 = vadd.f32 %v1326, %v2529
  %v2531 = vpop.f32.mrf.mxu0
  %v2532 = vadd.f32 %v1326, %v2531
  %2533 = vmatmul.bf16.gmra.mxu0 %v1124
  %v2534 = vpop.f32.mrf.mxu0
  %v2535 = vadd.f32 %v1326, %v2534
  %v2536 = vpop.f32.mrf.mxu0
  %v2537 = vadd.f32 %v1326, %v2536
  %2538 = vdwg.mxu0
  %2539 = vmatpush.bf16.msra.mxu0 %v1970
  %2540 = vmatpush.bf16.msra.mxu0 %v1966
  %2541 = vmatpush.bf16.msra.mxu0 %v1962
  %2542 = vmatpush.bf16.msra.mxu0 %v1958
  %2543 = vmatpush.bf16.msra.mxu0 %v1954
  %2544 = vmatpush.bf16.msra.mxu0 %v1950
  %2545 = vmatpush.bf16.msra.mxu0 %v1946
  %2546 = vmatpush.bf16.msra.mxu0 %v1942
  %2547 = vmatmul.bf16.gmra.mxu0 %v1119
  %v2548 = vpop.f32.mrf.mxu0
  %v2549 = vadd.f32 %v2530, %v2548
  %v2550 = vpop.f32.mrf.mxu0
  %v2551 = vadd.f32 %v2532, %v2550
  %2552 = vmatmul.bf16.gmra.mxu0 %v1125
  %v2553 = vpop.f32.mrf.mxu0
  %v2554 = vadd.f32 %v2535, %v2553
  %v2555 = vpop.f32.mrf.mxu0
  %v2556 = vadd.f32 %v2537, %v2555
  %2557 = vdwg.mxu0
  %2558 = vmatpush.bf16.msra.mxu0 %v2002
  %2559 = vmatpush.bf16.msra.mxu0 %v1998
  %2560 = vmatpush.bf16.msra.mxu0 %v1994
  %2561 = vmatpush.bf16.msra.mxu0 %v1990
  %2562 = vmatpush.bf16.msra.mxu0 %v1986
  %2563 = vmatpush.bf16.msra.mxu0 %v1982
  %2564 = vmatpush.bf16.msra.mxu0 %v1978
  %2565 = vmatpush.bf16.msra.mxu0 %v1974
  %2566 = vmatmul.bf16.gmra.mxu0 %v1120
  %v2567 = vpop.f32.mrf.mxu0
  %v2568 = vadd.f32 %v2549, %v2567
  %v2569 = vpop.f32.mrf.mxu0
  %v2570 = vadd.f32 %v2551, %v2569
  %2571 = vmatmul.bf16.gmra.mxu0 %v1126
  %v2572 = vpop.f32.mrf.mxu0
  %v2573 = vadd.f32 %v2554, %v2572
  %v2574 = vpop.f32.mrf.mxu0
  %v2575 = vadd.f32 %v2556, %v2574
  %2576 = vdwg.mxu0
  %2577 = vmatpush.bf16.msra.mxu0 %v2034
  %2578 = vmatpush.bf16.msra.mxu0 %v2030
  %2579 = vmatpush.bf16.msra.mxu0 %v2026
  %2580 = vmatpush.bf16.msra.mxu0 %v2022
  %2581 = vmatpush.bf16.msra.mxu0 %v2018
  %2582 = vmatpush.bf16.msra.mxu0 %v2014
  %2583 = vmatpush.bf16.msra.mxu0 %v2010
  %2584 = vmatpush.bf16.msra.mxu0 %v2006
  %2585 = vmatmul.bf16.gmra.mxu0 %v1121
  %v2586 = vpop.f32.mrf.mxu0
  %v2587 = vadd.f32 %v2568, %v2586
  %v2588 = vpop.f32.mrf.mxu0
  %v2589 = vadd.f32 %v2570, %v2588
  %2590 = vmatmul.bf16.gmra.mxu0 %v1127
  %v2591 = vpop.f32.mrf.mxu0
  %v2592 = vadd.f32 %v2573, %v2591
  %v2593 = vpop.f32.mrf.mxu0
  %v2594 = vadd.f32 %v2575, %v2593
  %2595 = vdwg.mxu0
  %2596 = vmatpush.bf16.msra.mxu0 %v2066
  %2597 = vmatpush.bf16.msra.mxu0 %v2062
  %2598 = vmatpush.bf16.msra.mxu0 %v2058
  %2599 = vmatpush.bf16.msra.mxu0 %v2054
  %2600 = vmatpush.bf16.msra.mxu0 %v2050
  %2601 = vmatpush.bf16.msra.mxu0 %v2046
  %2602 = vmatpush.bf16.msra.mxu0 %v2042
  %2603 = vmatpush.bf16.msra.mxu0 %v2038
  %2604 = vmatmul.bf16.gmra.mxu0 %v1122
  %v2605 = vpop.f32.mrf.mxu0
  %v2606 = vadd.f32 %v2587, %v2605
  %v2607 = vpop.f32.mrf.mxu0
  %v2608 = vadd.f32 %v2589, %v2607
  %2609 = vmatmul.bf16.gmra.mxu0 %v1128
  %v2610 = vpop.f32.mrf.mxu0
  %v2611 = vadd.f32 %v2592, %v2610
  %v2612 = vpop.f32.mrf.mxu0
  %v2613 = vadd.f32 %v2594, %v2612
  %2614 = vdwg.mxu0
  %2615 = vmatpush.bf16.msra.mxu0 %v2098
  %2616 = vmatpush.bf16.msra.mxu0 %v2094
  %2617 = vmatpush.bf16.msra.mxu0 %v2090
  %2618 = vmatpush.bf16.msra.mxu0 %v2086
  %2619 = vmatpush.bf16.msra.mxu0 %v2082
  %2620 = vmatpush.bf16.msra.mxu0 %v2078
  %2621 = vmatpush.bf16.msra.mxu0 %v2074
  %2622 = vmatpush.bf16.msra.mxu0 %v2070
  %2623 = vmatmul.bf16.gmra.mxu0 %v1123
  %v2624 = vpop.f32.mrf.mxu0
  %v2625 = vadd.f32 %v2606, %v2624
  %v2626 = vpop.f32.mrf.mxu0
  %v2627 = vadd.f32 %v2608, %v2626
  %2628 = vmatmul.bf16.gmra.mxu0 %v1129
  %v2629 = vpop.f32.mrf.mxu0
  %v2630 = vadd.f32 %v2611, %v2629
  %v2631 = vpop.f32.mrf.mxu0
  %v2632 = vadd.f32 %v2613, %v2631
  %2633 = vdwg.mxu0
  %2634 = vmatpush.bf16.msra.mxu0 %v1939
  %2635 = vmatpush.bf16.msra.mxu0 %v1935
  %2636 = vmatpush.bf16.msra.mxu0 %v1931
  %2637 = vmatpush.bf16.msra.mxu0 %v1927
  %2638 = vmatpush.bf16.msra.mxu0 %v1923
  %2639 = vmatpush.bf16.msra.mxu0 %v1919
  %2640 = vmatpush.bf16.msra.mxu0 %v1915
  %2641 = vmatpush.bf16.msra.mxu0 %v1911
  %2642 = vmatmul.bf16.gmra.mxu0 %v1118
  %v2643 = vpop.f32.mrf.mxu0
  %v2644 = vadd.f32 %v1327, %v2643
  %v2645 = vpop.f32.mrf.mxu0
  %v2646 = vadd.f32 %v1327, %v2645
  %2647 = vmatmul.bf16.gmra.mxu0 %v1124
  %v2648 = vpop.f32.mrf.mxu0
  %v2649 = vadd.f32 %v1327, %v2648
  %v2650 = vpop.f32.mrf.mxu0
  %v2651 = vadd.f32 %v1327, %v2650
  %2652 = vdwg.mxu0
  %2653 = vmatpush.bf16.msra.mxu0 %v1971
  %2654 = vmatpush.bf16.msra.mxu0 %v1967
  %2655 = vmatpush.bf16.msra.mxu0 %v1963
  %2656 = vmatpush.bf16.msra.mxu0 %v1959
  %2657 = vmatpush.bf16.msra.mxu0 %v1955
  %2658 = vmatpush.bf16.msra.mxu0 %v1951
  %2659 = vmatpush.bf16.msra.mxu0 %v1947
  %2660 = vmatpush.bf16.msra.mxu0 %v1943
  %2661 = vmatmul.bf16.gmra.mxu0 %v1119
  %v2662 = vpop.f32.mrf.mxu0
  %v2663 = vadd.f32 %v2644, %v2662
  %v2664 = vpop.f32.mrf.mxu0
  %v2665 = vadd.f32 %v2646, %v2664
  %2666 = vmatmul.bf16.gmra.mxu0 %v1125
  %v2667 = vpop.f32.mrf.mxu0
  %v2668 = vadd.f32 %v2649, %v2667
  %v2669 = vpop.f32.mrf.mxu0
  %v2670 = vadd.f32 %v2651, %v2669
  %2671 = vdwg.mxu0
  %2672 = vmatpush.bf16.msra.mxu0 %v2003
  %2673 = vmatpush.bf16.msra.mxu0 %v1999
  %2674 = vmatpush.bf16.msra.mxu0 %v1995
  %2675 = vmatpush.bf16.msra.mxu0 %v1991
  %2676 = vmatpush.bf16.msra.mxu0 %v1987
  %2677 = vmatpush.bf16.msra.mxu0 %v1983
  %2678 = vmatpush.bf16.msra.mxu0 %v1979
  %2679 = vmatpush.bf16.msra.mxu0 %v1975
  %2680 = vmatmul.bf16.gmra.mxu0 %v1120
  %v2681 = vpop.f32.mrf.mxu0
  %v2682 = vadd.f32 %v2663, %v2681
  %v2683 = vpop.f32.mrf.mxu0
  %v2684 = vadd.f32 %v2665, %v2683
  %2685 = vmatmul.bf16.gmra.mxu0 %v1126
  %v2686 = vpop.f32.mrf.mxu0
  %v2687 = vadd.f32 %v2668, %v2686
  %v2688 = vpop.f32.mrf.mxu0
  %v2689 = vadd.f32 %v2670, %v2688
  %2690 = vdwg.mxu0
  %2691 = vmatpush.bf16.msra.mxu0 %v2035
  %2692 = vmatpush.bf16.msra.mxu0 %v2031
  %2693 = vmatpush.bf16.msra.mxu0 %v2027
  %2694 = vmatpush.bf16.msra.mxu0 %v2023
  %2695 = vmatpush.bf16.msra.mxu0 %v2019
  %2696 = vmatpush.bf16.msra.mxu0 %v2015
  %2697 = vmatpush.bf16.msra.mxu0 %v2011
  %2698 = vmatpush.bf16.msra.mxu0 %v2007
  %2699 = vmatmul.bf16.gmra.mxu0 %v1121
  %v2700 = vpop.f32.mrf.mxu0
  %v2701 = vadd.f32 %v2682, %v2700
  %v2702 = vpop.f32.mrf.mxu0
  %v2703 = vadd.f32 %v2684, %v2702
  %2704 = vmatmul.bf16.gmra.mxu0 %v1127
  %v2705 = vpop.f32.mrf.mxu0
  %v2706 = vadd.f32 %v2687, %v2705
  %v2707 = vpop.f32.mrf.mxu0
  %v2708 = vadd.f32 %v2689, %v2707
  %2709 = vdwg.mxu0
  %2710 = vmatpush.bf16.msra.mxu0 %v2067
  %2711 = vmatpush.bf16.msra.mxu0 %v2063
  %2712 = vmatpush.bf16.msra.mxu0 %v2059
  %2713 = vmatpush.bf16.msra.mxu0 %v2055
  %2714 = vmatpush.bf16.msra.mxu0 %v2051
  %2715 = vmatpush.bf16.msra.mxu0 %v2047
  %2716 = vmatpush.bf16.msra.mxu0 %v2043
  %2717 = vmatpush.bf16.msra.mxu0 %v2039
  %2718 = vmatmul.bf16.gmra.mxu0 %v1122
  %v2719 = vpop.f32.mrf.mxu0
  %v2720 = vadd.f32 %v2701, %v2719
  %v2721 = vpop.f32.mrf.mxu0
  %v2722 = vadd.f32 %v2703, %v2721
  %2723 = vmatmul.bf16.gmra.mxu0 %v1128
  %v2724 = vpop.f32.mrf.mxu0
  %v2725 = vadd.f32 %v2706, %v2724
  %v2726 = vpop.f32.mrf.mxu0
  %v2727 = vadd.f32 %v2708, %v2726
  %2728 = vdwg.mxu0
  %2729 = vmatpush.bf16.msra.mxu0 %v2099
  %2730 = vmatpush.bf16.msra.mxu0 %v2095
  %2731 = vmatpush.bf16.msra.mxu0 %v2091
  %2732 = vmatpush.bf16.msra.mxu0 %v2087
  %2733 = vmatpush.bf16.msra.mxu0 %v2083
  %2734 = vmatpush.bf16.msra.mxu0 %v2079
  %2735 = vmatpush.bf16.msra.mxu0 %v2075
  %2736 = vmatpush.bf16.msra.mxu0 %v2071
  %2737 = vmatmul.bf16.gmra.mxu0 %v1123
  %v2738 = vpop.f32.mrf.mxu0
  %v2739 = vadd.f32 %v2720, %v2738
  %v2740 = vpop.f32.mrf.mxu0
  %v2741 = vadd.f32 %v2722, %v2740
  %2742 = vmatmul.bf16.gmra.mxu0 %v1129
  %v2743 = vpop.f32.mrf.mxu0
  %v2744 = vadd.f32 %v2725, %v2743
  %v2745 = vpop.f32.mrf.mxu0
  %v2746 = vadd.f32 %v2727, %v2745
  %2747 = vdwg.mxu0
  %v2748 = vmax.f32 %v2397, 0.0
  %v2749 = vmax.f32 %v2511, 0.0
  %v2750 = vmax.f32 %v2625, 0.0
  %v2751 = vmax.f32 %v2739, 0.0
  %v2752 = vmax.f32 %v2399, 0.0
  %v2753 = vmax.f32 %v2513, 0.0
  %v2754 = vmax.f32 %v2627, 0.0
  %v2755 = vmax.f32 %v2741, 0.0
  %v2756 = vmax.f32 %v2402, 0.0
  %v2757 = vmax.f32 %v2516, 0.0
  %v2758 = vmax.f32 %v2630, 0.0
  %v2759 = vmax.f32 %v2744, 0.0
  %v2760 = vmax.f32 %v2404, 0.0
  %v2761 = vmax.f32 %v2518, 0.0
  %v2762 = vmax.f32 %v2632, 0.0
  %v2763 = vmax.f32 %v2746, 0.0
  %v2764 = vmax.f32 %v2748, %v2749
  %v2765 = vmax.f32 %v2752, %v2753
  %v2766 = vmax.f32 %v2756, %v2757
  %v2767 = vmax.f32 %v2760, %v2761
  %v2768 = vmax.f32 %v2750, %v2751
  %v2769 = vmax.f32 %v2754, %v2755
  %v2770 = vmax.f32 %v2758, %v2759
  %v2771 = vmax.f32 %v2762, %v2763
  %v2772 = vmax.f32 %v2764, %v2768
  %v2773 = vmax.f32 %v2765, %v2769
  %v2774 = vmax.f32 %v2766, %v2770
  %v2775 = vmax.f32 %v2767, %v2771
  %v2777 = vrot.slane %v2772, 1
  %v2779 = vrot.slane %v2772, 2
  %v2781 = vrot.slane %v2772, 3
  %v2783 = vrot.slane %v2772, 4
  %v2785 = vrot.slane %v2772, 5
  %v2787 = vrot.slane %v2772, 6
  %v2789 = vrot.slane %v2772, 7
  %v2792 = vrot.slane %v2773, 1
  %v2794 = vrot.slane %v2773, 2
  %v2796 = vrot.slane %v2773, 3
  %v2798 = vrot.slane %v2773, 4
  %v2800 = vrot.slane %v2773, 5
  %v2802 = vrot.slane %v2773, 6
  %v2804 = vrot.slane %v2773, 7
  %v2807 = vrot.slane %v2774, 1
  %v2809 = vrot.slane %v2774, 2
  %v2811 = vrot.slane %v2774, 3
  %v2813 = vrot.slane %v2774, 4
  %v2815 = vrot.slane %v2774, 5
  %v2817 = vrot.slane %v2774, 6
  %v2819 = vrot.slane %v2774, 7
  %v2822 = vrot.slane %v2775, 1
  %v2824 = vrot.slane %v2775, 2
  %v2826 = vrot.slane %v2775, 3
  %v2828 = vrot.slane %v2775, 4
  %s2830 = scalar_lea.vmem %s0, 256
  %v2831 = vld [vmem:[%s2830] sm:$0xff]
  %v2832 = vld [vmem:[%s2830 + $0x8] sm:$0xff]
  %v2833 = vld [vmem:[%s2830 + $0x10] sm:$0xff]
  %v2834 = vld [vmem:[%s2830 + $0x18] sm:$0xff]
  %v2835 = vld [vmem:[%s2830 + $0x20] sm:$0xff]
  %v2836 = vld [vmem:[%s2830 + $0x28] sm:$0xff]
  %v2837 = vld [vmem:[%s2830 + $0x30] sm:$0xff]
  %v2838 = vld [vmem:[%s2830 + $0x38] sm:$0xff]
  %v2839 = vld [vmem:[%s2830 + $0x40] sm:$0xff]
  %v2840 = vld [vmem:[%s2830 + $0x48] sm:$0xff]
  %v2841 = vld [vmem:[%s2830 + $0x50] sm:$0xff]
  %v2842 = vld [vmem:[%s2830 + $0x58] sm:$0xff]
  %v2843 = vld [vmem:[%s2830 + $0x60] sm:$0xff]
  %v2844 = vld [vmem:[%s2830 + $0x68] sm:$0xff]
  %v2845 = vld [vmem:[%s2830 + $0x70] sm:$0xff]
  %v2846 = vld [vmem:[%s2830 + $0x78] sm:$0xff]
  %v2847 = vld [vmem:[%s2830 + $0x80] sm:$0xff]
  %v2848 = vld [vmem:[%s2830 + $0x88] sm:$0xff]
  %v2849 = vld [vmem:[%s2830 + $0x90] sm:$0xff]
  %v2850 = vld [vmem:[%s2830 + $0x98] sm:$0xff]
  %v2851 = vld [vmem:[%s2830 + $0xa0] sm:$0xff]
  %v2852 = vld [vmem:[%s2830 + $0xa8] sm:$0xff]
  %v2853 = vld [vmem:[%s2830 + $0xb0] sm:$0xff]
  %v2854 = vld [vmem:[%s2830 + $0xb8] sm:$0xff]
  %v2855 = vld [vmem:[%s2830 + $0xc0] sm:$0xff]
  %v2856 = vld [vmem:[%s2830 + $0xc8] sm:$0xff]
  %v2857 = vld [vmem:[%s2830 + $0xd0] sm:$0xff]
  %v2858 = vld [vmem:[%s2830 + $0xd8] sm:$0xff]
  %v2859 = vld [vmem:[%s2830 + $0xe0] sm:$0xff]
  %v2860 = vld [vmem:[%s2830 + $0xe8] sm:$0xff]
  %v2861 = vld [vmem:[%s2830 + $0xf0] sm:$0xff]
  %v2862 = vld [vmem:[%s2830 + $0xf8] sm:$0xff]
  %v2895 = vunpack.c.l.b16 %v2831
  %v2896 = vunpack.c.h.b16 %v2831
  %v2897 = vunpack.c.l.b16 %v2832
  %v2898 = vunpack.c.h.b16 %v2832
  %v2899 = vunpack.c.l.b16 %v2833
  %v2900 = vunpack.c.h.b16 %v2833
  %v2901 = vunpack.c.l.b16 %v2834
  %v2902 = vunpack.c.h.b16 %v2834
  %v2903 = vunpack.c.l.b16 %v2835
  %v2904 = vunpack.c.h.b16 %v2835
  %v2905 = vunpack.c.l.b16 %v2836
  %v2906 = vunpack.c.h.b16 %v2836
  %v2907 = vunpack.c.l.b16 %v2837
  %v2908 = vunpack.c.h.b16 %v2837
  %v2909 = vunpack.c.l.b16 %v2838
  %v2910 = vunpack.c.h.b16 %v2838
  %v2911 = vunpack.c.l.b16 %v2839
  %v2912 = vunpack.c.h.b16 %v2839
  %v2913 = vunpack.c.l.b16 %v2840
  %v2914 = vunpack.c.h.b16 %v2840
  %v2915 = vunpack.c.l.b16 %v2841
  %v2916 = vunpack.c.h.b16 %v2841
  %v2917 = vunpack.c.l.b16 %v2842
  %v2918 = vunpack.c.h.b16 %v2842
  %v2919 = vunpack.c.l.b16 %v2843
  %v2920 = vunpack.c.h.b16 %v2843
  %v2921 = vunpack.c.l.b16 %v2844
  %v2922 = vunpack.c.h.b16 %v2844
  %v2923 = vunpack.c.l.b16 %v2845
  %v2924 = vunpack.c.h.b16 %v2845
  %v2925 = vunpack.c.l.b16 %v2846
  %v2926 = vunpack.c.h.b16 %v2846
  %v2927 = vunpack.c.l.b16 %v2847
  %v2928 = vunpack.c.h.b16 %v2847
  %v2929 = vunpack.c.l.b16 %v2848
  %v2930 = vunpack.c.h.b16 %v2848
  %v2931 = vunpack.c.l.b16 %v2849
  %v2932 = vunpack.c.h.b16 %v2849
  %v2933 = vunpack.c.l.b16 %v2850
  %v2934 = vunpack.c.h.b16 %v2850
  %v2935 = vunpack.c.l.b16 %v2851
  %v2936 = vunpack.c.h.b16 %v2851
  %v2937 = vunpack.c.l.b16 %v2852
  %v2938 = vunpack.c.h.b16 %v2852
  %v2939 = vunpack.c.l.b16 %v2853
  %v2940 = vunpack.c.h.b16 %v2853
  %v2941 = vunpack.c.l.b16 %v2854
  %v2942 = vunpack.c.h.b16 %v2854
  %v2943 = vunpack.c.l.b16 %v2855
  %v2944 = vunpack.c.h.b16 %v2855
  %v2945 = vunpack.c.l.b16 %v2856
  %v2946 = vunpack.c.h.b16 %v2856
  %v2947 = vunpack.c.l.b16 %v2857
  %v2948 = vunpack.c.h.b16 %v2857
  %v2949 = vunpack.c.l.b16 %v2858
  %v2950 = vunpack.c.h.b16 %v2858
  %v2951 = vunpack.c.l.b16 %v2859
  %v2952 = vunpack.c.h.b16 %v2859
  %v2953 = vunpack.c.l.b16 %v2860
  %v2954 = vunpack.c.h.b16 %v2860
  %v2955 = vunpack.c.l.b16 %v2861
  %v2956 = vunpack.c.h.b16 %v2861
  %v2957 = vunpack.c.l.b16 %v2862
  %v2958 = vunpack.c.h.b16 %v2862
  %v2959 = vpack.c.b16 %v2899, %v2895
  %v2960 = vpack.c.b16 %v2900, %v2896
  %v2961 = vpack.c.b16 %v2901, %v2897
  %v2962 = vpack.c.b16 %v2902, %v2898
  %v2963 = vpack.c.b16 %v2907, %v2903
  %v2964 = vpack.c.b16 %v2908, %v2904
  %v2965 = vpack.c.b16 %v2909, %v2905
  %v2966 = vpack.c.b16 %v2910, %v2906
  %v2967 = vpack.c.b16 %v2915, %v2911
  %v2968 = vpack.c.b16 %v2916, %v2912
  %v2969 = vpack.c.b16 %v2917, %v2913
  %v2970 = vpack.c.b16 %v2918, %v2914
  %v2971 = vpack.c.b16 %v2923, %v2919
  %v2972 = vpack.c.b16 %v2924, %v2920
  %v2973 = vpack.c.b16 %v2925, %v2921
  %v2974 = vpack.c.b16 %v2926, %v2922
  %v2975 = vpack.c.b16 %v2931, %v2927
  %v2976 = vpack.c.b16 %v2932, %v2928
  %v2977 = vpack.c.b16 %v2933, %v2929
  %v2978 = vpack.c.b16 %v2934, %v2930
  %v2979 = vpack.c.b16 %v2939, %v2935
  %v2980 = vpack.c.b16 %v2940, %v2936
  %v2981 = vpack.c.b16 %v2941, %v2937
  %v2982 = vpack.c.b16 %v2942, %v2938
  %v2983 = vpack.c.b16 %v2947, %v2943
  %v2984 = vpack.c.b16 %v2948, %v2944
  %v2985 = vpack.c.b16 %v2949, %v2945
  %v2986 = vpack.c.b16 %v2950, %v2946
  %v2987 = vpack.c.b16 %v2955, %v2951
  %v2988 = vpack.c.b16 %v2956, %v2952
  %v2989 = vpack.c.b16 %v2957, %v2953
  %v2990 = vpack.c.b16 %v2958, %v2954
  %v3016 = vsel %vm591, %v2962, 0
  %v3019 = vsel %vm591, %v2966, 0
  %v3022 = vsel %vm591, %v2970, 0
  %v3025 = vsel %vm591, %v2974, 0
  %v3028 = vsel %vm591, %v2978, 0
  %v3031 = vsel %vm591, %v2982, 0
  %v3034 = vsel %vm591, %v2986, 0
  %v3037 = vsel %vm591, %v2990, 0
  %3039 = vmatpush.bf16.msra.mxu0 %v485
  %3040 = vmatpush.bf16.msra.mxu0 %v483
  %3041 = vmatpush.bf16.msra.mxu0 %v481
  %3042 = vmatpush.bf16.msra.mxu0 %v479
  %3043 = vmatpush.bf16.msra.mxu0 %v477
  %3044 = vmatpush.bf16.msra.mxu0 %v475
  %3045 = vmatpush.bf16.msra.mxu0 %v473
  %3046 = vmatpush.bf16.msra.mxu0 %v471
  %3047 = vmatmul.bf16.gmra.mxu0 %v2959
  %v3048 = vpop.f32.mrf.mxu0
  %v3049 = vadd.f32 %v135, %v3048
  %v3050 = vpop.f32.mrf.mxu0
  %v3051 = vadd.f32 %v135, %v3050
  %3052 = vmatmul.bf16.gmra.mxu0 %v2963
  %v3053 = vpop.f32.mrf.mxu0
  %v3054 = vadd.f32 %v135, %v3053
  %v3055 = vpop.f32.mrf.mxu0
  %v3056 = vadd.f32 %v135, %v3055
  %3057 = vmatmul.bf16.gmra.mxu0 %v2967
  %v3058 = vpop.f32.mrf.mxu0
  %v3059 = vadd.f32 %v135, %v3058
  %v3060 = vpop.f32.mrf.mxu0
  %v3061 = vadd.f32 %v135, %v3060
  %3062 = vmatmul.bf16.gmra.mxu0 %v2971
  %v3063 = vpop.f32.mrf.mxu0
  %v3064 = vadd.f32 %v135, %v3063
  %v3065 = vpop.f32.mrf.mxu0
  %v3066 = vadd.f32 %v135, %v3065
  %3067 = vmatmul.bf16.gmra.mxu0 %v2975
  %v3068 = vpop.f32.mrf.mxu0
  %v3069 = vadd.f32 %v135, %v3068
  %v3070 = vpop.f32.mrf.mxu0
  %v3071 = vadd.f32 %v135, %v3070
  %3072 = vmatmul.bf16.gmra.mxu0 %v2979
  %v3073 = vpop.f32.mrf.mxu0
  %v3074 = vadd.f32 %v135, %v3073
  %v3075 = vpop.f32.mrf.mxu0
  %v3076 = vadd.f32 %v135, %v3075
  %3077 = vmatmul.bf16.gmra.mxu0 %v2983
  %v3078 = vpop.f32.mrf.mxu0
  %v3079 = vadd.f32 %v135, %v3078
  %v3080 = vpop.f32.mrf.mxu0
  %v3081 = vadd.f32 %v135, %v3080
  %3082 = vmatmul.bf16.gmra.mxu0 %v2987
  %v3083 = vpop.f32.mrf.mxu0
  %v3084 = vadd.f32 %v135, %v3083
  %v3085 = vpop.f32.mrf.mxu0
  %v3086 = vadd.f32 %v135, %v3085
  %3087 = vdwg.mxu0
  %3088 = vmatpush.bf16.msra.mxu0 %v501
  %3089 = vmatpush.bf16.msra.mxu0 %v499
  %3090 = vmatpush.bf16.msra.mxu0 %v497
  %3091 = vmatpush.bf16.msra.mxu0 %v495
  %3092 = vmatpush.bf16.msra.mxu0 %v493
  %3093 = vmatpush.bf16.msra.mxu0 %v491
  %3094 = vmatpush.bf16.msra.mxu0 %v489
  %3095 = vmatpush.bf16.msra.mxu0 %v487
  %3096 = vmatmul.bf16.gmra.mxu0 %v2960
  %v3097 = vpop.f32.mrf.mxu0
  %v3098 = vadd.f32 %v3049, %v3097
  %v3099 = vpop.f32.mrf.mxu0
  %v3100 = vadd.f32 %v3051, %v3099
  %3101 = vmatmul.bf16.gmra.mxu0 %v2964
  %v3102 = vpop.f32.mrf.mxu0
  %v3103 = vadd.f32 %v3054, %v3102
  %v3104 = vpop.f32.mrf.mxu0
  %v3105 = vadd.f32 %v3056, %v3104
  %3106 = vmatmul.bf16.gmra.mxu0 %v2968
  %v3107 = vpop.f32.mrf.mxu0
  %v3108 = vadd.f32 %v3059, %v3107
  %v3109 = vpop.f32.mrf.mxu0
  %v3110 = vadd.f32 %v3061, %v3109
  %3111 = vmatmul.bf16.gmra.mxu0 %v2972
  %v3112 = vpop.f32.mrf.mxu0
  %v3113 = vadd.f32 %v3064, %v3112
  %v3114 = vpop.f32.mrf.mxu0
  %v3115 = vadd.f32 %v3066, %v3114
  %3116 = vmatmul.bf16.gmra.mxu0 %v2976
  %v3117 = vpop.f32.mrf.mxu0
  %v3118 = vadd.f32 %v3069, %v3117
  %v3119 = vpop.f32.mrf.mxu0
  %v3120 = vadd.f32 %v3071, %v3119
  %3121 = vmatmul.bf16.gmra.mxu0 %v2980
  %v3122 = vpop.f32.mrf.mxu0
  %v3123 = vadd.f32 %v3074, %v3122
  %v3124 = vpop.f32.mrf.mxu0
  %v3125 = vadd.f32 %v3076, %v3124
  %3126 = vmatmul.bf16.gmra.mxu0 %v2984
  %v3127 = vpop.f32.mrf.mxu0
  %v3128 = vadd.f32 %v3079, %v3127
  %v3129 = vpop.f32.mrf.mxu0
  %v3130 = vadd.f32 %v3081, %v3129
  %3131 = vmatmul.bf16.gmra.mxu0 %v2988
  %v3132 = vpop.f32.mrf.mxu0
  %v3133 = vadd.f32 %v3084, %v3132
  %v3134 = vpop.f32.mrf.mxu0
  %v3135 = vadd.f32 %v3086, %v3134
  %3136 = vdwg.mxu0
  %3137 = vmatpush.bf16.msra.mxu0 %v517
  %3138 = vmatpush.bf16.msra.mxu0 %v515
  %3139 = vmatpush.bf16.msra.mxu0 %v513
  %3140 = vmatpush.bf16.msra.mxu0 %v511
  %3141 = vmatpush.bf16.msra.mxu0 %v509
  %3142 = vmatpush.bf16.msra.mxu0 %v507
  %3143 = vmatpush.bf16.msra.mxu0 %v505
  %3144 = vmatpush.bf16.msra.mxu0 %v503
  %3145 = vmatmul.bf16.gmra.mxu0 %v2961
  %v3146 = vpop.f32.mrf.mxu0
  %v3147 = vadd.f32 %v3098, %v3146
  %v3148 = vpop.f32.mrf.mxu0
  %v3149 = vadd.f32 %v3100, %v3148
  %3150 = vmatmul.bf16.gmra.mxu0 %v2965
  %v3151 = vpop.f32.mrf.mxu0
  %v3152 = vadd.f32 %v3103, %v3151
  %v3153 = vpop.f32.mrf.mxu0
  %v3154 = vadd.f32 %v3105, %v3153
  %3155 = vmatmul.bf16.gmra.mxu0 %v2969
  %v3156 = vpop.f32.mrf.mxu0
  %v3157 = vadd.f32 %v3108, %v3156
  %v3158 = vpop.f32.mrf.mxu0
  %v3159 = vadd.f32 %v3110, %v3158
  %3160 = vmatmul.bf16.gmra.mxu0 %v2973
  %v3161 = vpop.f32.mrf.mxu0
  %v3162 = vadd.f32 %v3113, %v3161
  %v3163 = vpop.f32.mrf.mxu0
  %v3164 = vadd.f32 %v3115, %v3163
  %3165 = vmatmul.bf16.gmra.mxu0 %v2977
  %v3166 = vpop.f32.mrf.mxu0
  %v3167 = vadd.f32 %v3118, %v3166
  %v3168 = vpop.f32.mrf.mxu0
  %v3169 = vadd.f32 %v3120, %v3168
  %3170 = vmatmul.bf16.gmra.mxu0 %v2981
  %v3171 = vpop.f32.mrf.mxu0
  %v3172 = vadd.f32 %v3123, %v3171
  %v3173 = vpop.f32.mrf.mxu0
  %v3174 = vadd.f32 %v3125, %v3173
  %3175 = vmatmul.bf16.gmra.mxu0 %v2985
  %v3176 = vpop.f32.mrf.mxu0
  %v3177 = vadd.f32 %v3128, %v3176
  %v3178 = vpop.f32.mrf.mxu0
  %v3179 = vadd.f32 %v3130, %v3178
  %3180 = vmatmul.bf16.gmra.mxu0 %v2989
  %v3181 = vpop.f32.mrf.mxu0
  %v3182 = vadd.f32 %v3133, %v3181
  %v3183 = vpop.f32.mrf.mxu0
  %v3184 = vadd.f32 %v3135, %v3183
  %3185 = vdwg.mxu0
  %3186 = vmatpush.bf16.msra.mxu0 0
  %3187 = vmatpush.bf16.msra.mxu0 0
  %3188 = vmatpush.bf16.msra.mxu0 %v529
  %3189 = vmatpush.bf16.msra.mxu0 %v527
  %3190 = vmatpush.bf16.msra.mxu0 %v525
  %3191 = vmatpush.bf16.msra.mxu0 %v523
  %3192 = vmatpush.bf16.msra.mxu0 %v521
  %3193 = vmatpush.bf16.msra.mxu0 %v519
  %3194 = vmatmul.bf16.gmra.mxu0 %v3016
  %v3195 = vpop.f32.mrf.mxu0
  %v3196 = vadd.f32 %v3147, %v3195
  %v3197 = vpop.f32.mrf.mxu0
  %v3198 = vadd.f32 %v3149, %v3197
  %3199 = vmatmul.bf16.gmra.mxu0 %v3019
  %v3200 = vpop.f32.mrf.mxu0
  %v3201 = vadd.f32 %v3152, %v3200
  %v3202 = vpop.f32.mrf.mxu0
  %v3203 = vadd.f32 %v3154, %v3202
  %3204 = vmatmul.bf16.gmra.mxu0 %v3022
  %v3205 = vpop.f32.mrf.mxu0
  %v3206 = vadd.f32 %v3157, %v3205
  %v3207 = vpop.f32.mrf.mxu0
  %v3208 = vadd.f32 %v3159, %v3207
  %3209 = vmatmul.bf16.gmra.mxu0 %v3025
  %v3210 = vpop.f32.mrf.mxu0
  %v3211 = vadd.f32 %v3162, %v3210
  %v3212 = vpop.f32.mrf.mxu0
  %v3213 = vadd.f32 %v3164, %v3212
  %3214 = vmatmul.bf16.gmra.mxu0 %v3028
  %v3215 = vpop.f32.mrf.mxu0
  %v3216 = vadd.f32 %v3167, %v3215
  %v3217 = vpop.f32.mrf.mxu0
  %v3218 = vadd.f32 %v3169, %v3217
  %3219 = vmatmul.bf16.gmra.mxu0 %v3031
  %v3220 = vpop.f32.mrf.mxu0
  %v3221 = vadd.f32 %v3172, %v3220
  %v3222 = vpop.f32.mrf.mxu0
  %v3223 = vadd.f32 %v3174, %v3222
  %3224 = vmatmul.bf16.gmra.mxu0 %v3034
  %v3225 = vpop.f32.mrf.mxu0
  %v3226 = vadd.f32 %v3177, %v3225
  %v3227 = vpop.f32.mrf.mxu0
  %v3228 = vadd.f32 %v3179, %v3227
  %3229 = vmatmul.bf16.gmra.mxu0 %v3037
  %v3230 = vpop.f32.mrf.mxu0
  %v3231 = vadd.f32 %v3182, %v3230
  %v3232 = vpop.f32.mrf.mxu0
  %v3233 = vadd.f32 %v3184, %v3232
  %3234 = vdwg.mxu0
  %3235 = vmatpush.bf16.msra.mxu0 %v486
  %3236 = vmatpush.bf16.msra.mxu0 %v484
  %3237 = vmatpush.bf16.msra.mxu0 %v482
  %3238 = vmatpush.bf16.msra.mxu0 %v480
  %3239 = vmatpush.bf16.msra.mxu0 %v478
  %3240 = vmatpush.bf16.msra.mxu0 %v476
  %3241 = vmatpush.bf16.msra.mxu0 %v474
  %3242 = vmatpush.bf16.msra.mxu0 %v472
  %3243 = vmatmul.bf16.gmra.mxu0 %v2959
  %v3244 = vpop.f32.mrf.mxu0
  %v3245 = vadd.f32 %v136, %v3244
  %v3246 = vpop.f32.mrf.mxu0
  %v3247 = vadd.f32 %v136, %v3246
  %3248 = vmatmul.bf16.gmra.mxu0 %v2963
  %v3249 = vpop.f32.mrf.mxu0
  %v3250 = vadd.f32 %v136, %v3249
  %v3251 = vpop.f32.mrf.mxu0
  %v3252 = vadd.f32 %v136, %v3251
  %3253 = vmatmul.bf16.gmra.mxu0 %v2967
  %v3254 = vpop.f32.mrf.mxu0
  %v3255 = vadd.f32 %v136, %v3254
  %v3256 = vpop.f32.mrf.mxu0
  %v3257 = vadd.f32 %v136, %v3256
  %3258 = vmatmul.bf16.gmra.mxu0 %v2971
  %v3259 = vpop.f32.mrf.mxu0
  %v3260 = vadd.f32 %v136, %v3259
  %v3261 = vpop.f32.mrf.mxu0
  %v3262 = vadd.f32 %v136, %v3261
  %3263 = vmatmul.bf16.gmra.mxu0 %v2975
  %v3264 = vpop.f32.mrf.mxu0
  %v3265 = vadd.f32 %v136, %v3264
  %v3266 = vpop.f32.mrf.mxu0
  %v3267 = vadd.f32 %v136, %v3266
  %3268 = vmatmul.bf16.gmra.mxu0 %v2979
  %v3269 = vpop.f32.mrf.mxu0
  %v3270 = vadd.f32 %v136, %v3269
  %v3271 = vpop.f32.mrf.mxu0
  %v3272 = vadd.f32 %v136, %v3271
  %3273 = vmatmul.bf16.gmra.mxu0 %v2983
  %v3274 = vpop.f32.mrf.mxu0
  %v3275 = vadd.f32 %v136, %v3274
  %v3276 = vpop.f32.mrf.mxu0
  %v3277 = vadd.f32 %v136, %v3276
  %3278 = vmatmul.bf16.gmra.mxu0 %v2987
  %v3279 = vpop.f32.mrf.mxu0
  %v3280 = vadd.f32 %v136, %v3279
  %v3281 = vpop.f32.mrf.mxu0
  %v3282 = vadd.f32 %v136, %v3281
  %3283 = vdwg.mxu0
  %3284 = vmatpush.bf16.msra.mxu0 %v502
  %3285 = vmatpush.bf16.msra.mxu0 %v500
  %3286 = vmatpush.bf16.msra.mxu0 %v498
  %3287 = vmatpush.bf16.msra.mxu0 %v496
  %3288 = vmatpush.bf16.msra.mxu0 %v494
  %3289 = vmatpush.bf16.msra.mxu0 %v492
  %3290 = vmatpush.bf16.msra.mxu0 %v490
  %3291 = vmatpush.bf16.msra.mxu0 %v488
  %3292 = vmatmul.bf16.gmra.mxu0 %v2960
  %v3293 = vpop.f32.mrf.mxu0
  %v3294 = vadd.f32 %v3245, %v3293
  %v3295 = vpop.f32.mrf.mxu0
  %v3296 = vadd.f32 %v3247, %v3295
  %3297 = vmatmul.bf16.gmra.mxu0 %v2964
  %v3298 = vpop.f32.mrf.mxu0
  %v3299 = vadd.f32 %v3250, %v3298
  %v3300 = vpop.f32.mrf.mxu0
  %v3301 = vadd.f32 %v3252, %v3300
  %3302 = vmatmul.bf16.gmra.mxu0 %v2968
  %v3303 = vpop.f32.mrf.mxu0
  %v3304 = vadd.f32 %v3255, %v3303
  %v3305 = vpop.f32.mrf.mxu0
  %v3306 = vadd.f32 %v3257, %v3305
  %3307 = vmatmul.bf16.gmra.mxu0 %v2972
  %v3308 = vpop.f32.mrf.mxu0
  %v3309 = vadd.f32 %v3260, %v3308
  %v3310 = vpop.f32.mrf.mxu0
  %v3311 = vadd.f32 %v3262, %v3310
  %3312 = vmatmul.bf16.gmra.mxu0 %v2976
  %v3313 = vpop.f32.mrf.mxu0
  %v3314 = vadd.f32 %v3265, %v3313
  %v3315 = vpop.f32.mrf.mxu0
  %v3316 = vadd.f32 %v3267, %v3315
  %3317 = vmatmul.bf16.gmra.mxu0 %v2980
  %v3318 = vpop.f32.mrf.mxu0
  %v3319 = vadd.f32 %v3270, %v3318
  %v3320 = vpop.f32.mrf.mxu0
  %v3321 = vadd.f32 %v3272, %v3320
  %3322 = vmatmul.bf16.gmra.mxu0 %v2984
  %v3323 = vpop.f32.mrf.mxu0
  %v3324 = vadd.f32 %v3275, %v3323
  %v3325 = vpop.f32.mrf.mxu0
  %v3326 = vadd.f32 %v3277, %v3325
  %3327 = vmatmul.bf16.gmra.mxu0 %v2988
  %v3328 = vpop.f32.mrf.mxu0
  %v3329 = vadd.f32 %v3280, %v3328
  %v3330 = vpop.f32.mrf.mxu0
  %v3331 = vadd.f32 %v3282, %v3330
  %3332 = vdwg.mxu0
  %3333 = vmatpush.bf16.msra.mxu0 %v518
  %3334 = vmatpush.bf16.msra.mxu0 %v516
  %3335 = vmatpush.bf16.msra.mxu0 %v514
  %3336 = vmatpush.bf16.msra.mxu0 %v512
  %3337 = vmatpush.bf16.msra.mxu0 %v510
  %3338 = vmatpush.bf16.msra.mxu0 %v508
  %3339 = vmatpush.bf16.msra.mxu0 %v506
  %3340 = vmatpush.bf16.msra.mxu0 %v504
  %3341 = vmatmul.bf16.gmra.mxu0 %v2961
  %v3342 = vpop.f32.mrf.mxu0
  %v3343 = vadd.f32 %v3294, %v3342
  %v3344 = vpop.f32.mrf.mxu0
  %v3345 = vadd.f32 %v3296, %v3344
  %3346 = vmatmul.bf16.gmra.mxu0 %v2965
  %v3347 = vpop.f32.mrf.mxu0
  %v3348 = vadd.f32 %v3299, %v3347
  %v3349 = vpop.f32.mrf.mxu0
  %v3350 = vadd.f32 %v3301, %v3349
  %3351 = vmatmul.bf16.gmra.mxu0 %v2969
  %v3352 = vpop.f32.mrf.mxu0
  %v3353 = vadd.f32 %v3304, %v3352
  %v3354 = vpop.f32.mrf.mxu0
  %v3355 = vadd.f32 %v3306, %v3354
  %3356 = vmatmul.bf16.gmra.mxu0 %v2973
  %v3357 = vpop.f32.mrf.mxu0
  %v3358 = vadd.f32 %v3309, %v3357
  %v3359 = vpop.f32.mrf.mxu0
  %v3360 = vadd.f32 %v3311, %v3359
  %3361 = vmatmul.bf16.gmra.mxu0 %v2977
  %v3362 = vpop.f32.mrf.mxu0
  %v3363 = vadd.f32 %v3314, %v3362
  %v3364 = vpop.f32.mrf.mxu0
  %v3365 = vadd.f32 %v3316, %v3364
  %3366 = vmatmul.bf16.gmra.mxu0 %v2981
  %v3367 = vpop.f32.mrf.mxu0
  %v3368 = vadd.f32 %v3319, %v3367
  %v3369 = vpop.f32.mrf.mxu0
  %v3370 = vadd.f32 %v3321, %v3369
  %3371 = vmatmul.bf16.gmra.mxu0 %v2985
  %v3372 = vpop.f32.mrf.mxu0
  %v3373 = vadd.f32 %v3324, %v3372
  %v3374 = vpop.f32.mrf.mxu0
  %v3375 = vadd.f32 %v3326, %v3374
  %3376 = vmatmul.bf16.gmra.mxu0 %v2989
  %v3377 = vpop.f32.mrf.mxu0
  %v3378 = vadd.f32 %v3329, %v3377
  %v3379 = vpop.f32.mrf.mxu0
  %v3380 = vadd.f32 %v3331, %v3379
  %3381 = vdwg.mxu0
  %3382 = vmatpush.bf16.msra.mxu0 0
  %3383 = vmatpush.bf16.msra.mxu0 0
  %3384 = vmatpush.bf16.msra.mxu0 %v530
  %3385 = vmatpush.bf16.msra.mxu0 %v528
  %3386 = vmatpush.bf16.msra.mxu0 %v526
  %3387 = vmatpush.bf16.msra.mxu0 %v524
  %3388 = vmatpush.bf16.msra.mxu0 %v522
  %3389 = vmatpush.bf16.msra.mxu0 %v520
  %3390 = vmatmul.bf16.gmra.mxu0 %v3016
  %v3391 = vpop.f32.mrf.mxu0
  %v3392 = vadd.f32 %v3343, %v3391
  %v3393 = vpop.f32.mrf.mxu0
  %v3394 = vadd.f32 %v3345, %v3393
  %3395 = vmatmul.bf16.gmra.mxu0 %v3019
  %v3396 = vpop.f32.mrf.mxu0
  %v3397 = vadd.f32 %v3348, %v3396
  %v3398 = vpop.f32.mrf.mxu0
  %v3399 = vadd.f32 %v3350, %v3398
  %3400 = vmatmul.bf16.gmra.mxu0 %v3022
  %v3401 = vpop.f32.mrf.mxu0
  %v3402 = vadd.f32 %v3353, %v3401
  %v3403 = vpop.f32.mrf.mxu0
  %v3404 = vadd.f32 %v3355, %v3403
  %3405 = vmatmul.bf16.gmra.mxu0 %v3025
  %v3406 = vpop.f32.mrf.mxu0
  %v3407 = vadd.f32 %v3358, %v3406
  %v3408 = vpop.f32.mrf.mxu0
  %v3409 = vadd.f32 %v3360, %v3408
  %3410 = vmatmul.bf16.gmra.mxu0 %v3028
  %v3411 = vpop.f32.mrf.mxu0
  %v3412 = vadd.f32 %v3363, %v3411
  %v3413 = vpop.f32.mrf.mxu0
  %v3414 = vadd.f32 %v3365, %v3413
  %3415 = vmatmul.bf16.gmra.mxu0 %v3031
  %v3416 = vpop.f32.mrf.mxu0
  %v3417 = vadd.f32 %v3368, %v3416
  %v3418 = vpop.f32.mrf.mxu0
  %v3419 = vadd.f32 %v3370, %v3418
  %3420 = vmatmul.bf16.gmra.mxu0 %v3034
  %v3421 = vpop.f32.mrf.mxu0
  %v3422 = vadd.f32 %v3373, %v3421
  %v3423 = vpop.f32.mrf.mxu0
  %v3424 = vadd.f32 %v3375, %v3423
  %3425 = vmatmul.bf16.gmra.mxu0 %v3037
  %v3426 = vpop.f32.mrf.mxu0
  %v3427 = vadd.f32 %v3378, %v3426
  %v3428 = vpop.f32.mrf.mxu0
  %v3429 = vadd.f32 %v3380, %v3428
  %3430 = vdwg.mxu0
  %v3431 = vmax.f32 %v3196, 0.0
  %v3432 = vmax.f32 %v3392, 0.0
  %v3433 = vmax.f32 %v3198, 0.0
  %v3434 = vmax.f32 %v3394, 0.0
  %v3435 = vmax.f32 %v3201, 0.0
  %v3436 = vmax.f32 %v3397, 0.0
  %v3437 = vmax.f32 %v3203, 0.0
  %v3438 = vmax.f32 %v3399, 0.0
  %v3439 = vmax.f32 %v3206, 0.0
  %v3440 = vmax.f32 %v3402, 0.0
  %v3441 = vmax.f32 %v3208, 0.0
  %v3442 = vmax.f32 %v3404, 0.0
  %v3443 = vmax.f32 %v3211, 0.0
  %v3444 = vmax.f32 %v3407, 0.0
  %v3445 = vmax.f32 %v3213, 0.0
  %v3446 = vmax.f32 %v3409, 0.0
  %v3447 = vmax.f32 %v3216, 0.0
  %v3448 = vmax.f32 %v3412, 0.0
  %v3449 = vmax.f32 %v3218, 0.0
  %v3450 = vmax.f32 %v3414, 0.0
  %v3451 = vmax.f32 %v3221, 0.0
  %v3452 = vmax.f32 %v3417, 0.0
  %v3453 = vmax.f32 %v3223, 0.0
  %v3454 = vmax.f32 %v3419, 0.0
  %v3455 = vmax.f32 %v3226, 0.0
  %v3456 = vmax.f32 %v3422, 0.0
  %v3457 = vmax.f32 %v3228, 0.0
  %v3458 = vmax.f32 %v3424, 0.0
  %v3459 = vmax.f32 %v3231, 0.0
  %v3460 = vmax.f32 %v3427, 0.0
  %v3461 = vmax.f32 %v3233, 0.0
  %v3462 = vmax.f32 %v3429, 0.0
  %v3463 = vmax.f32 %v3431, %v3432
  %v3464 = vmax.f32 %v3433, %v3434
  %v3465 = vmax.f32 %v3435, %v3436
  %v3466 = vmax.f32 %v3437, %v3438
  %v3467 = vmax.f32 %v3439, %v3440
  %v3468 = vmax.f32 %v3441, %v3442
  %v3469 = vmax.f32 %v3443, %v3444
  %v3470 = vmax.f32 %v3445, %v3446
  %v3471 = vmax.f32 %v3447, %v3448
  %v3472 = vmax.f32 %v3449, %v3450
  %v3473 = vmax.f32 %v3451, %v3452
  %v3474 = vmax.f32 %v3453, %v3454
  %v3475 = vmax.f32 %v3455, %v3456
  %v3476 = vmax.f32 %v3457, %v3458
  %v3477 = vmax.f32 %v3459, %v3460
  %v3478 = vmax.f32 %v3461, %v3462
  %v3479 = vmax.f32 %v3463, %v3467
  %v3480 = vmax.f32 %v3464, %v3468
  %v3481 = vmax.f32 %v3465, %v3469
  %v3482 = vmax.f32 %v3466, %v3470
  %v3483 = vmax.f32 %v3471, %v3475
  %v3484 = vmax.f32 %v3472, %v3476
  %v3485 = vmax.f32 %v3473, %v3477
  %v3486 = vmax.f32 %v3474, %v3478
  %v3491 = vrot.slane %v3479, 1
  %v3492 = vrot.slane %v3480, 1
  %v3493 = vsel %vm1068, %v3491, %v3492
  %v3494 = vrot.slane %v3481, 1
  %v3495 = vsel %vm1068, %v3492, %v3494
  %v3496 = vrot.slane %v3482, 1
  %v3497 = vsel %vm1068, %v3494, %v3496
  %v3506 = vrot.slane %v3483, 1
  %v3507 = vrot.slane %v3484, 1
  %v3508 = vsel %vm1068, %v3506, %v3507
  %v3509 = vrot.slane %v3485, 1
  %v3510 = vsel %vm1068, %v3507, %v3509
  %v3511 = vrot.slane %v3486, 1
  %v3512 = vsel %vm1068, %v3509, %v3511
  %v3517 = vrot.slane %v3479, 2
  %v3518 = vrot.slane %v3480, 2
  %v3519 = vsel %vm1095, %v3517, %v3518
  %v3520 = vrot.slane %v3481, 2
  %v3521 = vsel %vm1095, %v3518, %v3520
  %v3522 = vrot.slane %v3482, 2
  %v3523 = vsel %vm1095, %v3520, %v3522
  %v3528 = vrot.slane %v3483, 2
  %v3529 = vrot.slane %v3484, 2
  %v3530 = vsel %vm1095, %v3528, %v3529
  %v3531 = vrot.slane %v3485, 2
  %v3532 = vsel %vm1095, %v3529, %v3531
  %v3533 = vrot.slane %v3486, 2
  %v3534 = vsel %vm1095, %v3531, %v3533
  %v3539 = vpack.c.bf16 %v3480, %v3479
  %v3540 = vpack.c.bf16 %v3484, %v3483
  %v3541 = vpack.c.bf16 %v3495, %v3493
  %v3542 = vpack.c.bf16 %v3510, %v3508
  %v3543 = vpack.c.bf16 %v3521, %v3519
  %v3544 = vpack.c.bf16 %v3532, %v3530
  %v3545 = vpack.c.bf16 %v3482, %v3481
  %v3546 = vpack.c.bf16 %v3486, %v3485
  %v3547 = vpack.c.bf16 %v3496, %v3497
  %v3548 = vpack.c.bf16 %v3511, %v3512
  %v3549 = vpack.c.bf16 %v3522, %v3523
  %v3550 = vpack.c.bf16 %v3533, %v3534
  %3551 = vmatpush.bf16.msra.mxu0 %v1936
  %3552 = vmatpush.bf16.msra.mxu0 %v1932
  %3553 = vmatpush.bf16.msra.mxu0 %v1928
  %3554 = vmatpush.bf16.msra.mxu0 %v1924
  %3555 = vmatpush.bf16.msra.mxu0 %v1920
  %3556 = vmatpush.bf16.msra.mxu0 %v1916
  %3557 = vmatpush.bf16.msra.mxu0 %v1912
  %3558 = vmatpush.bf16.msra.mxu0 %v1908
  %3559 = vmatmul.bf16.gmra.mxu0 %v3539
  %v3560 = vpop.f32.mrf.mxu0
  %v3561 = vadd.f32 %v1324, %v3560
  %v3562 = vpop.f32.mrf.mxu0
  %v3563 = vadd.f32 %v1324, %v3562
  %3564 = vmatmul.bf16.gmra.mxu0 %v3545
  %v3565 = vpop.f32.mrf.mxu0
  %v3566 = vadd.f32 %v1324, %v3565
  %v3567 = vpop.f32.mrf.mxu0
  %v3568 = vadd.f32 %v1324, %v3567
  %3569 = vdwg.mxu0
  %3570 = vmatpush.bf16.msra.mxu0 %v1968
  %3571 = vmatpush.bf16.msra.mxu0 %v1964
  %3572 = vmatpush.bf16.msra.mxu0 %v1960
  %3573 = vmatpush.bf16.msra.mxu0 %v1956
  %3574 = vmatpush.bf16.msra.mxu0 %v1952
  %3575 = vmatpush.bf16.msra.mxu0 %v1948
  %3576 = vmatpush.bf16.msra.mxu0 %v1944
  %3577 = vmatpush.bf16.msra.mxu0 %v1940
  %3578 = vmatmul.bf16.gmra.mxu0 %v3540
  %v3579 = vpop.f32.mrf.mxu0
  %v3580 = vadd.f32 %v3561, %v3579
  %v3581 = vpop.f32.mrf.mxu0
  %v3582 = vadd.f32 %v3563, %v3581
  %3583 = vmatmul.bf16.gmra.mxu0 %v3546
  %v3584 = vpop.f32.mrf.mxu0
  %v3585 = vadd.f32 %v3566, %v3584
  %v3586 = vpop.f32.mrf.mxu0
  %v3587 = vadd.f32 %v3568, %v3586
  %3588 = vdwg.mxu0
  %3589 = vmatpush.bf16.msra.mxu0 %v2000
  %3590 = vmatpush.bf16.msra.mxu0 %v1996
  %3591 = vmatpush.bf16.msra.mxu0 %v1992
  %3592 = vmatpush.bf16.msra.mxu0 %v1988
  %3593 = vmatpush.bf16.msra.mxu0 %v1984
  %3594 = vmatpush.bf16.msra.mxu0 %v1980
  %3595 = vmatpush.bf16.msra.mxu0 %v1976
  %3596 = vmatpush.bf16.msra.mxu0 %v1972
  %3597 = vmatmul.bf16.gmra.mxu0 %v3541
  %v3598 = vpop.f32.mrf.mxu0
  %v3599 = vadd.f32 %v3580, %v3598
  %v3600 = vpop.f32.mrf.mxu0
  %v3601 = vadd.f32 %v3582, %v3600
  %3602 = vmatmul.bf16.gmra.mxu0 %v3547
  %v3603 = vpop.f32.mrf.mxu0
  %v3604 = vadd.f32 %v3585, %v3603
  %v3605 = vpop.f32.mrf.mxu0
  %v3606 = vadd.f32 %v3587, %v3605
  %3607 = vdwg.mxu0
  %3608 = vmatpush.bf16.msra.mxu0 %v2032
  %3609 = vmatpush.bf16.msra.mxu0 %v2028
  %3610 = vmatpush.bf16.msra.mxu0 %v2024
  %3611 = vmatpush.bf16.msra.mxu0 %v2020
  %3612 = vmatpush.bf16.msra.mxu0 %v2016
  %3613 = vmatpush.bf16.msra.mxu0 %v2012
  %3614 = vmatpush.bf16.msra.mxu0 %v2008
  %3615 = vmatpush.bf16.msra.mxu0 %v2004
  %3616 = vmatmul.bf16.gmra.mxu0 %v3542
  %v3617 = vpop.f32.mrf.mxu0
  %v3618 = vadd.f32 %v3599, %v3617
  %v3619 = vpop.f32.mrf.mxu0
  %v3620 = vadd.f32 %v3601, %v3619
  %3621 = vmatmul.bf16.gmra.mxu0 %v3548
  %v3622 = vpop.f32.mrf.mxu0
  %v3623 = vadd.f32 %v3604, %v3622
  %v3624 = vpop.f32.mrf.mxu0
  %v3625 = vadd.f32 %v3606, %v3624
  %3626 = vdwg.mxu0
  %3627 = vmatpush.bf16.msra.mxu0 %v2064
  %3628 = vmatpush.bf16.msra.mxu0 %v2060
  %3629 = vmatpush.bf16.msra.mxu0 %v2056
  %3630 = vmatpush.bf16.msra.mxu0 %v2052
  %3631 = vmatpush.bf16.msra.mxu0 %v2048
  %3632 = vmatpush.bf16.msra.mxu0 %v2044
  %3633 = vmatpush.bf16.msra.mxu0 %v2040
  %3634 = vmatpush.bf16.msra.mxu0 %v2036
  %3635 = vmatmul.bf16.gmra.mxu0 %v3543
  %v3636 = vpop.f32.mrf.mxu0
  %v3637 = vadd.f32 %v3618, %v3636
  %v3638 = vpop.f32.mrf.mxu0
  %v3639 = vadd.f32 %v3620, %v3638
  %3640 = vmatmul.bf16.gmra.mxu0 %v3549
  %v3641 = vpop.f32.mrf.mxu0
  %v3642 = vadd.f32 %v3623, %v3641
  %v3643 = vpop.f32.mrf.mxu0
  %v3644 = vadd.f32 %v3625, %v3643
  %3645 = vdwg.mxu0
  %3646 = vmatpush.bf16.msra.mxu0 %v2096
  %3647 = vmatpush.bf16.msra.mxu0 %v2092
  %3648 = vmatpush.bf16.msra.mxu0 %v2088
  %3649 = vmatpush.bf16.msra.mxu0 %v2084
  %3650 = vmatpush.bf16.msra.mxu0 %v2080
  %3651 = vmatpush.bf16.msra.mxu0 %v2076
  %3652 = vmatpush.bf16.msra.mxu0 %v2072
  %3653 = vmatpush.bf16.msra.mxu0 %v2068
  %3654 = vmatmul.bf16.gmra.mxu0 %v3544
  %v3655 = vpop.f32.mrf.mxu0
  %v3656 = vadd.f32 %v3637, %v3655
  %v3657 = vpop.f32.mrf.mxu0
  %v3658 = vadd.f32 %v3639, %v3657
  %3659 = vmatmul.bf16.gmra.mxu0 %v3550
  %v3660 = vpop.f32.mrf.mxu0
  %v3661 = vadd.f32 %v3642, %v3660
  %v3662 = vpop.f32.mrf.mxu0
  %v3663 = vadd.f32 %v3644, %v3662
  %3664 = vdwg.mxu0
  %3665 = vmatpush.bf16.msra.mxu0 %v1937
  %3666 = vmatpush.bf16.msra.mxu0 %v1933
  %3667 = vmatpush.bf16.msra.mxu0 %v1929
  %3668 = vmatpush.bf16.msra.mxu0 %v1925
  %3669 = vmatpush.bf16.msra.mxu0 %v1921
  %3670 = vmatpush.bf16.msra.mxu0 %v1917
  %3671 = vmatpush.bf16.msra.mxu0 %v1913
  %3672 = vmatpush.bf16.msra.mxu0 %v1909
  %3673 = vmatmul.bf16.gmra.mxu0 %v3539
  %v3674 = vpop.f32.mrf.mxu0
  %v3675 = vadd.f32 %v1325, %v3674
  %v3676 = vpop.f32.mrf.mxu0
  %v3677 = vadd.f32 %v1325, %v3676
  %3678 = vmatmul.bf16.gmra.mxu0 %v3545
  %v3679 = vpop.f32.mrf.mxu0
  %v3680 = vadd.f32 %v1325, %v3679
  %v3681 = vpop.f32.mrf.mxu0
  %v3682 = vadd.f32 %v1325, %v3681
  %3683 = vdwg.mxu0
  %3684 = vmatpush.bf16.msra.mxu0 %v1969
  %3685 = vmatpush.bf16.msra.mxu0 %v1965
  %3686 = vmatpush.bf16.msra.mxu0 %v1961
  %3687 = vmatpush.bf16.msra.mxu0 %v1957
  %3688 = vmatpush.bf16.msra.mxu0 %v1953
  %3689 = vmatpush.bf16.msra.mxu0 %v1949
  %3690 = vmatpush.bf16.msra.mxu0 %v1945
  %3691 = vmatpush.bf16.msra.mxu0 %v1941
  %3692 = vmatmul.bf16.gmra.mxu0 %v3540
  %v3693 = vpop.f32.mrf.mxu0
  %v3694 = vadd.f32 %v3675, %v3693
  %v3695 = vpop.f32.mrf.mxu0
  %v3696 = vadd.f32 %v3677, %v3695
  %3697 = vmatmul.bf16.gmra.mxu0 %v3546
  %v3698 = vpop.f32.mrf.mxu0
  %v3699 = vadd.f32 %v3680, %v3698
  %v3700 = vpop.f32.mrf.mxu0
  %v3701 = vadd.f32 %v3682, %v3700
  %3702 = vdwg.mxu0
  %3703 = vmatpush.bf16.msra.mxu0 %v2001
  %3704 = vmatpush.bf16.msra.mxu0 %v1997
  %3705 = vmatpush.bf16.msra.mxu0 %v1993
  %3706 = vmatpush.bf16.msra.mxu0 %v1989
  %3707 = vmatpush.bf16.msra.mxu0 %v1985
  %3708 = vmatpush.bf16.msra.mxu0 %v1981
  %3709 = vmatpush.bf16.msra.mxu0 %v1977
  %3710 = vmatpush.bf16.msra.mxu0 %v1973
  %3711 = vmatmul.bf16.gmra.mxu0 %v3541
  %v3712 = vpop.f32.mrf.mxu0
  %v3713 = vadd.f32 %v3694, %v3712
  %v3714 = vpop.f32.mrf.mxu0
  %v3715 = vadd.f32 %v3696, %v3714
  %3716 = vmatmul.bf16.gmra.mxu0 %v3547
  %v3717 = vpop.f32.mrf.mxu0
  %v3718 = vadd.f32 %v3699, %v3717
  %v3719 = vpop.f32.mrf.mxu0
  %v3720 = vadd.f32 %v3701, %v3719
  %3721 = vdwg.mxu0
  %3722 = vmatpush.bf16.msra.mxu0 %v2033
  %3723 = vmatpush.bf16.msra.mxu0 %v2029
  %3724 = vmatpush.bf16.msra.mxu0 %v2025
  %3725 = vmatpush.bf16.msra.mxu0 %v2021
  %3726 = vmatpush.bf16.msra.mxu0 %v2017
  %3727 = vmatpush.bf16.msra.mxu0 %v2013
  %3728 = vmatpush.bf16.msra.mxu0 %v2009
  %3729 = vmatpush.bf16.msra.mxu0 %v2005
  %3730 = vmatmul.bf16.gmra.mxu0 %v3542
  %v3731 = vpop.f32.mrf.mxu0
  %v3732 = vadd.f32 %v3713, %v3731
  %v3733 = vpop.f32.mrf.mxu0
  %v3734 = vadd.f32 %v3715, %v3733
  %3735 = vmatmul.bf16.gmra.mxu0 %v3548
  %v3736 = vpop.f32.mrf.mxu0
  %v3737 = vadd.f32 %v3718, %v3736
  %v3738 = vpop.f32.mrf.mxu0
  %v3739 = vadd.f32 %v3720, %v3738
  %3740 = vdwg.mxu0
  %3741 = vmatpush.bf16.msra.mxu0 %v2065
  %3742 = vmatpush.bf16.msra.mxu0 %v2061
  %3743 = vmatpush.bf16.msra.mxu0 %v2057
  %3744 = vmatpush.bf16.msra.mxu0 %v2053
  %3745 = vmatpush.bf16.msra.mxu0 %v2049
  %3746 = vmatpush.bf16.msra.mxu0 %v2045
  %3747 = vmatpush.bf16.msra.mxu0 %v2041
  %3748 = vmatpush.bf16.msra.mxu0 %v2037
  %3749 = vmatmul.bf16.gmra.mxu0 %v3543
  %v3750 = vpop.f32.mrf.mxu0
  %v3751 = vadd.f32 %v3732, %v3750
  %v3752 = vpop.f32.mrf.mxu0
  %v3753 = vadd.f32 %v3734, %v3752
  %3754 = vmatmul.bf16.gmra.mxu0 %v3549
  %v3755 = vpop.f32.mrf.mxu0
  %v3756 = vadd.f32 %v3737, %v3755
  %v3757 = vpop.f32.mrf.mxu0
  %v3758 = vadd.f32 %v3739, %v3757
  %3759 = vdwg.mxu0
  %3760 = vmatpush.bf16.msra.mxu0 %v2097
  %3761 = vmatpush.bf16.msra.mxu0 %v2093
  %3762 = vmatpush.bf16.msra.mxu0 %v2089
  %3763 = vmatpush.bf16.msra.mxu0 %v2085
  %3764 = vmatpush.bf16.msra.mxu0 %v2081
  %3765 = vmatpush.bf16.msra.mxu0 %v2077
  %3766 = vmatpush.bf16.msra.mxu0 %v2073
  %3767 = vmatpush.bf16.msra.mxu0 %v2069
  %3768 = vmatmul.bf16.gmra.mxu0 %v3544
  %v3769 = vpop.f32.mrf.mxu0
  %v3770 = vadd.f32 %v3751, %v3769
  %v3771 = vpop.f32.mrf.mxu0
  %v3772 = vadd.f32 %v3753, %v3771
  %3773 = vmatmul.bf16.gmra.mxu0 %v3550
  %v3774 = vpop.f32.mrf.mxu0
  %v3775 = vadd.f32 %v3756, %v3774
  %v3776 = vpop.f32.mrf.mxu0
  %v3777 = vadd.f32 %v3758, %v3776
  %3778 = vdwg.mxu0
  %3779 = vmatpush.bf16.msra.mxu0 %v1938
  %3780 = vmatpush.bf16.msra.mxu0 %v1934
  %3781 = vmatpush.bf16.msra.mxu0 %v1930
  %3782 = vmatpush.bf16.msra.mxu0 %v1926
  %3783 = vmatpush.bf16.msra.mxu0 %v1922
  %3784 = vmatpush.bf16.msra.mxu0 %v1918
  %3785 = vmatpush.bf16.msra.mxu0 %v1914
  %3786 = vmatpush.bf16.msra.mxu0 %v1910
  %3787 = vmatmul.bf16.gmra.mxu0 %v3539
  %v3788 = vpop.f32.mrf.mxu0
  %v3789 = vadd.f32 %v1326, %v3788
  %v3790 = vpop.f32.mrf.mxu0
  %v3791 = vadd.f32 %v1326, %v3790
  %3792 = vmatmul.bf16.gmra.mxu0 %v3545
  %v3793 = vpop.f32.mrf.mxu0
  %v3794 = vadd.f32 %v1326, %v3793
  %v3795 = vpop.f32.mrf.mxu0
  %v3796 = vadd.f32 %v1326, %v3795
  %3797 = vdwg.mxu0
  %3798 = vmatpush.bf16.msra.mxu0 %v1970
  %3799 = vmatpush.bf16.msra.mxu0 %v1966
  %3800 = vmatpush.bf16.msra.mxu0 %v1962
  %3801 = vmatpush.bf16.msra.mxu0 %v1958
  %3802 = vmatpush.bf16.msra.mxu0 %v1954
  %3803 = vmatpush.bf16.msra.mxu0 %v1950
  %3804 = vmatpush.bf16.msra.mxu0 %v1946
  %3805 = vmatpush.bf16.msra.mxu0 %v1942
  %3806 = vmatmul.bf16.gmra.mxu0 %v3540
  %v3807 = vpop.f32.mrf.mxu0
  %v3808 = vadd.f32 %v3789, %v3807
  %v3809 = vpop.f32.mrf.mxu0
  %v3810 = vadd.f32 %v3791, %v3809
  %3811 = vmatmul.bf16.gmra.mxu0 %v3546
  %v3812 = vpop.f32.mrf.mxu0
  %v3813 = vadd.f32 %v3794, %v3812
  %v3814 = vpop.f32.mrf.mxu0
  %v3815 = vadd.f32 %v3796, %v3814
  %3816 = vdwg.mxu0
  %3817 = vmatpush.bf16.msra.mxu0 %v2002
  %3818 = vmatpush.bf16.msra.mxu0 %v1998
  %3819 = vmatpush.bf16.msra.mxu0 %v1994
  %3820 = vmatpush.bf16.msra.mxu0 %v1990
  %3821 = vmatpush.bf16.msra.mxu0 %v1986
  %3822 = vmatpush.bf16.msra.mxu0 %v1982
  %3823 = vmatpush.bf16.msra.mxu0 %v1978
  %3824 = vmatpush.bf16.msra.mxu0 %v1974
  %3825 = vmatmul.bf16.gmra.mxu0 %v3541
  %v3826 = vpop.f32.mrf.mxu0
  %v3827 = vadd.f32 %v3808, %v3826
  %v3828 = vpop.f32.mrf.mxu0
  %v3829 = vadd.f32 %v3810, %v3828
  %3830 = vmatmul.bf16.gmra.mxu0 %v3547
  %v3831 = vpop.f32.mrf.mxu0
  %v3832 = vadd.f32 %v3813, %v3831
  %v3833 = vpop.f32.mrf.mxu0
  %v3834 = vadd.f32 %v3815, %v3833
  %3835 = vdwg.mxu0
  %3836 = vmatpush.bf16.msra.mxu0 %v2034
  %3837 = vmatpush.bf16.msra.mxu0 %v2030
  %3838 = vmatpush.bf16.msra.mxu0 %v2026
  %3839 = vmatpush.bf16.msra.mxu0 %v2022
  %3840 = vmatpush.bf16.msra.mxu0 %v2018
  %3841 = vmatpush.bf16.msra.mxu0 %v2014
  %3842 = vmatpush.bf16.msra.mxu0 %v2010
  %3843 = vmatpush.bf16.msra.mxu0 %v2006
  %3844 = vmatmul.bf16.gmra.mxu0 %v3542
  %v3845 = vpop.f32.mrf.mxu0
  %v3846 = vadd.f32 %v3827, %v3845
  %v3847 = vpop.f32.mrf.mxu0
  %v3848 = vadd.f32 %v3829, %v3847
  %3849 = vmatmul.bf16.gmra.mxu0 %v3548
  %v3850 = vpop.f32.mrf.mxu0
  %v3851 = vadd.f32 %v3832, %v3850
  %v3852 = vpop.f32.mrf.mxu0
  %v3853 = vadd.f32 %v3834, %v3852
  %3854 = vdwg.mxu0
  %3855 = vmatpush.bf16.msra.mxu0 %v2066
  %3856 = vmatpush.bf16.msra.mxu0 %v2062
  %3857 = vmatpush.bf16.msra.mxu0 %v2058
  %3858 = vmatpush.bf16.msra.mxu0 %v2054
  %3859 = vmatpush.bf16.msra.mxu0 %v2050
  %3860 = vmatpush.bf16.msra.mxu0 %v2046
  %3861 = vmatpush.bf16.msra.mxu0 %v2042
  %3862 = vmatpush.bf16.msra.mxu0 %v2038
  %3863 = vmatmul.bf16.gmra.mxu0 %v3543
  %v3864 = vpop.f32.mrf.mxu0
  %v3865 = vadd.f32 %v3846, %v3864
  %v3866 = vpop.f32.mrf.mxu0
  %v3867 = vadd.f32 %v3848, %v3866
  %3868 = vmatmul.bf16.gmra.mxu0 %v3549
  %v3869 = vpop.f32.mrf.mxu0
  %v3870 = vadd.f32 %v3851, %v3869
  %v3871 = vpop.f32.mrf.mxu0
  %v3872 = vadd.f32 %v3853, %v3871
  %3873 = vdwg.mxu0
  %3874 = vmatpush.bf16.msra.mxu0 %v2098
  %3875 = vmatpush.bf16.msra.mxu0 %v2094
  %3876 = vmatpush.bf16.msra.mxu0 %v2090
  %3877 = vmatpush.bf16.msra.mxu0 %v2086
  %3878 = vmatpush.bf16.msra.mxu0 %v2082
  %3879 = vmatpush.bf16.msra.mxu0 %v2078
  %3880 = vmatpush.bf16.msra.mxu0 %v2074
  %3881 = vmatpush.bf16.msra.mxu0 %v2070
  %3882 = vmatmul.bf16.gmra.mxu0 %v3544
  %v3883 = vpop.f32.mrf.mxu0
  %v3884 = vadd.f32 %v3865, %v3883
  %v3885 = vpop.f32.mrf.mxu0
  %v3886 = vadd.f32 %v3867, %v3885
  %3887 = vmatmul.bf16.gmra.mxu0 %v3550
  %v3888 = vpop.f32.mrf.mxu0
  %v3889 = vadd.f32 %v3870, %v3888
  %v3890 = vpop.f32.mrf.mxu0
  %v3891 = vadd.f32 %v3872, %v3890
  %3892 = vdwg.mxu0
  %3893 = vmatpush.bf16.msra.mxu0 %v1939
  %3894 = vmatpush.bf16.msra.mxu0 %v1935
  %3895 = vmatpush.bf16.msra.mxu0 %v1931
  %3896 = vmatpush.bf16.msra.mxu0 %v1927
  %3897 = vmatpush.bf16.msra.mxu0 %v1923
  %3898 = vmatpush.bf16.msra.mxu0 %v1919
  %3899 = vmatpush.bf16.msra.mxu0 %v1915
  %3900 = vmatpush.bf16.msra.mxu0 %v1911
  %3901 = vmatmul.bf16.gmra.mxu0 %v3539
  %v3902 = vpop.f32.mrf.mxu0
  %v3903 = vadd.f32 %v1327, %v3902
  %v3904 = vpop.f32.mrf.mxu0
  %v3905 = vadd.f32 %v1327, %v3904
  %3906 = vmatmul.bf16.gmra.mxu0 %v3545
  %v3907 = vpop.f32.mrf.mxu0
  %v3908 = vadd.f32 %v1327, %v3907
  %v3909 = vpop.f32.mrf.mxu0
  %v3910 = vadd.f32 %v1327, %v3909
  %3911 = vdwg.mxu0
  %3912 = vmatpush.bf16.msra.mxu0 %v1971
  %3913 = vmatpush.bf16.msra.mxu0 %v1967
  %3914 = vmatpush.bf16.msra.mxu0 %v1963
  %3915 = vmatpush.bf16.msra.mxu0 %v1959
  %3916 = vmatpush.bf16.msra.mxu0 %v1955
  %3917 = vmatpush.bf16.msra.mxu0 %v1951
  %3918 = vmatpush.bf16.msra.mxu0 %v1947
  %3919 = vmatpush.bf16.msra.mxu0 %v1943
  %3920 = vmatmul.bf16.gmra.mxu0 %v3540
  %v3921 = vpop.f32.mrf.mxu0
  %v3922 = vadd.f32 %v3903, %v3921
  %v3923 = vpop.f32.mrf.mxu0
  %v3924 = vadd.f32 %v3905, %v3923
  %3925 = vmatmul.bf16.gmra.mxu0 %v3546
  %v3926 = vpop.f32.mrf.mxu0
  %v3927 = vadd.f32 %v3908, %v3926
  %v3928 = vpop.f32.mrf.mxu0
  %v3929 = vadd.f32 %v3910, %v3928
  %3930 = vdwg.mxu0
  %3931 = vmatpush.bf16.msra.mxu0 %v2003
  %3932 = vmatpush.bf16.msra.mxu0 %v1999
  %3933 = vmatpush.bf16.msra.mxu0 %v1995
  %3934 = vmatpush.bf16.msra.mxu0 %v1991
  %3935 = vmatpush.bf16.msra.mxu0 %v1987
  %3936 = vmatpush.bf16.msra.mxu0 %v1983
  %3937 = vmatpush.bf16.msra.mxu0 %v1979
  %3938 = vmatpush.bf16.msra.mxu0 %v1975
  %3939 = vmatmul.bf16.gmra.mxu0 %v3541
  %v3940 = vpop.f32.mrf.mxu0
  %v3941 = vadd.f32 %v3922, %v3940
  %v3942 = vpop.f32.mrf.mxu0
  %v3943 = vadd.f32 %v3924, %v3942
  %3944 = vmatmul.bf16.gmra.mxu0 %v3547
  %v3945 = vpop.f32.mrf.mxu0
  %v3946 = vadd.f32 %v3927, %v3945
  %v3947 = vpop.f32.mrf.mxu0
  %v3948 = vadd.f32 %v3929, %v3947
  %3949 = vdwg.mxu0
  %3950 = vmatpush.bf16.msra.mxu0 %v2035
  %3951 = vmatpush.bf16.msra.mxu0 %v2031
  %3952 = vmatpush.bf16.msra.mxu0 %v2027
  %3953 = vmatpush.bf16.msra.mxu0 %v2023
  %3954 = vmatpush.bf16.msra.mxu0 %v2019
  %3955 = vmatpush.bf16.msra.mxu0 %v2015
  %3956 = vmatpush.bf16.msra.mxu0 %v2011
  %3957 = vmatpush.bf16.msra.mxu0 %v2007
  %3958 = vmatmul.bf16.gmra.mxu0 %v3542
  %v3959 = vpop.f32.mrf.mxu0
  %v3960 = vadd.f32 %v3941, %v3959
  %v3961 = vpop.f32.mrf.mxu0
  %v3962 = vadd.f32 %v3943, %v3961
  %3963 = vmatmul.bf16.gmra.mxu0 %v3548
  %v3964 = vpop.f32.mrf.mxu0
  %v3965 = vadd.f32 %v3946, %v3964
  %v3966 = vpop.f32.mrf.mxu0
  %v3967 = vadd.f32 %v3948, %v3966
  %3968 = vdwg.mxu0
  %3969 = vmatpush.bf16.msra.mxu0 %v2067
  %3970 = vmatpush.bf16.msra.mxu0 %v2063
  %3971 = vmatpush.bf16.msra.mxu0 %v2059
  %3972 = vmatpush.bf16.msra.mxu0 %v2055
  %3973 = vmatpush.bf16.msra.mxu0 %v2051
  %3974 = vmatpush.bf16.msra.mxu0 %v2047
  %3975 = vmatpush.bf16.msra.mxu0 %v2043
  %3976 = vmatpush.bf16.msra.mxu0 %v2039
  %3977 = vmatmul.bf16.gmra.mxu0 %v3543
  %v3978 = vpop.f32.mrf.mxu0
  %v3979 = vadd.f32 %v3960, %v3978
  %v3980 = vpop.f32.mrf.mxu0
  %v3981 = vadd.f32 %v3962, %v3980
  %3982 = vmatmul.bf16.gmra.mxu0 %v3549
  %v3983 = vpop.f32.mrf.mxu0
  %v3984 = vadd.f32 %v3965, %v3983
  %v3985 = vpop.f32.mrf.mxu0
  %v3986 = vadd.f32 %v3967, %v3985
  %3987 = vdwg.mxu0
  %3988 = vmatpush.bf16.msra.mxu0 %v2099
  %3989 = vmatpush.bf16.msra.mxu0 %v2095
  %3990 = vmatpush.bf16.msra.mxu0 %v2091
  %3991 = vmatpush.bf16.msra.mxu0 %v2087
  %3992 = vmatpush.bf16.msra.mxu0 %v2083
  %3993 = vmatpush.bf16.msra.mxu0 %v2079
  %3994 = vmatpush.bf16.msra.mxu0 %v2075
  %3995 = vmatpush.bf16.msra.mxu0 %v2071
  %3996 = vmatmul.bf16.gmra.mxu0 %v3544
  %v3997 = vpop.f32.mrf.mxu0
  %v3998 = vadd.f32 %v3979, %v3997
  %v3999 = vpop.f32.mrf.mxu0
  %v4000 = vadd.f32 %v3981, %v3999
  %4001 = vmatmul.bf16.gmra.mxu0 %v3550
  %v4002 = vpop.f32.mrf.mxu0
  %v4003 = vadd.f32 %v3984, %v4002
  %v4004 = vpop.f32.mrf.mxu0
  %v4005 = vadd.f32 %v3986, %v4004
  %4006 = vdwg.mxu0
  %v4007 = vmax.f32 %v3656, 0.0
  %v4008 = vmax.f32 %v3770, 0.0
  %v4009 = vmax.f32 %v3884, 0.0
  %v4010 = vmax.f32 %v3998, 0.0
  %v4011 = vmax.f32 %v3658, 0.0
  %v4012 = vmax.f32 %v3772, 0.0
  %v4013 = vmax.f32 %v3886, 0.0
  %v4014 = vmax.f32 %v4000, 0.0
  %v4015 = vmax.f32 %v3661, 0.0
  %v4016 = vmax.f32 %v3775, 0.0
  %v4017 = vmax.f32 %v3889, 0.0
  %v4018 = vmax.f32 %v4003, 0.0
  %v4019 = vmax.f32 %v3663, 0.0
  %v4020 = vmax.f32 %v3777, 0.0
  %v4021 = vmax.f32 %v3891, 0.0
  %v4022 = vmax.f32 %v4005, 0.0
  %v4023 = vmax.f32 %v4007, %v4008
  %v4024 = vmax.f32 %v4011, %v4012
  %v4025 = vmax.f32 %v4015, %v4016
  %v4026 = vmax.f32 %v4019, %v4020
  %v4027 = vmax.f32 %v4009, %v4010
  %v4028 = vmax.f32 %v4013, %v4014
  %v4029 = vmax.f32 %v4017, %v4018
  %v4030 = vmax.f32 %v4021, %v4022
  %v4031 = vmax.f32 %v4023, %v4027
  %v4032 = vmax.f32 %v4024, %v4028
  %v4033 = vmax.f32 %v4025, %v4029
  %v4034 = vmax.f32 %v4026, %v4030
  %v4036 = vrot.slane %v4031, 1
  %v4037 = vrot.slane %v4031, 2
  %v4038 = vrot.slane %v4031, 3
  %v4039 = vrot.slane %v4031, 4
  %v4040 = vrot.slane %v4031, 5
  %v4041 = vrot.slane %v4031, 6
  %v4042 = vrot.slane %v4031, 7
  %v4044 = vrot.slane %v4032, 1
  %v4045 = vrot.slane %v4032, 2
  %v4046 = vrot.slane %v4032, 3
  %v4047 = vrot.slane %v4032, 4
  %v4048 = vrot.slane %v4032, 5
  %v4049 = vrot.slane %v4032, 6
  %v4050 = vrot.slane %v4032, 7
  %v4052 = vrot.slane %v4033, 1
  %v4053 = vrot.slane %v4033, 2
  %v4054 = vrot.slane %v4033, 3
  %v4055 = vrot.slane %v4033, 4
  %v4056 = vrot.slane %v4033, 5
  %v4057 = vrot.slane %v4033, 6
  %v4058 = vrot.slane %v4033, 7
  %v4060 = vrot.slane %v4034, 1
  %v4061 = vrot.slane %v4034, 2
  %v4062 = vrot.slane %v4034, 3
  %v4063 = vrot.slane %v4034, 4
  %v4064 = vrot.slane %v4036, 7
  %v4065 = vrot.slane %v4037, 7
  %v4066 = vrot.slane %v4038, 7
  %v4067 = vrot.slane %v4039, 7
  %v4068 = vrot.slane %v4040, 7
  %v4069 = vrot.slane %v4041, 7
  %v4070 = vrot.slane %v4042, 7
  %v4071 = vrot.slane %v4044, 7
  %v4072 = vrot.slane %v4045, 7
  %v4073 = vrot.slane %v4046, 7
  %v4074 = vrot.slane %v4047, 7
  %v4075 = vrot.slane %v4048, 7
  %v4076 = vrot.slane %v4049, 7
  %v4077 = vrot.slane %v4050, 7
  %v4078 = vrot.slane %v4052, 7
  %v4079 = vrot.slane %v4053, 7
  %v4080 = vrot.slane %v4054, 7
  %v4081 = vrot.slane %v4055, 7
  %v4082 = vrot.slane %v4056, 7
  %v4083 = vrot.slane %v4057, 7
  %v4084 = vrot.slane %v4058, 7
  %v4085 = vrot.slane %v4034, 7
  %v4086 = vrot.slane %v4060, 7
  %v4087 = vrot.slane %v4061, 7
  %v4088 = vrot.slane %v4062, 7
  %v4089 = vrot.slane %v4063, 7
  %vm4119 = vcmask 1040384
  %v4120 = vsel %vm4119, %v2772, %v4042
  %v4121 = vsel %vm4119, %v2777, %v4064
  %v4122 = vsel %vm4119, %v2779, %v4065
  %v4123 = vsel %vm4119, %v2781, %v4066
  %v4124 = vsel %vm4119, %v2783, %v4067
  %v4125 = vsel %vm4119, %v2785, %v4068
  %v4126 = vsel %vm4119, %v2787, %v4069
  %v4127 = vsel %vm4119, %v2789, %v4070
  %v4128 = vsel %vm4119, %v2773, %v4050
  %v4129 = vsel %vm4119, %v2792, %v4071
  %v4130 = vsel %vm4119, %v2794, %v4072
  %v4131 = vsel %vm4119, %v2796, %v4073
  %v4132 = vsel %vm4119, %v2798, %v4074
  %v4133 = vsel %vm4119, %v2800, %v4075
  %v4134 = vsel %vm4119, %v2802, %v4076
  %v4135 = vsel %vm4119, %v2804, %v4077
  %v4136 = vsel %vm4119, %v2774, %v4058
  %v4137 = vsel %vm4119, %v2807, %v4078
  %v4138 = vsel %vm4119, %v2809, %v4079
  %v4139 = vsel %vm4119, %v2811, %v4080
  %v4140 = vsel %vm4119, %v2813, %v4081
  %v4141 = vsel %vm4119, %v2815, %v4082
  %v4142 = vsel %vm4119, %v2817, %v4083
  %v4143 = vsel %vm4119, %v2819, %v4084
  %v4144 = vsel %vm4119, %v2775, %v4085
  %v4145 = vsel %vm4119, %v2822, %v4086
  %v4146 = vsel %vm4119, %v2824, %v4087
  %v4147 = vsel %vm4119, %v2826, %v4088
  %v4148 = vsel %vm4119, %v2828, %v4089
  %v4149 = vpack.c.bf16 %v4120, %v4120
  %v4150 = vpack.c.bf16 %v4121, %v4121
  %v4151 = vpack.c.bf16 %v4122, %v4122
  %v4152 = vpack.c.bf16 %v4123, %v4123
  %v4153 = vpack.c.bf16 %v4124, %v4124
  %v4154 = vpack.c.bf16 %v4125, %v4125
  %v4155 = vpack.c.bf16 %v4126, %v4126
  %v4156 = vpack.c.bf16 %v4127, %v4127
  %v4157 = vpack.c.bf16 %v4128, %v4128
  %v4158 = vpack.c.bf16 %v4129, %v4129
  %v4159 = vpack.c.bf16 %v4130, %v4130
  %v4160 = vpack.c.bf16 %v4131, %v4131
  %v4161 = vpack.c.bf16 %v4132, %v4132
  %v4162 = vpack.c.bf16 %v4133, %v4133
  %v4163 = vpack.c.bf16 %v4134, %v4134
  %v4164 = vpack.c.bf16 %v4135, %v4135
  %v4165 = vpack.c.bf16 %v4136, %v4136
  %v4166 = vpack.c.bf16 %v4137, %v4137
  %v4167 = vpack.c.bf16 %v4138, %v4138
  %v4168 = vpack.c.bf16 %v4139, %v4139
  %v4169 = vpack.c.bf16 %v4140, %v4140
  %v4170 = vpack.c.bf16 %v4141, %v4141
  %v4171 = vpack.c.bf16 %v4142, %v4142
  %v4172 = vpack.c.bf16 %v4143, %v4143
  %v4173 = vpack.c.bf16 %v4144, %v4144
  %v4174 = vpack.c.bf16 %v4145, %v4145
  %v4175 = vpack.c.bf16 %v4146, %v4146
  %v4176 = vpack.c.bf16 %v4147, %v4147
  %v4177 = vpack.c.bf16 %v4148, %v4148
  %v4178 = vld [vmem:[%s5] sm:$0xf]
  %v4179 = vld [vmem:[%s5 + $0x4] sm:$0xf]
  %v4180 = vld [vmem:[%s5 + $0x8] sm:$0xf]
  %v4181 = vld [vmem:[%s5 + $0xc] sm:$0xf]
  %v4182 = vld [vmem:[%s5 + $0x10] sm:$0xf]
  %v4183 = vld [vmem:[%s5 + $0x14] sm:$0xf]
  %v4184 = vld [vmem:[%s5 + $0x18] sm:$0xf]
  %v4185 = vld [vmem:[%s5 + $0x1c] sm:$0xf]
  %v4186 = vld [vmem:[%s5 + $0x20] sm:$0xf]
  %v4187 = vld [vmem:[%s5 + $0x24] sm:$0xf]
  %v4188 = vld [vmem:[%s5 + $0x28] sm:$0xf]
  %v4189 = vld [vmem:[%s5 + $0x2c] sm:$0xf]
  %v4190 = vld [vmem:[%s5 + $0x30] sm:$0xf]
  %v4191 = vld [vmem:[%s5 + $0x34] sm:$0xf]
  %v4192 = vld [vmem:[%s5 + $0x38] sm:$0xf]
  %v4193 = vld [vmem:[%s5 + $0x3c] sm:$0xf]
  %v4194 = vld [vmem:[%s5 + $0x40] sm:$0xf]
  %v4195 = vld [vmem:[%s5 + $0x44] sm:$0xf]
  %v4196 = vld [vmem:[%s5 + $0x48] sm:$0xf]
  %v4197 = vld [vmem:[%s5 + $0x4c] sm:$0xf]
  %v4198 = vld [vmem:[%s5 + $0x50] sm:$0xf]
  %v4199 = vld [vmem:[%s5 + $0x54] sm:$0xf]
  %v4200 = vld [vmem:[%s5 + $0x58] sm:$0xf]
  %v4201 = vld [vmem:[%s5 + $0x5c] sm:$0xf]
  %v4202 = vld [vmem:[%s5 + $0x60] sm:$0xf]
  %v4203 = vld [vmem:[%s5 + $0x64] sm:$0xf]
  %v4204 = vld [vmem:[%s5 + $0x68] sm:$0xf]
  %v4205 = vld [vmem:[%s5 + $0x6c] sm:$0xf]
  %v4206 = vld [vmem:[%s5 + $0x70] sm:$0xf]
  %v4207 = vld [vmem:[%s5 + $0x74] sm:$0xf]
  %v4208 = vld [vmem:[%s5 + $0x78] sm:$0xf]
  %v4209 = vld [vmem:[%s5 + $0x7c] sm:$0xf]
  %v4210 = vld [vmem:[%s5 + $0x80] sm:$0xf]
  %v4211 = vld [vmem:[%s5 + $0x84] sm:$0xf]
  %v4212 = vld [vmem:[%s5 + $0x88] sm:$0xf]
  %v4213 = vld [vmem:[%s5 + $0x8c] sm:$0xf]
  %v4214 = vld [vmem:[%s5 + $0x90] sm:$0xf]
  %v4215 = vld [vmem:[%s5 + $0x94] sm:$0xf]
  %v4216 = vld [vmem:[%s5 + $0x98] sm:$0xf]
  %v4217 = vld [vmem:[%s5 + $0x9c] sm:$0xf]
  %v4218 = vld [vmem:[%s5 + $0xa0] sm:$0xf]
  %v4219 = vld [vmem:[%s5 + $0xa4] sm:$0xf]
  %v4220 = vld [vmem:[%s5 + $0xa8] sm:$0xf]
  %v4221 = vld [vmem:[%s5 + $0xac] sm:$0xf]
  %v4222 = vld [vmem:[%s5 + $0xb0] sm:$0xf]
  %v4223 = vld [vmem:[%s5 + $0xb4] sm:$0xf]
  %v4224 = vld [vmem:[%s5 + $0xb8] sm:$0xf]
  %v4225 = vld [vmem:[%s5 + $0xbc] sm:$0xf]
  %v4226 = vld [vmem:[%s5 + $0xc0] sm:$0xf]
  %v4227 = vld [vmem:[%s5 + $0xc4] sm:$0xf]
  %v4228 = vld [vmem:[%s5 + $0xc8] sm:$0xf]
  %v4229 = vld [vmem:[%s5 + $0xcc] sm:$0xf]
  %v4230 = vld [vmem:[%s5 + $0xd0] sm:$0xf]
  %v4231 = vld [vmem:[%s5 + $0xd4] sm:$0xf]
  %v4232 = vld [vmem:[%s5 + $0xd8] sm:$0xf]
  %v4233 = vld [vmem:[%s5 + $0xdc] sm:$0xf]
  %v4234 = vld [vmem:[%s5 + $0xe0] sm:$0xf]
  %v4235 = vld [vmem:[%s5 + $0xe4] sm:$0xf]
  %v4236 = vld [vmem:[%s5 + $0xe8] sm:$0xf]
  %v4237 = vld [vmem:[%s5 + $0xec] sm:$0xf]
  %v4238 = vld [vmem:[%s5 + $0xf0] sm:$0xf]
  %v4239 = vld [vmem:[%s5 + $0xf4] sm:$0xf]
  %v4240 = vld [vmem:[%s5 + $0xf8] sm:$0xf]
  %v4241 = vld [vmem:[%s5 + $0xfc] sm:$0xf]
  %v4242 = vld [vmem:[%s5 + $0x100] sm:$0xf]
  %v4243 = vld [vmem:[%s5 + $0x104] sm:$0xf]
  %v4244 = vld [vmem:[%s5 + $0x108] sm:$0xf]
  %v4245 = vld [vmem:[%s5 + $0x10c] sm:$0xf]
  %v4246 = vld [vmem:[%s5 + $0x110] sm:$0xf]
  %v4247 = vld [vmem:[%s5 + $0x114] sm:$0xf]
  %v4248 = vld [vmem:[%s5 + $0x118] sm:$0xf]
  %v4249 = vld [vmem:[%s5 + $0x11c] sm:$0xf]
  %v4250 = vld [vmem:[%s5 + $0x120] sm:$0xf]
  %v4251 = vld [vmem:[%s5 + $0x124] sm:$0xf]
  %v4252 = vld [vmem:[%s5 + $0x128] sm:$0xf]
  %v4253 = vld [vmem:[%s5 + $0x12c] sm:$0xf]
  %v4254 = vld [vmem:[%s5 + $0x130] sm:$0xf]
  %v4255 = vld [vmem:[%s5 + $0x134] sm:$0xf]
  %v4256 = vld [vmem:[%s5 + $0x138] sm:$0xf]
  %v4257 = vld [vmem:[%s5 + $0x13c] sm:$0xf]
  %v4258 = vld [vmem:[%s5 + $0x140] sm:$0xf]
  %v4259 = vld [vmem:[%s5 + $0x144] sm:$0xf]
  %v4260 = vld [vmem:[%s5 + $0x148] sm:$0xf]
  %v4261 = vld [vmem:[%s5 + $0x14c] sm:$0xf]
  %v4262 = vld [vmem:[%s5 + $0x150] sm:$0xf]
  %v4263 = vld [vmem:[%s5 + $0x154] sm:$0xf]
  %v4264 = vld [vmem:[%s5 + $0x158] sm:$0xf]
  %v4265 = vld [vmem:[%s5 + $0x15c] sm:$0xf]
  %v4266 = vld [vmem:[%s5 + $0x160] sm:$0xf]
  %v4267 = vld [vmem:[%s5 + $0x164] sm:$0xf]
  %v4268 = vld [vmem:[%s5 + $0x168] sm:$0xf]
  %v4269 = vld [vmem:[%s5 + $0x16c] sm:$0xf]
  %v4270 = vld [vmem:[%s5 + $0x170] sm:$0xf]
  %v4271 = vld [vmem:[%s5 + $0x174] sm:$0xf]
  %v4272 = vld [vmem:[%s5 + $0x178] sm:$0xf]
  %v4273 = vld [vmem:[%s5 + $0x17c] sm:$0xf]
  %v4274 = vld [vmem:[%s5 + $0x180] sm:$0xf]
  %v4275 = vld [vmem:[%s5 + $0x184] sm:$0xf]
  %v4276 = vld [vmem:[%s5 + $0x188] sm:$0xf]
  %v4277 = vld [vmem:[%s5 + $0x18c] sm:$0xf]
  %v4278 = vld [vmem:[%s5 + $0x190] sm:$0xf]
  %v4279 = vld [vmem:[%s5 + $0x194] sm:$0xf]
  %v4280 = vld [vmem:[%s5 + $0x198] sm:$0xf]
  %v4281 = vld [vmem:[%s5 + $0x19c] sm:$0xf]
  %v4282 = vld [vmem:[%s5 + $0x1a0] sm:$0xf]
  %v4283 = vld [vmem:[%s5 + $0x1a4] sm:$0xf]
  %v4284 = vld [vmem:[%s5 + $0x1a8] sm:$0xf]
  %v4285 = vld [vmem:[%s5 + $0x1ac] sm:$0xf]
  %v4286 = vld [vmem:[%s5 + $0x1b0] sm:$0xf]
  %v4287 = vld [vmem:[%s5 + $0x1b4] sm:$0xf]
  %v4288 = vld [vmem:[%s5 + $0x1b8] sm:$0xf]
  %v4289 = vld [vmem:[%s5 + $0x1bc] sm:$0xf]
  %v4290 = vld [vmem:[%s5 + $0x1c0] sm:$0xf]
  %v4291 = vld [vmem:[%s5 + $0x1c4] sm:$0xf]
  %v4292 = vld [vmem:[%s5 + $0x1c8] sm:$0xf]
  %v4293 = vld [vmem:[%s5 + $0x1cc] sm:$0xf]
  %v4294 = vld [vmem:[%s5 + $0x1d0] sm:$0xf]
  %v4295 = vld [vmem:[%s5 + $0x1d4] sm:$0xf]
  %v4296 = vld [vmem:[%s5 + $0x1d8] sm:$0xf]
  %v4297 = vld [vmem:[%s5 + $0x1dc] sm:$0xf]
  %v4298 = vld [vmem:[%s5 + $0x1e0] sm:$0xf]
  %v4299 = vld [vmem:[%s5 + $0x1e4] sm:$0xf]
  %v4300 = vld [vmem:[%s5 + $0x1e8] sm:$0xf]
  %v4301 = vld [vmem:[%s5 + $0x1ec] sm:$0xf]
  %v4302 = vld [vmem:[%s5 + $0x1f0] sm:$0xf]
  %v4303 = vld [vmem:[%s5 + $0x1f4] sm:$0xf]
  %v4304 = vld [vmem:[%s5 + $0x1f8] sm:$0xf]
  %v4305 = vld [vmem:[%s5 + $0x1fc] sm:$0xf]
  %v4306 = vld [vmem:[%s5 + $0x200] sm:$0xf]
  %v4307 = vld [vmem:[%s5 + $0x204] sm:$0xf]
  %v4308 = vld [vmem:[%s5 + $0x208] sm:$0xf]
  %v4309 = vld [vmem:[%s5 + $0x20c] sm:$0xf]
  %v4310 = vld [vmem:[%s5 + $0x210] sm:$0xf]
  %v4311 = vld [vmem:[%s5 + $0x214] sm:$0xf]
  %v4312 = vld [vmem:[%s5 + $0x218] sm:$0xf]
  %v4313 = vld [vmem:[%s5 + $0x21c] sm:$0xf]
  %v4314 = vld [vmem:[%s5 + $0x220] sm:$0xf]
  %v4315 = vld [vmem:[%s5 + $0x224] sm:$0xf]
  %v4316 = vld [vmem:[%s5 + $0x228] sm:$0xf]
  %v4317 = vld [vmem:[%s5 + $0x22c] sm:$0xf]
  %v4318 = vld [vmem:[%s5 + $0x230] sm:$0xf]
  %v4319 = vld [vmem:[%s5 + $0x234] sm:$0xf]
  %v4320 = vld [vmem:[%s5 + $0x238] sm:$0xf]
  %v4321 = vld [vmem:[%s5 + $0x23c] sm:$0xf]
  %v4322 = vld [vmem:[%s5 + $0x240] sm:$0xf]
  %v4323 = vld [vmem:[%s5 + $0x244] sm:$0xf]
  %v4324 = vld [vmem:[%s5 + $0x248] sm:$0xf]
  %v4325 = vld [vmem:[%s5 + $0x24c] sm:$0xf]
  %v4326 = vld [vmem:[%s5 + $0x250] sm:$0xf]
  %v4327 = vld [vmem:[%s5 + $0x254] sm:$0xf]
  %v4328 = vld [vmem:[%s5 + $0x258] sm:$0xf]
  %v4329 = vld [vmem:[%s5 + $0x25c] sm:$0xf]
  %v4330 = vld [vmem:[%s5 + $0x260] sm:$0xf]
  %v4331 = vld [vmem:[%s5 + $0x264] sm:$0xf]
  %v4332 = vld [vmem:[%s5 + $0x268] sm:$0xf]
  %v4333 = vld [vmem:[%s5 + $0x26c] sm:$0xf]
  %v4334 = vld [vmem:[%s5 + $0x270] sm:$0xf]
  %v4335 = vld [vmem:[%s5 + $0x274] sm:$0xf]
  %v4336 = vld [vmem:[%s5 + $0x278] sm:$0xf]
  %v4337 = vld [vmem:[%s5 + $0x27c] sm:$0xf]
  %v4338 = vld [vmem:[%s5 + $0x280] sm:$0xf]
  %v4339 = vld [vmem:[%s5 + $0x284] sm:$0xf]
  %v4340 = vld [vmem:[%s5 + $0x288] sm:$0xf]
  %v4341 = vld [vmem:[%s5 + $0x28c] sm:$0xf]
  %v4342 = vld [vmem:[%s5 + $0x290] sm:$0xf]
  %v4343 = vld [vmem:[%s5 + $0x294] sm:$0xf]
  %v4344 = vld [vmem:[%s5 + $0x298] sm:$0xf]
  %v4345 = vld [vmem:[%s5 + $0x29c] sm:$0xf]
  %v4346 = vld [vmem:[%s5 + $0x2a0] sm:$0xf]
  %v4347 = vld [vmem:[%s5 + $0x2a4] sm:$0xf]
  %v4348 = vld [vmem:[%s5 + $0x2a8] sm:$0xf]
  %v4349 = vld [vmem:[%s5 + $0x2ac] sm:$0xf]
  %v4350 = vld [vmem:[%s5 + $0x2b0] sm:$0xf]
  %v4351 = vld [vmem:[%s5 + $0x2b4] sm:$0xf]
  %v4352 = vld [vmem:[%s5 + $0x2b8] sm:$0xf]
  %v4353 = vld [vmem:[%s5 + $0x2bc] sm:$0xf]
  %v4354 = vld [vmem:[%s5 + $0x2c0] sm:$0xf]
  %v4355 = vld [vmem:[%s5 + $0x2c4] sm:$0xf]
  %v4356 = vld [vmem:[%s5 + $0x2c8] sm:$0xf]
  %v4357 = vld [vmem:[%s5 + $0x2cc] sm:$0xf]
  %v4358 = vld [vmem:[%s5 + $0x2d0] sm:$0xf]
  %v4359 = vld [vmem:[%s5 + $0x2d4] sm:$0xf]
  %v4360 = vld [vmem:[%s5 + $0x2d8] sm:$0xf]
  %v4361 = vld [vmem:[%s5 + $0x2dc] sm:$0xf]
  %v4362 = vld [vmem:[%s5 + $0x2e0] sm:$0xf]
  %v4363 = vld [vmem:[%s5 + $0x2e4] sm:$0xf]
  %v4364 = vld [vmem:[%s5 + $0x2e8] sm:$0xf]
  %v4365 = vld [vmem:[%s5 + $0x2ec] sm:$0xf]
  %v4366 = vld [vmem:[%s5 + $0x2f0] sm:$0xf]
  %v4367 = vld [vmem:[%s5 + $0x2f4] sm:$0xf]
  %v4368 = vld [vmem:[%s5 + $0x2f8] sm:$0xf]
  %v4369 = vld [vmem:[%s5 + $0x2fc] sm:$0xf]
  %v4370 = vld [vmem:[%s5 + $0x300] sm:$0xf]
  %v4371 = vld [vmem:[%s5 + $0x304] sm:$0xf]
  %v4372 = vld [vmem:[%s5 + $0x308] sm:$0xf]
  %v4373 = vld [vmem:[%s5 + $0x30c] sm:$0xf]
  %v4374 = vld [vmem:[%s5 + $0x310] sm:$0xf]
  %v4375 = vld [vmem:[%s5 + $0x314] sm:$0xf]
  %v4376 = vld [vmem:[%s5 + $0x318] sm:$0xf]
  %v4377 = vld [vmem:[%s5 + $0x31c] sm:$0xf]
  %v4378 = vld [vmem:[%s5 + $0x320] sm:$0xf]
  %v4379 = vld [vmem:[%s5 + $0x324] sm:$0xf]
  %v4380 = vld [vmem:[%s5 + $0x328] sm:$0xf]
  %v4381 = vld [vmem:[%s5 + $0x32c] sm:$0xf]
  %v4382 = vld [vmem:[%s5 + $0x330] sm:$0xf]
  %v4383 = vld [vmem:[%s5 + $0x334] sm:$0xf]
  %v4384 = vld [vmem:[%s5 + $0x338] sm:$0xf]
  %v4385 = vld [vmem:[%s5 + $0x33c] sm:$0xf]
  %v4386 = vld [vmem:[%s5 + $0x340] sm:$0xf]
  %v4387 = vld [vmem:[%s5 + $0x344] sm:$0xf]
  %v4388 = vld [vmem:[%s5 + $0x348] sm:$0xf]
  %v4389 = vld [vmem:[%s5 + $0x34c] sm:$0xf]
  %v4390 = vld [vmem:[%s5 + $0x350] sm:$0xf]
  %v4391 = vld [vmem:[%s5 + $0x354] sm:$0xf]
  %v4392 = vld [vmem:[%s5 + $0x358] sm:$0xf]
  %v4393 = vld [vmem:[%s5 + $0x35c] sm:$0xf]
  %v4394 = vld [vmem:[%s5 + $0x360] sm:$0xf]
  %v4395 = vld [vmem:[%s5 + $0x364] sm:$0xf]
  %v4396 = vld [vmem:[%s5 + $0x368] sm:$0xf]
  %v4397 = vld [vmem:[%s5 + $0x36c] sm:$0xf]
  %v4398 = vld [vmem:[%s5 + $0x370] sm:$0xf]
  %v4399 = vld [vmem:[%s5 + $0x374] sm:$0xf]
  %v4400 = vld [vmem:[%s5 + $0x378] sm:$0xf]
  %v4401 = vld [vmem:[%s5 + $0x37c] sm:$0xf]
  %v4402 = vld [vmem:[%s5 + $0x380] sm:$0xf]
  %v4403 = vld [vmem:[%s5 + $0x384] sm:$0xf]
  %v4404 = vld [vmem:[%s5 + $0x388] sm:$0xf]
  %v4405 = vld [vmem:[%s5 + $0x38c] sm:$0xf]
  %v4406 = vld [vmem:[%s5 + $0x390] sm:$0xf]
  %v4407 = vld [vmem:[%s5 + $0x394] sm:$0xf]
  %v4408 = vld [vmem:[%s5 + $0x398] sm:$0xf]
  %v4409 = vld [vmem:[%s5 + $0x39c] sm:$0xf]
  %v4410 = vld [vmem:[%s5 + $0x3a0] sm:$0xf]
  %v4411 = vld [vmem:[%s5 + $0x3a4] sm:$0xf]
  %v4412 = vld [vmem:[%s5 + $0x3a8] sm:$0xf]
  %v4413 = vld [vmem:[%s5 + $0x3ac] sm:$0xf]
  %v4414 = vld [vmem:[%s5 + $0x3b0] sm:$0xf]
  %v4415 = vld [vmem:[%s5 + $0x3b4] sm:$0xf]
  %v4416 = vld [vmem:[%s5 + $0x3b8] sm:$0xf]
  %v4417 = vld [vmem:[%s5 + $0x3bc] sm:$0xf]
  %v4418 = vld [vmem:[%s5 + $0x3c0] sm:$0xf]
  %v4419 = vld [vmem:[%s5 + $0x3c4] sm:$0xf]
  %v4420 = vld [vmem:[%s5 + $0x3c8] sm:$0xf]
  %v4421 = vld [vmem:[%s5 + $0x3cc] sm:$0xf]
  %v4422 = vld [vmem:[%s5 + $0x3d0] sm:$0xf]
  %v4423 = vld [vmem:[%s5 + $0x3d4] sm:$0xf]
  %v4424 = vld [vmem:[%s5 + $0x3d8] sm:$0xf]
  %v4425 = vld [vmem:[%s5 + $0x3dc] sm:$0xf]
  %v4426 = vld [vmem:[%s5 + $0x3e0] sm:$0xf]
  %v4427 = vld [vmem:[%s5 + $0x3e4] sm:$0xf]
  %v4428 = vld [vmem:[%s5 + $0x3e8] sm:$0xf]
  %v4429 = vld [vmem:[%s5 + $0x3ec] sm:$0xf]
  %v4430 = vld [vmem:[%s5 + $0x3f0] sm:$0xf]
  %v4431 = vld [vmem:[%s5 + $0x3f4] sm:$0xf]
  %v4432 = vld [vmem:[%s5 + $0x3f8] sm:$0xf]
  %v4433 = vld [vmem:[%s5 + $0x3fc] sm:$0xf]
  %v4434 = vld [vmem:[%s5 + $0x400] sm:$0xf]
  %v4435 = vld [vmem:[%s5 + $0x404] sm:$0xf]
  %v4436 = vld [vmem:[%s5 + $0x408] sm:$0xf]
  %v4437 = vld [vmem:[%s5 + $0x40c] sm:$0xf]
  %v4438 = vld [vmem:[%s5 + $0x410] sm:$0xf]
  %v4439 = vld [vmem:[%s5 + $0x414] sm:$0xf]
  %v4440 = vld [vmem:[%s5 + $0x418] sm:$0xf]
  %v4441 = vld [vmem:[%s5 + $0x41c] sm:$0xf]
  %v4442 = vld [vmem:[%s5 + $0x420] sm:$0xf]
  %v4443 = vld [vmem:[%s5 + $0x424] sm:$0xf]
  %v4444 = vld [vmem:[%s5 + $0x428] sm:$0xf]
  %v4445 = vld [vmem:[%s5 + $0x42c] sm:$0xf]
  %v4446 = vld [vmem:[%s5 + $0x430] sm:$0xf]
  %v4447 = vld [vmem:[%s5 + $0x434] sm:$0xf]
  %v4448 = vld [vmem:[%s5 + $0x438] sm:$0xf]
  %v4449 = vld [vmem:[%s5 + $0x43c] sm:$0xf]
  %v4450 = vld [vmem:[%s5 + $0x440] sm:$0xf]
  %v4451 = vld [vmem:[%s5 + $0x444] sm:$0xf]
  %v4452 = vld [vmem:[%s5 + $0x448] sm:$0xf]
  %v4453 = vld [vmem:[%s5 + $0x44c] sm:$0xf]
  %v4454 = vld [vmem:[%s5 + $0x450] sm:$0xf]
  %v4455 = vld [vmem:[%s5 + $0x454] sm:$0xf]
  %v4456 = vld [vmem:[%s5 + $0x458] sm:$0xf]
  %v4457 = vld [vmem:[%s5 + $0x45c] sm:$0xf]
  %v4458 = vld [vmem:[%s5 + $0x460] sm:$0xf]
  %v4459 = vld [vmem:[%s5 + $0x464] sm:$0xf]
  %v4460 = vld [vmem:[%s5 + $0x468] sm:$0xf]
  %v4461 = vld [vmem:[%s5 + $0x46c] sm:$0xf]
  %v4462 = vld [vmem:[%s5 + $0x470] sm:$0xf]
  %v4463 = vld [vmem:[%s5 + $0x474] sm:$0xf]
  %v4464 = vld [vmem:[%s5 + $0x478] sm:$0xf]
  %v4465 = vld [vmem:[%s5 + $0x47c] sm:$0xf]
  %v4466 = vld [vmem:[%s5 + $0x480] sm:$0xf]
  %v4467 = vld [vmem:[%s5 + $0x484] sm:$0xf]
  %v4468 = vld [vmem:[%s5 + $0x488] sm:$0xf]
  %v4469 = vld [vmem:[%s5 + $0x48c] sm:$0xf]
  %v4470 = vld [vmem:[%s5 + $0x490] sm:$0xf]
  %v4471 = vld [vmem:[%s5 + $0x494] sm:$0xf]
  %v4472 = vld [vmem:[%s5 + $0x498] sm:$0xf]
  %v4473 = vld [vmem:[%s5 + $0x49c] sm:$0xf]
  %v4474 = vld [vmem:[%s5 + $0x4a0] sm:$0xf]
  %v4475 = vld [vmem:[%s5 + $0x4a4] sm:$0xf]
  %v4476 = vld [vmem:[%s5 + $0x4a8] sm:$0xf]
  %v4477 = vld [vmem:[%s5 + $0x4ac] sm:$0xf]
  %v4478 = vld [vmem:[%s5 + $0x4b0] sm:$0xf]
  %v4479 = vld [vmem:[%s5 + $0x4b4] sm:$0xf]
  %v4480 = vld [vmem:[%s5 + $0x4b8] sm:$0xf]
  %v4481 = vld [vmem:[%s5 + $0x4bc] sm:$0xf]
  %v4482 = vld [vmem:[%s5 + $0x4c0] sm:$0xf]
  %v4483 = vld [vmem:[%s5 + $0x4c4] sm:$0xf]
  %v4484 = vld [vmem:[%s5 + $0x4c8] sm:$0xf]
  %v4485 = vld [vmem:[%s5 + $0x4cc] sm:$0xf]
  %v4486 = vld [vmem:[%s5 + $0x4d0] sm:$0xf]
  %v4487 = vld [vmem:[%s5 + $0x4d4] sm:$0xf]
  %v4488 = vld [vmem:[%s5 + $0x4d8] sm:$0xf]
  %v4489 = vld [vmem:[%s5 + $0x4dc] sm:$0xf]
  %v4490 = vld [vmem:[%s5 + $0x4e0] sm:$0xf]
  %v4491 = vld [vmem:[%s5 + $0x4e4] sm:$0xf]
  %v4492 = vld [vmem:[%s5 + $0x4e8] sm:$0xf]
  %v4493 = vld [vmem:[%s5 + $0x4ec] sm:$0xf]
  %v4494 = vld [vmem:[%s5 + $0x4f0] sm:$0xf]
  %v4495 = vld [vmem:[%s5 + $0x4f4] sm:$0xf]
  %v4496 = vld [vmem:[%s5 + $0x4f8] sm:$0xf]
  %v4497 = vld [vmem:[%s5 + $0x4fc] sm:$0xf]
  %v4498 = vld [vmem:[%s5 + $0x500] sm:$0xf]
  %v4499 = vld [vmem:[%s5 + $0x504] sm:$0xf]
  %v4500 = vld [vmem:[%s5 + $0x508] sm:$0xf]
  %v4501 = vld [vmem:[%s5 + $0x50c] sm:$0xf]
  %v4502 = vld [vmem:[%s5 + $0x510] sm:$0xf]
  %v4503 = vld [vmem:[%s5 + $0x514] sm:$0xf]
  %v4504 = vld [vmem:[%s5 + $0x518] sm:$0xf]
  %v4505 = vld [vmem:[%s5 + $0x51c] sm:$0xf]
  %v4506 = vld [vmem:[%s5 + $0x520] sm:$0xf]
  %v4507 = vld [vmem:[%s5 + $0x524] sm:$0xf]
  %v4508 = vld [vmem:[%s5 + $0x528] sm:$0xf]
  %v4509 = vld [vmem:[%s5 + $0x52c] sm:$0xf]
  %v4510 = vld [vmem:[%s5 + $0x530] sm:$0xf]
  %v4511 = vld [vmem:[%s5 + $0x534] sm:$0xf]
  %v4512 = vld [vmem:[%s5 + $0x538] sm:$0xf]
  %v4513 = vld [vmem:[%s5 + $0x53c] sm:$0xf]
  %v4514 = vld [vmem:[%s5 + $0x540] sm:$0xf]
  %v4515 = vld [vmem:[%s5 + $0x544] sm:$0xf]
  %v4516 = vld [vmem:[%s5 + $0x548] sm:$0xf]
  %v4517 = vld [vmem:[%s5 + $0x54c] sm:$0xf]
  %v4518 = vld [vmem:[%s5 + $0x550] sm:$0xf]
  %v4519 = vld [vmem:[%s5 + $0x554] sm:$0xf]
  %v4520 = vld [vmem:[%s5 + $0x558] sm:$0xf]
  %v4521 = vld [vmem:[%s5 + $0x55c] sm:$0xf]
  %v4522 = vld [vmem:[%s5 + $0x560] sm:$0xf]
  %v4523 = vld [vmem:[%s5 + $0x564] sm:$0xf]
  %v4524 = vld [vmem:[%s5 + $0x568] sm:$0xf]
  %v4525 = vld [vmem:[%s5 + $0x56c] sm:$0xf]
  %v4526 = vld [vmem:[%s5 + $0x570] sm:$0xf]
  %v4527 = vld [vmem:[%s5 + $0x574] sm:$0xf]
  %v4528 = vld [vmem:[%s5 + $0x578] sm:$0xf]
  %v4529 = vld [vmem:[%s5 + $0x57c] sm:$0xf]
  %v4530 = vld [vmem:[%s5 + $0x580] sm:$0xf]
  %v4531 = vld [vmem:[%s5 + $0x584] sm:$0xf]
  %v4532 = vld [vmem:[%s5 + $0x588] sm:$0xf]
  %v4533 = vld [vmem:[%s5 + $0x58c] sm:$0xf]
  %v4534 = vld [vmem:[%s5 + $0x590] sm:$0xf]
  %v4535 = vld [vmem:[%s5 + $0x594] sm:$0xf]
  %v4536 = vld [vmem:[%s5 + $0x598] sm:$0xf]
  %v4537 = vld [vmem:[%s5 + $0x59c] sm:$0xf]
  %v4538 = vld [vmem:[%s5 + $0x5a0] sm:$0xf]
  %v4539 = vld [vmem:[%s5 + $0x5a4] sm:$0xf]
  %v4540 = vld [vmem:[%s5 + $0x5a8] sm:$0xf]
  %v4541 = vld [vmem:[%s5 + $0x5ac] sm:$0xf]
  %v4542 = vld [vmem:[%s5 + $0x5b0] sm:$0xf]
  %v4543 = vld [vmem:[%s5 + $0x5b4] sm:$0xf]
  %v4544 = vld [vmem:[%s5 + $0x5b8] sm:$0xf]
  %v4545 = vld [vmem:[%s5 + $0x5bc] sm:$0xf]
  %v4546 = vld [vmem:[%s5 + $0x5c0] sm:$0xf]
  %v4547 = vld [vmem:[%s5 + $0x5c4] sm:$0xf]
  %v4548 = vld [vmem:[%s5 + $0x5c8] sm:$0xf]
  %v4549 = vld [vmem:[%s5 + $0x5cc] sm:$0xf]
  %v4550 = vld [vmem:[%s5 + $0x5d0] sm:$0xf]
  %v4551 = vld [vmem:[%s5 + $0x5d4] sm:$0xf]
  %v4552 = vld [vmem:[%s5 + $0x5d8] sm:$0xf]
  %v4553 = vld [vmem:[%s5 + $0x5dc] sm:$0xf]
  %v4554 = vld [vmem:[%s5 + $0x5e0] sm:$0xf]
  %v4555 = vld [vmem:[%s5 + $0x5e4] sm:$0xf]
  %v4556 = vld [vmem:[%s5 + $0x5e8] sm:$0xf]
  %v4557 = vld [vmem:[%s5 + $0x5ec] sm:$0xf]
  %v4558 = vld [vmem:[%s5 + $0x5f0] sm:$0xf]
  %v4559 = vld [vmem:[%s5 + $0x5f4] sm:$0xf]
  %v4560 = vld [vmem:[%s5 + $0x5f8] sm:$0xf]
  %v4561 = vld [vmem:[%s5 + $0x5fc] sm:$0xf]
  %v4562 = vld [vmem:[%s5 + $0x600] sm:$0xf]
  %v4563 = vld [vmem:[%s5 + $0x604] sm:$0xf]
  %v4564 = vld [vmem:[%s5 + $0x608] sm:$0xf]
  %v4565 = vld [vmem:[%s5 + $0x60c] sm:$0xf]
  %v4566 = vld [vmem:[%s5 + $0x610] sm:$0xf]
  %v4567 = vld [vmem:[%s5 + $0x614] sm:$0xf]
  %v4568 = vld [vmem:[%s5 + $0x618] sm:$0xf]
  %v4569 = vld [vmem:[%s5 + $0x61c] sm:$0xf]
  %v4570 = vld [vmem:[%s5 + $0x620] sm:$0xf]
  %v4571 = vld [vmem:[%s5 + $0x624] sm:$0xf]
  %v4572 = vld [vmem:[%s5 + $0x628] sm:$0xf]
  %v4573 = vld [vmem:[%s5 + $0x62c] sm:$0xf]
  %v4574 = vld [vmem:[%s5 + $0x630] sm:$0xf]
  %v4575 = vld [vmem:[%s5 + $0x634] sm:$0xf]
  %v4576 = vld [vmem:[%s5 + $0x638] sm:$0xf]
  %v4577 = vld [vmem:[%s5 + $0x63c] sm:$0xf]
  %v4578 = vld [vmem:[%s5 + $0x640] sm:$0xf]
  %v4579 = vld [vmem:[%s5 + $0x644] sm:$0xf]
  %v4580 = vld [vmem:[%s5 + $0x648] sm:$0xf]
  %v4581 = vld [vmem:[%s5 + $0x64c] sm:$0xf]
  %v4582 = vld [vmem:[%s5 + $0x650] sm:$0xf]
  %v4583 = vld [vmem:[%s5 + $0x654] sm:$0xf]
  %v4584 = vld [vmem:[%s5 + $0x658] sm:$0xf]
  %v4585 = vld [vmem:[%s5 + $0x65c] sm:$0xf]
  %v4586 = vld [vmem:[%s5 + $0x660] sm:$0xf]
  %v4587 = vld [vmem:[%s5 + $0x664] sm:$0xf]
  %v4588 = vld [vmem:[%s5 + $0x668] sm:$0xf]
  %v4589 = vld [vmem:[%s5 + $0x66c] sm:$0xf]
  %v4590 = vld [vmem:[%s5 + $0x670] sm:$0xf]
  %v4591 = vld [vmem:[%s5 + $0x674] sm:$0xf]
  %v4592 = vld [vmem:[%s5 + $0x678] sm:$0xf]
  %v4593 = vld [vmem:[%s5 + $0x67c] sm:$0xf]
  %v4594 = vld [vmem:[%s5 + $0x680] sm:$0xf]
  %v4595 = vld [vmem:[%s5 + $0x684] sm:$0xf]
  %v4596 = vld [vmem:[%s5 + $0x688] sm:$0xf]
  %v4597 = vld [vmem:[%s5 + $0x68c] sm:$0xf]
  %v4598 = vld [vmem:[%s5 + $0x690] sm:$0xf]
  %v4599 = vld [vmem:[%s5 + $0x694] sm:$0xf]
  %v4600 = vld [vmem:[%s5 + $0x698] sm:$0xf]
  %v4601 = vld [vmem:[%s5 + $0x69c] sm:$0xf]
  %v4602 = vld [vmem:[%s5 + $0x6a0] sm:$0xf]
  %v4603 = vld [vmem:[%s5 + $0x6a4] sm:$0xf]
  %v4604 = vld [vmem:[%s5 + $0x6a8] sm:$0xf]
  %v4605 = vld [vmem:[%s5 + $0x6ac] sm:$0xf]
  %v4606 = vld [vmem:[%s5 + $0x6b0] sm:$0xf]
  %v4607 = vld [vmem:[%s5 + $0x6b4] sm:$0xf]
  %v4608 = vld [vmem:[%s5 + $0x6b8] sm:$0xf]
  %v4609 = vld [vmem:[%s5 + $0x6bc] sm:$0xf]
  %v4610 = vld [vmem:[%s5 + $0x6c0] sm:$0xf]
  %v4611 = vld [vmem:[%s5 + $0x6c4] sm:$0xf]
  %v4612 = vld [vmem:[%s5 + $0x6c8] sm:$0xf]
  %v4613 = vld [vmem:[%s5 + $0x6cc] sm:$0xf]
  %v4614 = vld [vmem:[%s5 + $0x6d0] sm:$0xf]
  %v4615 = vld [vmem:[%s5 + $0x6d4] sm:$0xf]
  %v4616 = vld [vmem:[%s5 + $0x6d8] sm:$0xf]
  %v4617 = vld [vmem:[%s5 + $0x6dc] sm:$0xf]
  %v4618 = vld [vmem:[%s5 + $0x6e0] sm:$0xf]
  %v4619 = vld [vmem:[%s5 + $0x6e4] sm:$0xf]
  %v4620 = vld [vmem:[%s5 + $0x6e8] sm:$0xf]
  %v4621 = vld [vmem:[%s5 + $0x6ec] sm:$0xf]
  %v4622 = vld [vmem:[%s5 + $0x6f0] sm:$0xf]
  %v4623 = vld [vmem:[%s5 + $0x6f4] sm:$0xf]
  %v4624 = vld [vmem:[%s5 + $0x6f8] sm:$0xf]
  %v4625 = vld [vmem:[%s5 + $0x6fc] sm:$0xf]
  %v4626 = vld [vmem:[%s5 + $0x700] sm:$0xf]
  %v4627 = vld [vmem:[%s5 + $0x704] sm:$0xf]
  %v4628 = vld [vmem:[%s5 + $0x708] sm:$0xf]
  %v4629 = vld [vmem:[%s5 + $0x70c] sm:$0xf]
  %v4630 = vld [vmem:[%s5 + $0x710] sm:$0xf]
  %v4631 = vld [vmem:[%s5 + $0x714] sm:$0xf]
  %v4632 = vld [vmem:[%s5 + $0x718] sm:$0xf]
  %v4633 = vld [vmem:[%s5 + $0x71c] sm:$0xf]
  %v4634 = vld [vmem:[%s5 + $0x720] sm:$0xf]
  %v4635 = vld [vmem:[%s5 + $0x724] sm:$0xf]
  %v4636 = vld [vmem:[%s5 + $0x728] sm:$0xf]
  %v4637 = vld [vmem:[%s5 + $0x72c] sm:$0xf]
  %v4638 = vld [vmem:[%s5 + $0x730] sm:$0xf]
  %v4639 = vld [vmem:[%s5 + $0x734] sm:$0xf]
  %v4640 = vld [vmem:[%s5 + $0x738] sm:$0xf]
  %v4641 = vld [vmem:[%s5 + $0x73c] sm:$0xf]
  %v4642 = vld [vmem:[%s6] sm:$0x1]
  %v4644 = vperm.slane %v4642, 0
  %v5110 = vunpack.c.l.b16 %v4178
  %v5111 = vunpack.c.l.b16 %v4179
  %v5112 = vunpack.c.l.b16 %v4180
  %v5113 = vunpack.c.l.b16 %v4181
  %v5114 = vunpack.c.l.b16 %v4182
  %v5115 = vunpack.c.l.b16 %v4183
  %v5116 = vunpack.c.l.b16 %v4184
  %v5117 = vunpack.c.l.b16 %v4185
  %v5118 = vunpack.c.l.b16 %v4186
  %v5119 = vunpack.c.l.b16 %v4187
  %v5120 = vunpack.c.l.b16 %v4188
  %v5121 = vunpack.c.l.b16 %v4189
  %v5122 = vunpack.c.l.b16 %v4190
  %v5123 = vunpack.c.l.b16 %v4191
  %v5124 = vunpack.c.l.b16 %v4192
  %v5125 = vunpack.c.l.b16 %v4193
  %v5126 = vunpack.c.l.b16 %v4194
  %v5127 = vunpack.c.l.b16 %v4195
  %v5128 = vunpack.c.l.b16 %v4196
  %v5129 = vunpack.c.l.b16 %v4197
  %v5130 = vunpack.c.l.b16 %v4198
  %v5131 = vunpack.c.l.b16 %v4199
  %v5132 = vunpack.c.l.b16 %v4200
  %v5133 = vunpack.c.l.b16 %v4201
  %v5134 = vunpack.c.l.b16 %v4202
  %v5135 = vunpack.c.l.b16 %v4203
  %v5136 = vunpack.c.l.b16 %v4204
  %v5137 = vunpack.c.l.b16 %v4205
  %v5138 = vunpack.c.l.b16 %v4206
  %v5139 = vunpack.c.l.b16 %v4207
  %v5140 = vunpack.c.l.b16 %v4208
  %v5141 = vunpack.c.l.b16 %v4209
  %v5142 = vunpack.c.l.b16 %v4210
  %v5143 = vunpack.c.l.b16 %v4211
  %v5144 = vunpack.c.l.b16 %v4212
  %v5145 = vunpack.c.l.b16 %v4213
  %v5146 = vunpack.c.l.b16 %v4214
  %v5147 = vunpack.c.l.b16 %v4215
  %v5148 = vunpack.c.l.b16 %v4216
  %v5149 = vunpack.c.l.b16 %v4217
  %v5150 = vunpack.c.l.b16 %v4218
  %v5151 = vunpack.c.l.b16 %v4219
  %v5152 = vunpack.c.l.b16 %v4220
  %v5153 = vunpack.c.l.b16 %v4221
  %v5154 = vunpack.c.l.b16 %v4222
  %v5155 = vunpack.c.l.b16 %v4223
  %v5156 = vunpack.c.l.b16 %v4224
  %v5157 = vunpack.c.l.b16 %v4225
  %v5158 = vunpack.c.l.b16 %v4226
  %v5159 = vunpack.c.l.b16 %v4227
  %v5160 = vunpack.c.l.b16 %v4228
  %v5161 = vunpack.c.l.b16 %v4229
  %v5162 = vunpack.c.l.b16 %v4230
  %v5163 = vunpack.c.l.b16 %v4231
  %v5164 = vunpack.c.l.b16 %v4232
  %v5165 = vunpack.c.l.b16 %v4233
  %v5166 = vunpack.c.l.b16 %v4234
  %v5167 = vunpack.c.l.b16 %v4235
  %v5168 = vunpack.c.l.b16 %v4236
  %v5169 = vunpack.c.l.b16 %v4237
  %v5170 = vunpack.c.l.b16 %v4238
  %v5171 = vunpack.c.l.b16 %v4239
  %v5172 = vunpack.c.l.b16 %v4240
  %v5173 = vunpack.c.l.b16 %v4241
  %v5174 = vunpack.c.l.b16 %v4242
  %v5175 = vunpack.c.l.b16 %v4243
  %v5176 = vunpack.c.l.b16 %v4244
  %v5177 = vunpack.c.l.b16 %v4245
  %v5178 = vunpack.c.l.b16 %v4246
  %v5179 = vunpack.c.l.b16 %v4247
  %v5180 = vunpack.c.l.b16 %v4248
  %v5181 = vunpack.c.l.b16 %v4249
  %v5182 = vunpack.c.l.b16 %v4250
  %v5183 = vunpack.c.l.b16 %v4251
  %v5184 = vunpack.c.l.b16 %v4252
  %v5185 = vunpack.c.l.b16 %v4253
  %v5186 = vunpack.c.l.b16 %v4254
  %v5187 = vunpack.c.l.b16 %v4255
  %v5188 = vunpack.c.l.b16 %v4256
  %v5189 = vunpack.c.l.b16 %v4257
  %v5190 = vunpack.c.l.b16 %v4258
  %v5191 = vunpack.c.l.b16 %v4259
  %v5192 = vunpack.c.l.b16 %v4260
  %v5193 = vunpack.c.l.b16 %v4261
  %v5194 = vunpack.c.l.b16 %v4262
  %v5195 = vunpack.c.l.b16 %v4263
  %v5196 = vunpack.c.l.b16 %v4264
  %v5197 = vunpack.c.l.b16 %v4265
  %v5198 = vunpack.c.l.b16 %v4266
  %v5199 = vunpack.c.l.b16 %v4267
  %v5200 = vunpack.c.l.b16 %v4268
  %v5201 = vunpack.c.l.b16 %v4269
  %v5202 = vunpack.c.l.b16 %v4270
  %v5203 = vunpack.c.l.b16 %v4271
  %v5204 = vunpack.c.l.b16 %v4272
  %v5205 = vunpack.c.l.b16 %v4273
  %v5206 = vunpack.c.l.b16 %v4274
  %v5207 = vunpack.c.l.b16 %v4275
  %v5208 = vunpack.c.l.b16 %v4276
  %v5209 = vunpack.c.l.b16 %v4277
  %v5210 = vunpack.c.l.b16 %v4278
  %v5211 = vunpack.c.l.b16 %v4279
  %v5212 = vunpack.c.l.b16 %v4280
  %v5213 = vunpack.c.l.b16 %v4281
  %v5214 = vunpack.c.l.b16 %v4282
  %v5215 = vunpack.c.l.b16 %v4283
  %v5216 = vunpack.c.l.b16 %v4284
  %v5217 = vunpack.c.l.b16 %v4285
  %v5218 = vunpack.c.l.b16 %v4286
  %v5219 = vunpack.c.l.b16 %v4287
  %v5220 = vunpack.c.l.b16 %v4288
  %v5221 = vunpack.c.l.b16 %v4289
  %v5222 = vunpack.c.l.b16 %v4290
  %v5223 = vunpack.c.l.b16 %v4291
  %v5224 = vunpack.c.l.b16 %v4292
  %v5225 = vunpack.c.l.b16 %v4293
  %v5226 = vunpack.c.l.b16 %v4294
  %v5227 = vunpack.c.l.b16 %v4295
  %v5228 = vunpack.c.l.b16 %v4296
  %v5229 = vunpack.c.l.b16 %v4297
  %v5230 = vunpack.c.l.b16 %v4298
  %v5231 = vunpack.c.l.b16 %v4299
  %v5232 = vunpack.c.l.b16 %v4300
  %v5233 = vunpack.c.l.b16 %v4301
  %v5234 = vunpack.c.l.b16 %v4302
  %v5235 = vunpack.c.l.b16 %v4303
  %v5236 = vunpack.c.l.b16 %v4304
  %v5237 = vunpack.c.l.b16 %v4305
  %v5238 = vunpack.c.l.b16 %v4306
  %v5239 = vunpack.c.l.b16 %v4307
  %v5240 = vunpack.c.l.b16 %v4308
  %v5241 = vunpack.c.l.b16 %v4309
  %v5242 = vunpack.c.l.b16 %v4310
  %v5243 = vunpack.c.l.b16 %v4311
  %v5244 = vunpack.c.l.b16 %v4312
  %v5245 = vunpack.c.l.b16 %v4313
  %v5246 = vunpack.c.l.b16 %v4314
  %v5247 = vunpack.c.l.b16 %v4315
  %v5248 = vunpack.c.l.b16 %v4316
  %v5249 = vunpack.c.l.b16 %v4317
  %v5250 = vunpack.c.l.b16 %v4318
  %v5251 = vunpack.c.l.b16 %v4319
  %v5252 = vunpack.c.l.b16 %v4320
  %v5253 = vunpack.c.l.b16 %v4321
  %v5254 = vunpack.c.l.b16 %v4322
  %v5255 = vunpack.c.l.b16 %v4323
  %v5256 = vunpack.c.l.b16 %v4324
  %v5257 = vunpack.c.l.b16 %v4325
  %v5258 = vunpack.c.l.b16 %v4326
  %v5259 = vunpack.c.l.b16 %v4327
  %v5260 = vunpack.c.l.b16 %v4328
  %v5261 = vunpack.c.l.b16 %v4329
  %v5262 = vunpack.c.l.b16 %v4330
  %v5263 = vunpack.c.l.b16 %v4331
  %v5264 = vunpack.c.l.b16 %v4332
  %v5265 = vunpack.c.l.b16 %v4333
  %v5266 = vunpack.c.l.b16 %v4334
  %v5267 = vunpack.c.l.b16 %v4335
  %v5268 = vunpack.c.l.b16 %v4336
  %v5269 = vunpack.c.l.b16 %v4337
  %v5270 = vunpack.c.l.b16 %v4338
  %v5271 = vunpack.c.l.b16 %v4339
  %v5272 = vunpack.c.l.b16 %v4340
  %v5273 = vunpack.c.l.b16 %v4341
  %v5274 = vunpack.c.l.b16 %v4342
  %v5275 = vunpack.c.l.b16 %v4343
  %v5276 = vunpack.c.l.b16 %v4344
  %v5277 = vunpack.c.l.b16 %v4345
  %v5278 = vunpack.c.l.b16 %v4346
  %v5279 = vunpack.c.l.b16 %v4347
  %v5280 = vunpack.c.l.b16 %v4348
  %v5281 = vunpack.c.l.b16 %v4349
  %v5282 = vunpack.c.l.b16 %v4350
  %v5283 = vunpack.c.l.b16 %v4351
  %v5284 = vunpack.c.l.b16 %v4352
  %v5285 = vunpack.c.l.b16 %v4353
  %v5286 = vunpack.c.l.b16 %v4354
  %v5287 = vunpack.c.l.b16 %v4355
  %v5288 = vunpack.c.l.b16 %v4356
  %v5289 = vunpack.c.l.b16 %v4357
  %v5290 = vunpack.c.l.b16 %v4358
  %v5291 = vunpack.c.l.b16 %v4359
  %v5292 = vunpack.c.l.b16 %v4360
  %v5293 = vunpack.c.l.b16 %v4361
  %v5294 = vunpack.c.l.b16 %v4362
  %v5295 = vunpack.c.l.b16 %v4363
  %v5296 = vunpack.c.l.b16 %v4364
  %v5297 = vunpack.c.l.b16 %v4365
  %v5298 = vunpack.c.l.b16 %v4366
  %v5299 = vunpack.c.l.b16 %v4367
  %v5300 = vunpack.c.l.b16 %v4368
  %v5301 = vunpack.c.l.b16 %v4369
  %v5302 = vunpack.c.l.b16 %v4370
  %v5303 = vunpack.c.l.b16 %v4371
  %v5304 = vunpack.c.l.b16 %v4372
  %v5305 = vunpack.c.l.b16 %v4373
  %v5306 = vunpack.c.l.b16 %v4374
  %v5307 = vunpack.c.l.b16 %v4375
  %v5308 = vunpack.c.l.b16 %v4376
  %v5309 = vunpack.c.l.b16 %v4377
  %v5310 = vunpack.c.l.b16 %v4378
  %v5311 = vunpack.c.l.b16 %v4379
  %v5312 = vunpack.c.l.b16 %v4380
  %v5313 = vunpack.c.l.b16 %v4381
  %v5314 = vunpack.c.l.b16 %v4382
  %v5315 = vunpack.c.l.b16 %v4383
  %v5316 = vunpack.c.l.b16 %v4384
  %v5317 = vunpack.c.l.b16 %v4385
  %v5318 = vunpack.c.l.b16 %v4386
  %v5319 = vunpack.c.l.b16 %v4387
  %v5320 = vunpack.c.l.b16 %v4388
  %v5321 = vunpack.c.l.b16 %v4389
  %v5322 = vunpack.c.l.b16 %v4390
  %v5323 = vunpack.c.l.b16 %v4391
  %v5324 = vunpack.c.l.b16 %v4392
  %v5325 = vunpack.c.l.b16 %v4393
  %v5326 = vunpack.c.l.b16 %v4394
  %v5327 = vunpack.c.l.b16 %v4395
  %v5328 = vunpack.c.l.b16 %v4396
  %v5329 = vunpack.c.l.b16 %v4397
  %v5330 = vunpack.c.l.b16 %v4398
  %v5331 = vunpack.c.l.b16 %v4399
  %v5332 = vunpack.c.l.b16 %v4400
  %v5333 = vunpack.c.l.b16 %v4401
  %v5334 = vunpack.c.l.b16 %v4402
  %v5335 = vunpack.c.l.b16 %v4403
  %v5336 = vunpack.c.l.b16 %v4404
  %v5337 = vunpack.c.l.b16 %v4405
  %v5338 = vunpack.c.l.b16 %v4406
  %v5339 = vunpack.c.l.b16 %v4407
  %v5340 = vunpack.c.l.b16 %v4408
  %v5341 = vunpack.c.l.b16 %v4409
  %v5342 = vunpack.c.l.b16 %v4410
  %v5343 = vunpack.c.l.b16 %v4411
  %v5344 = vunpack.c.l.b16 %v4412
  %v5345 = vunpack.c.l.b16 %v4413
  %v5346 = vunpack.c.l.b16 %v4414
  %v5347 = vunpack.c.l.b16 %v4415
  %v5348 = vunpack.c.l.b16 %v4416
  %v5349 = vunpack.c.l.b16 %v4417
  %v5350 = vunpack.c.l.b16 %v4418
  %v5351 = vunpack.c.l.b16 %v4419
  %v5352 = vunpack.c.l.b16 %v4420
  %v5353 = vunpack.c.l.b16 %v4421
  %v5354 = vunpack.c.l.b16 %v4422
  %v5355 = vunpack.c.l.b16 %v4423
  %v5356 = vunpack.c.l.b16 %v4424
  %v5357 = vunpack.c.l.b16 %v4425
  %v5358 = vunpack.c.l.b16 %v4426
  %v5359 = vunpack.c.l.b16 %v4427
  %v5360 = vunpack.c.l.b16 %v4428
  %v5361 = vunpack.c.l.b16 %v4429
  %v5362 = vunpack.c.l.b16 %v4430
  %v5363 = vunpack.c.l.b16 %v4431
  %v5364 = vunpack.c.l.b16 %v4432
  %v5365 = vunpack.c.l.b16 %v4433
  %v5366 = vunpack.c.l.b16 %v4434
  %v5367 = vunpack.c.l.b16 %v4435
  %v5368 = vunpack.c.l.b16 %v4436
  %v5369 = vunpack.c.l.b16 %v4437
  %v5370 = vunpack.c.l.b16 %v4438
  %v5371 = vunpack.c.l.b16 %v4439
  %v5372 = vunpack.c.l.b16 %v4440
  %v5373 = vunpack.c.l.b16 %v4441
  %v5374 = vunpack.c.l.b16 %v4442
  %v5375 = vunpack.c.l.b16 %v4443
  %v5376 = vunpack.c.l.b16 %v4444
  %v5377 = vunpack.c.l.b16 %v4445
  %v5378 = vunpack.c.l.b16 %v4446
  %v5379 = vunpack.c.l.b16 %v4447
  %v5380 = vunpack.c.l.b16 %v4448
  %v5381 = vunpack.c.l.b16 %v4449
  %v5382 = vunpack.c.l.b16 %v4450
  %v5383 = vunpack.c.l.b16 %v4451
  %v5384 = vunpack.c.l.b16 %v4452
  %v5385 = vunpack.c.l.b16 %v4453
  %v5386 = vunpack.c.l.b16 %v4454
  %v5387 = vunpack.c.l.b16 %v4455
  %v5388 = vunpack.c.l.b16 %v4456
  %v5389 = vunpack.c.l.b16 %v4457
  %v5390 = vunpack.c.l.b16 %v4458
  %v5391 = vunpack.c.l.b16 %v4459
  %v5392 = vunpack.c.l.b16 %v4460
  %v5393 = vunpack.c.l.b16 %v4461
  %v5394 = vunpack.c.l.b16 %v4462
  %v5395 = vunpack.c.l.b16 %v4463
  %v5396 = vunpack.c.l.b16 %v4464
  %v5397 = vunpack.c.l.b16 %v4465
  %v5398 = vunpack.c.l.b16 %v4466
  %v5399 = vunpack.c.l.b16 %v4467
  %v5400 = vunpack.c.l.b16 %v4468
  %v5401 = vunpack.c.l.b16 %v4469
  %v5402 = vunpack.c.l.b16 %v4470
  %v5403 = vunpack.c.l.b16 %v4471
  %v5404 = vunpack.c.l.b16 %v4472
  %v5405 = vunpack.c.l.b16 %v4473
  %v5406 = vunpack.c.l.b16 %v4474
  %v5407 = vunpack.c.l.b16 %v4475
  %v5408 = vunpack.c.l.b16 %v4476
  %v5409 = vunpack.c.l.b16 %v4477
  %v5410 = vunpack.c.l.b16 %v4478
  %v5411 = vunpack.c.l.b16 %v4479
  %v5412 = vunpack.c.l.b16 %v4480
  %v5413 = vunpack.c.l.b16 %v4481
  %v5414 = vunpack.c.l.b16 %v4482
  %v5415 = vunpack.c.l.b16 %v4483
  %v5416 = vunpack.c.l.b16 %v4484
  %v5417 = vunpack.c.l.b16 %v4485
  %v5418 = vunpack.c.l.b16 %v4486
  %v5419 = vunpack.c.l.b16 %v4487
  %v5420 = vunpack.c.l.b16 %v4488
  %v5421 = vunpack.c.l.b16 %v4489
  %v5422 = vunpack.c.l.b16 %v4490
  %v5423 = vunpack.c.l.b16 %v4491
  %v5424 = vunpack.c.l.b16 %v4492
  %v5425 = vunpack.c.l.b16 %v4493
  %v5426 = vunpack.c.l.b16 %v4494
  %v5427 = vunpack.c.l.b16 %v4495
  %v5428 = vunpack.c.l.b16 %v4496
  %v5429 = vunpack.c.l.b16 %v4497
  %v5430 = vunpack.c.l.b16 %v4498
  %v5431 = vunpack.c.l.b16 %v4499
  %v5432 = vunpack.c.l.b16 %v4500
  %v5433 = vunpack.c.l.b16 %v4501
  %v5434 = vunpack.c.l.b16 %v4502
  %v5435 = vunpack.c.l.b16 %v4503
  %v5436 = vunpack.c.l.b16 %v4504
  %v5437 = vunpack.c.l.b16 %v4505
  %v5438 = vunpack.c.l.b16 %v4506
  %v5439 = vunpack.c.l.b16 %v4507
  %v5440 = vunpack.c.l.b16 %v4508
  %v5441 = vunpack.c.l.b16 %v4509
  %v5442 = vunpack.c.l.b16 %v4510
  %v5443 = vunpack.c.l.b16 %v4511
  %v5444 = vunpack.c.l.b16 %v4512
  %v5445 = vunpack.c.l.b16 %v4513
  %v5446 = vunpack.c.l.b16 %v4514
  %v5447 = vunpack.c.l.b16 %v4515
  %v5448 = vunpack.c.l.b16 %v4516
  %v5449 = vunpack.c.l.b16 %v4517
  %v5450 = vunpack.c.l.b16 %v4518
  %v5451 = vunpack.c.l.b16 %v4519
  %v5452 = vunpack.c.l.b16 %v4520
  %v5453 = vunpack.c.l.b16 %v4521
  %v5454 = vunpack.c.l.b16 %v4522
  %v5455 = vunpack.c.l.b16 %v4523
  %v5456 = vunpack.c.l.b16 %v4524
  %v5457 = vunpack.c.l.b16 %v4525
  %v5458 = vunpack.c.l.b16 %v4526
  %v5459 = vunpack.c.l.b16 %v4527
  %v5460 = vunpack.c.l.b16 %v4528
  %v5461 = vunpack.c.l.b16 %v4529
  %v5462 = vunpack.c.l.b16 %v4530
  %v5463 = vunpack.c.l.b16 %v4531
  %v5464 = vunpack.c.l.b16 %v4532
  %v5465 = vunpack.c.l.b16 %v4533
  %v5466 = vunpack.c.l.b16 %v4534
  %v5467 = vunpack.c.l.b16 %v4535
  %v5468 = vunpack.c.l.b16 %v4536
  %v5469 = vunpack.c.l.b16 %v4537
  %v5470 = vunpack.c.l.b16 %v4538
  %v5471 = vunpack.c.l.b16 %v4539
  %v5472 = vunpack.c.l.b16 %v4540
  %v5473 = vunpack.c.l.b16 %v4541
  %v5474 = vunpack.c.l.b16 %v4542
  %v5475 = vunpack.c.l.b16 %v4543
  %v5476 = vunpack.c.l.b16 %v4544
  %v5477 = vunpack.c.l.b16 %v4545
  %v5478 = vunpack.c.l.b16 %v4546
  %v5479 = vunpack.c.l.b16 %v4547
  %v5480 = vunpack.c.l.b16 %v4548
  %v5481 = vunpack.c.l.b16 %v4549
  %v5482 = vunpack.c.l.b16 %v4550
  %v5483 = vunpack.c.l.b16 %v4551
  %v5484 = vunpack.c.l.b16 %v4552
  %v5485 = vunpack.c.l.b16 %v4553
  %v5486 = vunpack.c.l.b16 %v4554
  %v5487 = vunpack.c.l.b16 %v4555
  %v5488 = vunpack.c.l.b16 %v4556
  %v5489 = vunpack.c.l.b16 %v4557
  %v5490 = vunpack.c.l.b16 %v4558
  %v5491 = vunpack.c.l.b16 %v4559
  %v5492 = vunpack.c.l.b16 %v4560
  %v5493 = vunpack.c.l.b16 %v4561
  %v5494 = vunpack.c.l.b16 %v4562
  %v5495 = vunpack.c.l.b16 %v4563
  %v5496 = vunpack.c.l.b16 %v4564
  %v5497 = vunpack.c.l.b16 %v4565
  %v5498 = vunpack.c.l.b16 %v4566
  %v5499 = vunpack.c.l.b16 %v4567
  %v5500 = vunpack.c.l.b16 %v4568
  %v5501 = vunpack.c.l.b16 %v4569
  %v5502 = vunpack.c.l.b16 %v4570
  %v5503 = vunpack.c.l.b16 %v4571
  %v5504 = vunpack.c.l.b16 %v4572
  %v5505 = vunpack.c.l.b16 %v4573
  %v5506 = vunpack.c.l.b16 %v4574
  %v5507 = vunpack.c.l.b16 %v4575
  %v5508 = vunpack.c.l.b16 %v4576
  %v5509 = vunpack.c.l.b16 %v4577
  %v5510 = vunpack.c.l.b16 %v4578
  %v5511 = vunpack.c.l.b16 %v4579
  %v5512 = vunpack.c.l.b16 %v4580
  %v5513 = vunpack.c.l.b16 %v4581
  %v5514 = vunpack.c.l.b16 %v4582
  %v5515 = vunpack.c.l.b16 %v4583
  %v5516 = vunpack.c.l.b16 %v4584
  %v5517 = vunpack.c.l.b16 %v4585
  %v5518 = vunpack.c.l.b16 %v4586
  %v5519 = vunpack.c.l.b16 %v4587
  %v5520 = vunpack.c.l.b16 %v4588
  %v5521 = vunpack.c.l.b16 %v4589
  %v5522 = vunpack.c.l.b16 %v4590
  %v5523 = vunpack.c.l.b16 %v4591
  %v5524 = vunpack.c.l.b16 %v4592
  %v5525 = vunpack.c.l.b16 %v4593
  %v5526 = vunpack.c.l.b16 %v4594
  %v5527 = vunpack.c.l.b16 %v4595
  %v5528 = vunpack.c.l.b16 %v4596
  %v5529 = vunpack.c.l.b16 %v4597
  %v5530 = vunpack.c.l.b16 %v4598
  %v5531 = vunpack.c.l.b16 %v4599
  %v5532 = vunpack.c.l.b16 %v4600
  %v5533 = vunpack.c.l.b16 %v4601
  %v5534 = vunpack.c.l.b16 %v4602
  %v5535 = vunpack.c.l.b16 %v4603
  %v5536 = vunpack.c.l.b16 %v4604
  %v5537 = vunpack.c.l.b16 %v4605
  %v5538 = vunpack.c.l.b16 %v4606
  %v5539 = vunpack.c.l.b16 %v4607
  %v5540 = vunpack.c.l.b16 %v4608
  %v5541 = vunpack.c.l.b16 %v4609
  %v5542 = vunpack.c.l.b16 %v4610
  %v5543 = vunpack.c.l.b16 %v4611
  %v5544 = vunpack.c.l.b16 %v4612
  %v5545 = vunpack.c.l.b16 %v4613
  %v5546 = vunpack.c.l.b16 %v4614
  %v5547 = vunpack.c.l.b16 %v4615
  %v5548 = vunpack.c.l.b16 %v4616
  %v5549 = vunpack.c.l.b16 %v4617
  %v5550 = vunpack.c.l.b16 %v4618
  %v5551 = vunpack.c.l.b16 %v4619
  %v5552 = vunpack.c.l.b16 %v4620
  %v5553 = vunpack.c.l.b16 %v4621
  %v5554 = vunpack.c.l.b16 %v4622
  %v5555 = vunpack.c.l.b16 %v4623
  %v5556 = vunpack.c.l.b16 %v4624
  %v5557 = vunpack.c.l.b16 %v4625
  %v5558 = vunpack.c.l.b16 %v4626
  %v5559 = vunpack.c.l.b16 %v4627
  %v5560 = vunpack.c.l.b16 %v4628
  %v5561 = vunpack.c.l.b16 %v4629
  %v5562 = vunpack.c.l.b16 %v4630
  %v5563 = vunpack.c.l.b16 %v4631
  %v5564 = vunpack.c.l.b16 %v4632
  %v5565 = vunpack.c.l.b16 %v4633
  %v5566 = vunpack.c.l.b16 %v4634
  %v5567 = vunpack.c.l.b16 %v4635
  %v5568 = vunpack.c.l.b16 %v4636
  %v5569 = vunpack.c.l.b16 %v4637
  %v5570 = vunpack.c.l.b16 %v4638
  %v5571 = vunpack.c.l.b16 %v4639
  %v5572 = vunpack.c.l.b16 %v4640
  %v5573 = vunpack.c.l.b16 %v4641
  %v5574 = vpack.c.b16 %v5111, %v5110
  %v5575 = vpack.c.b16 %v5113, %v5112
  %v5576 = vpack.c.b16 %v5115, %v5114
  %v5577 = vpack.c.b16 %v5117, %v5116
  %v5578 = vpack.c.b16 %v5119, %v5118
  %v5579 = vpack.c.b16 %v5121, %v5120
  %v5580 = vpack.c.b16 %v5123, %v5122
  %v5581 = vpack.c.b16 %v5125, %v5124
  %v5582 = vpack.c.b16 %v5127, %v5126
  %v5583 = vpack.c.b16 %v5129, %v5128
  %v5584 = vpack.c.b16 %v5131, %v5130
  %v5585 = vpack.c.b16 %v5133, %v5132
  %v5586 = vpack.c.b16 %v5135, %v5134
  %v5587 = vpack.c.b16 %v5137, %v5136
  %v5588 = vpack.c.b16 %v5139, %v5138
  %v5589 = vpack.c.b16 %v5141, %v5140
  %v5590 = vpack.c.b16 %v5143, %v5142
  %v5591 = vpack.c.b16 %v5145, %v5144
  %v5592 = vpack.c.b16 %v5147, %v5146
  %v5593 = vpack.c.b16 %v5149, %v5148
  %v5594 = vpack.c.b16 %v5151, %v5150
  %v5595 = vpack.c.b16 %v5153, %v5152
  %v5596 = vpack.c.b16 %v5155, %v5154
  %v5597 = vpack.c.b16 %v5157, %v5156
  %v5598 = vpack.c.b16 %v5159, %v5158
  %v5599 = vpack.c.b16 %v5161, %v5160
  %v5600 = vpack.c.b16 %v5163, %v5162
  %v5601 = vpack.c.b16 %v5165, %v5164
  %v5602 = vpack.c.b16 %v5167, %v5166
  %v5603 = vpack.c.b16 %v5169, %v5168
  %v5604 = vpack.c.b16 %v5171, %v5170
  %v5605 = vpack.c.b16 %v5173, %v5172
  %v5606 = vpack.c.b16 %v5175, %v5174
  %v5607 = vpack.c.b16 %v5177, %v5176
  %v5608 = vpack.c.b16 %v5179, %v5178
  %v5609 = vpack.c.b16 %v5181, %v5180
  %v5610 = vpack.c.b16 %v5183, %v5182
  %v5611 = vpack.c.b16 %v5185, %v5184
  %v5612 = vpack.c.b16 %v5187, %v5186
  %v5613 = vpack.c.b16 %v5189, %v5188
  %v5614 = vpack.c.b16 %v5191, %v5190
  %v5615 = vpack.c.b16 %v5193, %v5192
  %v5616 = vpack.c.b16 %v5195, %v5194
  %v5617 = vpack.c.b16 %v5197, %v5196
  %v5618 = vpack.c.b16 %v5199, %v5198
  %v5619 = vpack.c.b16 %v5201, %v5200
  %v5620 = vpack.c.b16 %v5203, %v5202
  %v5621 = vpack.c.b16 %v5205, %v5204
  %v5622 = vpack.c.b16 %v5207, %v5206
  %v5623 = vpack.c.b16 %v5209, %v5208
  %v5624 = vpack.c.b16 %v5211, %v5210
  %v5625 = vpack.c.b16 %v5213, %v5212
  %v5626 = vpack.c.b16 %v5215, %v5214
  %v5627 = vpack.c.b16 %v5217, %v5216
  %v5628 = vpack.c.b16 %v5219, %v5218
  %v5629 = vpack.c.b16 %v5221, %v5220
  %v5630 = vpack.c.b16 %v5223, %v5222
  %v5631 = vpack.c.b16 %v5225, %v5224
  %v5632 = vpack.c.b16 %v5227, %v5226
  %v5633 = vpack.c.b16 %v5229, %v5228
  %v5634 = vpack.c.b16 %v5231, %v5230
  %v5635 = vpack.c.b16 %v5233, %v5232
  %v5636 = vpack.c.b16 %v5235, %v5234
  %v5637 = vpack.c.b16 %v5237, %v5236
  %v5638 = vpack.c.b16 %v5239, %v5238
  %v5639 = vpack.c.b16 %v5241, %v5240
  %v5640 = vpack.c.b16 %v5243, %v5242
  %v5641 = vpack.c.b16 %v5245, %v5244
  %v5642 = vpack.c.b16 %v5247, %v5246
  %v5643 = vpack.c.b16 %v5249, %v5248
  %v5644 = vpack.c.b16 %v5251, %v5250
  %v5645 = vpack.c.b16 %v5253, %v5252
  %v5646 = vpack.c.b16 %v5255, %v5254
  %v5647 = vpack.c.b16 %v5257, %v5256
  %v5648 = vpack.c.b16 %v5259, %v5258
  %v5649 = vpack.c.b16 %v5261, %v5260
  %v5650 = vpack.c.b16 %v5263, %v5262
  %v5651 = vpack.c.b16 %v5265, %v5264
  %v5652 = vpack.c.b16 %v5267, %v5266
  %v5653 = vpack.c.b16 %v5269, %v5268
  %v5654 = vpack.c.b16 %v5271, %v5270
  %v5655 = vpack.c.b16 %v5273, %v5272
  %v5656 = vpack.c.b16 %v5275, %v5274
  %v5657 = vpack.c.b16 %v5277, %v5276
  %v5658 = vpack.c.b16 %v5279, %v5278
  %v5659 = vpack.c.b16 %v5281, %v5280
  %v5660 = vpack.c.b16 %v5283, %v5282
  %v5661 = vpack.c.b16 %v5285, %v5284
  %v5662 = vpack.c.b16 %v5287, %v5286
  %v5663 = vpack.c.b16 %v5289, %v5288
  %v5664 = vpack.c.b16 %v5291, %v5290
  %v5665 = vpack.c.b16 %v5293, %v5292
  %v5666 = vpack.c.b16 %v5295, %v5294
  %v5667 = vpack.c.b16 %v5297, %v5296
  %v5668 = vpack.c.b16 %v5299, %v5298
  %v5669 = vpack.c.b16 %v5301, %v5300
  %v5670 = vpack.c.b16 %v5303, %v5302
  %v5671 = vpack.c.b16 %v5305, %v5304
  %v5672 = vpack.c.b16 %v5307, %v5306
  %v5673 = vpack.c.b16 %v5309, %v5308
  %v5674 = vpack.c.b16 %v5311, %v5310
  %v5675 = vpack.c.b16 %v5313, %v5312
  %v5676 = vpack.c.b16 %v5315, %v5314
  %v5677 = vpack.c.b16 %v5317, %v5316
  %v5678 = vpack.c.b16 %v5319, %v5318
  %v5679 = vpack.c.b16 %v5321, %v5320
  %v5680 = vpack.c.b16 %v5323, %v5322
  %v5681 = vpack.c.b16 %v5325, %v5324
  %v5682 = vpack.c.b16 %v5327, %v5326
  %v5683 = vpack.c.b16 %v5329, %v5328
  %v5684 = vpack.c.b16 %v5331, %v5330
  %v5685 = vpack.c.b16 %v5333, %v5332
  %v5686 = vpack.c.b16 %v5335, %v5334
  %v5687 = vpack.c.b16 %v5337, %v5336
  %v5688 = vpack.c.b16 %v5339, %v5338
  %v5689 = vpack.c.b16 %v5341, %v5340
  %v5690 = vpack.c.b16 %v5343, %v5342
  %v5691 = vpack.c.b16 %v5345, %v5344
  %v5692 = vpack.c.b16 %v5347, %v5346
  %v5693 = vpack.c.b16 %v5349, %v5348
  %v5694 = vpack.c.b16 %v5351, %v5350
  %v5695 = vpack.c.b16 %v5353, %v5352
  %v5696 = vpack.c.b16 %v5355, %v5354
  %v5697 = vpack.c.b16 %v5357, %v5356
  %v5698 = vpack.c.b16 %v5359, %v5358
  %v5699 = vpack.c.b16 %v5361, %v5360
  %v5700 = vpack.c.b16 %v5363, %v5362
  %v5701 = vpack.c.b16 %v5365, %v5364
  %v5702 = vpack.c.b16 %v5367, %v5366
  %v5703 = vpack.c.b16 %v5369, %v5368
  %v5704 = vpack.c.b16 %v5371, %v5370
  %v5705 = vpack.c.b16 %v5373, %v5372
  %v5706 = vpack.c.b16 %v5375, %v5374
  %v5707 = vpack.c.b16 %v5377, %v5376
  %v5708 = vpack.c.b16 %v5379, %v5378
  %v5709 = vpack.c.b16 %v5381, %v5380
  %v5710 = vpack.c.b16 %v5383, %v5382
  %v5711 = vpack.c.b16 %v5385, %v5384
  %v5712 = vpack.c.b16 %v5387, %v5386
  %v5713 = vpack.c.b16 %v5389, %v5388
  %v5714 = vpack.c.b16 %v5391, %v5390
  %v5715 = vpack.c.b16 %v5393, %v5392
  %v5716 = vpack.c.b16 %v5395, %v5394
  %v5717 = vpack.c.b16 %v5397, %v5396
  %v5718 = vpack.c.b16 %v5399, %v5398
  %v5719 = vpack.c.b16 %v5401, %v5400
  %v5720 = vpack.c.b16 %v5403, %v5402
  %v5721 = vpack.c.b16 %v5405, %v5404
  %v5722 = vpack.c.b16 %v5407, %v5406
  %v5723 = vpack.c.b16 %v5409, %v5408
  %v5724 = vpack.c.b16 %v5411, %v5410
  %v5725 = vpack.c.b16 %v5413, %v5412
  %v5726 = vpack.c.b16 %v5415, %v5414
  %v5727 = vpack.c.b16 %v5417, %v5416
  %v5728 = vpack.c.b16 %v5419, %v5418
  %v5729 = vpack.c.b16 %v5421, %v5420
  %v5730 = vpack.c.b16 %v5423, %v5422
  %v5731 = vpack.c.b16 %v5425, %v5424
  %v5732 = vpack.c.b16 %v5427, %v5426
  %v5733 = vpack.c.b16 %v5429, %v5428
  %v5734 = vpack.c.b16 %v5431, %v5430
  %v5735 = vpack.c.b16 %v5433, %v5432
  %v5736 = vpack.c.b16 %v5435, %v5434
  %v5737 = vpack.c.b16 %v5437, %v5436
  %v5738 = vpack.c.b16 %v5439, %v5438
  %v5739 = vpack.c.b16 %v5441, %v5440
  %v5740 = vpack.c.b16 %v5443, %v5442
  %v5741 = vpack.c.b16 %v5445, %v5444
  %v5742 = vpack.c.b16 %v5447, %v5446
  %v5743 = vpack.c.b16 %v5449, %v5448
  %v5744 = vpack.c.b16 %v5451, %v5450
  %v5745 = vpack.c.b16 %v5453, %v5452
  %v5746 = vpack.c.b16 %v5455, %v5454
  %v5747 = vpack.c.b16 %v5457, %v5456
  %v5748 = vpack.c.b16 %v5459, %v5458
  %v5749 = vpack.c.b16 %v5461, %v5460
  %v5750 = vpack.c.b16 %v5463, %v5462
  %v5751 = vpack.c.b16 %v5465, %v5464
  %v5752 = vpack.c.b16 %v5467, %v5466
  %v5753 = vpack.c.b16 %v5469, %v5468
  %v5754 = vpack.c.b16 %v5471, %v5470
  %v5755 = vpack.c.b16 %v5473, %v5472
  %v5756 = vpack.c.b16 %v5475, %v5474
  %v5757 = vpack.c.b16 %v5477, %v5476
  %v5758 = vpack.c.b16 %v5479, %v5478
  %v5759 = vpack.c.b16 %v5481, %v5480
  %v5760 = vpack.c.b16 %v5483, %v5482
  %v5761 = vpack.c.b16 %v5485, %v5484
  %v5762 = vpack.c.b16 %v5487, %v5486
  %v5763 = vpack.c.b16 %v5489, %v5488
  %v5764 = vpack.c.b16 %v5491, %v5490
  %v5765 = vpack.c.b16 %v5493, %v5492
  %v5766 = vpack.c.b16 %v5495, %v5494
  %v5767 = vpack.c.b16 %v5497, %v5496
  %v5768 = vpack.c.b16 %v5499, %v5498
  %v5769 = vpack.c.b16 %v5501, %v5500
  %v5770 = vpack.c.b16 %v5503, %v5502
  %v5771 = vpack.c.b16 %v5505, %v5504
  %v5772 = vpack.c.b16 %v5507, %v5506
  %v5773 = vpack.c.b16 %v5509, %v5508
  %v5774 = vpack.c.b16 %v5511, %v5510
  %v5775 = vpack.c.b16 %v5513, %v5512
  %v5776 = vpack.c.b16 %v5515, %v5514
  %v5777 = vpack.c.b16 %v5517, %v5516
  %v5778 = vpack.c.b16 %v5519, %v5518
  %v5779 = vpack.c.b16 %v5521, %v5520
  %v5780 = vpack.c.b16 %v5523, %v5522
  %v5781 = vpack.c.b16 %v5525, %v5524
  %v5782 = vpack.c.b16 %v5527, %v5526
  %v5783 = vpack.c.b16 %v5529, %v5528
  %v5784 = vpack.c.b16 %v5531, %v5530
  %v5785 = vpack.c.b16 %v5533, %v5532
  %v5786 = vpack.c.b16 %v5535, %v5534
  %v5787 = vpack.c.b16 %v5537, %v5536
  %v5788 = vpack.c.b16 %v5539, %v5538
  %v5789 = vpack.c.b16 %v5541, %v5540
  %v5790 = vpack.c.b16 %v5543, %v5542
  %v5791 = vpack.c.b16 %v5545, %v5544
  %v5792 = vpack.c.b16 %v5547, %v5546
  %v5793 = vpack.c.b16 %v5549, %v5548
  %v5794 = vpack.c.b16 %v5551, %v5550
  %v5795 = vpack.c.b16 %v5553, %v5552
  %v5796 = vpack.c.b16 %v5555, %v5554
  %v5797 = vpack.c.b16 %v5557, %v5556
  %v5798 = vpack.c.b16 %v5559, %v5558
  %v5799 = vpack.c.b16 %v5561, %v5560
  %v5800 = vpack.c.b16 %v5563, %v5562
  %v5801 = vpack.c.b16 %v5565, %v5564
  %v5802 = vpack.c.b16 %v5567, %v5566
  %v5803 = vpack.c.b16 %v5569, %v5568
  %v5804 = vpack.c.b16 %v5571, %v5570
  %v5805 = vpack.c.b16 %v5573, %v5572
  %6038 = vmatpush.bf16.msra.mxu0 %v5581
  %6039 = vmatpush.bf16.msra.mxu0 %v5580
  %6040 = vmatpush.bf16.msra.mxu0 %v5579
  %6041 = vmatpush.bf16.msra.mxu0 %v5578
  %6042 = vmatpush.bf16.msra.mxu0 %v5577
  %6043 = vmatpush.bf16.msra.mxu0 %v5576
  %6044 = vmatpush.bf16.msra.mxu0 %v5575
  %6045 = vmatpush.bf16.msra.mxu0 %v5574
  %6046 = vmatmul.bf16.gmra.mxu0 %v4149
  %v6047 = vpop.f32.mrf.mxu0
  %v6048 = vadd.f32 %v4644, %v6047
  %v6049 = vpop.f32.mrf.mxu0
  %6050 = vdwg.mxu0
  %6051 = vmatpush.bf16.msra.mxu0 %v5589
  %6052 = vmatpush.bf16.msra.mxu0 %v5588
  %6053 = vmatpush.bf16.msra.mxu0 %v5587
  %6054 = vmatpush.bf16.msra.mxu0 %v5586
  %6055 = vmatpush.bf16.msra.mxu0 %v5585
  %6056 = vmatpush.bf16.msra.mxu0 %v5584
  %6057 = vmatpush.bf16.msra.mxu0 %v5583
  %6058 = vmatpush.bf16.msra.mxu0 %v5582
  %6059 = vmatmul.bf16.gmra.mxu0 %v4150
  %v6060 = vpop.f32.mrf.mxu0
  %v6061 = vadd.f32 %v6048, %v6060
  %v6062 = vpop.f32.mrf.mxu0
  %6063 = vdwg.mxu0
  %6064 = vmatpush.bf16.msra.mxu0 %v5597
  %6065 = vmatpush.bf16.msra.mxu0 %v5596
  %6066 = vmatpush.bf16.msra.mxu0 %v5595
  %6067 = vmatpush.bf16.msra.mxu0 %v5594
  %6068 = vmatpush.bf16.msra.mxu0 %v5593
  %6069 = vmatpush.bf16.msra.mxu0 %v5592
  %6070 = vmatpush.bf16.msra.mxu0 %v5591
  %6071 = vmatpush.bf16.msra.mxu0 %v5590
  %6072 = vmatmul.bf16.gmra.mxu0 %v4151
  %v6073 = vpop.f32.mrf.mxu0
  %v6074 = vadd.f32 %v6061, %v6073
  %v6075 = vpop.f32.mrf.mxu0
  %6076 = vdwg.mxu0
  %6077 = vmatpush.bf16.msra.mxu0 %v5605
  %6078 = vmatpush.bf16.msra.mxu0 %v5604
  %6079 = vmatpush.bf16.msra.mxu0 %v5603
  %6080 = vmatpush.bf16.msra.mxu0 %v5602
  %6081 = vmatpush.bf16.msra.mxu0 %v5601
  %6082 = vmatpush.bf16.msra.mxu0 %v5600
  %6083 = vmatpush.bf16.msra.mxu0 %v5599
  %6084 = vmatpush.bf16.msra.mxu0 %v5598
  %6085 = vmatmul.bf16.gmra.mxu0 %v4152
  %v6086 = vpop.f32.mrf.mxu0
  %v6087 = vadd.f32 %v6074, %v6086
  %v6088 = vpop.f32.mrf.mxu0
  %6089 = vdwg.mxu0
  %6090 = vmatpush.bf16.msra.mxu0 %v5613
  %6091 = vmatpush.bf16.msra.mxu0 %v5612
  %6092 = vmatpush.bf16.msra.mxu0 %v5611
  %6093 = vmatpush.bf16.msra.mxu0 %v5610
  %6094 = vmatpush.bf16.msra.mxu0 %v5609
  %6095 = vmatpush.bf16.msra.mxu0 %v5608
  %6096 = vmatpush.bf16.msra.mxu0 %v5607
  %6097 = vmatpush.bf16.msra.mxu0 %v5606
  %6098 = vmatmul.bf16.gmra.mxu0 %v4153
  %v6099 = vpop.f32.mrf.mxu0
  %v6100 = vadd.f32 %v6087, %v6099
  %v6101 = vpop.f32.mrf.mxu0
  %6102 = vdwg.mxu0
  %6103 = vmatpush.bf16.msra.mxu0 %v5621
  %6104 = vmatpush.bf16.msra.mxu0 %v5620
  %6105 = vmatpush.bf16.msra.mxu0 %v5619
  %6106 = vmatpush.bf16.msra.mxu0 %v5618
  %6107 = vmatpush.bf16.msra.mxu0 %v5617
  %6108 = vmatpush.bf16.msra.mxu0 %v5616
  %6109 = vmatpush.bf16.msra.mxu0 %v5615
  %6110 = vmatpush.bf16.msra.mxu0 %v5614
  %6111 = vmatmul.bf16.gmra.mxu0 %v4154
  %v6112 = vpop.f32.mrf.mxu0
  %v6113 = vadd.f32 %v6100, %v6112
  %v6114 = vpop.f32.mrf.mxu0
  %6115 = vdwg.mxu0
  %6116 = vmatpush.bf16.msra.mxu0 %v5629
  %6117 = vmatpush.bf16.msra.mxu0 %v5628
  %6118 = vmatpush.bf16.msra.mxu0 %v5627
  %6119 = vmatpush.bf16.msra.mxu0 %v5626
  %6120 = vmatpush.bf16.msra.mxu0 %v5625
  %6121 = vmatpush.bf16.msra.mxu0 %v5624
  %6122 = vmatpush.bf16.msra.mxu0 %v5623
  %6123 = vmatpush.bf16.msra.mxu0 %v5622
  %6124 = vmatmul.bf16.gmra.mxu0 %v4155
  %v6125 = vpop.f32.mrf.mxu0
  %v6126 = vadd.f32 %v6113, %v6125
  %v6127 = vpop.f32.mrf.mxu0
  %6128 = vdwg.mxu0
  %6129 = vmatpush.bf16.msra.mxu0 %v5637
  %6130 = vmatpush.bf16.msra.mxu0 %v5636
  %6131 = vmatpush.bf16.msra.mxu0 %v5635
  %6132 = vmatpush.bf16.msra.mxu0 %v5634
  %6133 = vmatpush.bf16.msra.mxu0 %v5633
  %6134 = vmatpush.bf16.msra.mxu0 %v5632
  %6135 = vmatpush.bf16.msra.mxu0 %v5631
  %6136 = vmatpush.bf16.msra.mxu0 %v5630
  %6137 = vmatmul.bf16.gmra.mxu0 %v4156
  %v6138 = vpop.f32.mrf.mxu0
  %v6139 = vadd.f32 %v6126, %v6138
  %v6140 = vpop.f32.mrf.mxu0
  %6141 = vdwg.mxu0
  %6142 = vmatpush.bf16.msra.mxu0 %v5645
  %6143 = vmatpush.bf16.msra.mxu0 %v5644
  %6144 = vmatpush.bf16.msra.mxu0 %v5643
  %6145 = vmatpush.bf16.msra.mxu0 %v5642
  %6146 = vmatpush.bf16.msra.mxu0 %v5641
  %6147 = vmatpush.bf16.msra.mxu0 %v5640
  %6148 = vmatpush.bf16.msra.mxu0 %v5639
  %6149 = vmatpush.bf16.msra.mxu0 %v5638
  %6150 = vmatmul.bf16.gmra.mxu0 %v4157
  %v6151 = vpop.f32.mrf.mxu0
  %v6152 = vadd.f32 %v6139, %v6151
  %v6153 = vpop.f32.mrf.mxu0
  %6154 = vdwg.mxu0
  %6155 = vmatpush.bf16.msra.mxu0 %v5653
  %6156 = vmatpush.bf16.msra.mxu0 %v5652
  %6157 = vmatpush.bf16.msra.mxu0 %v5651
  %6158 = vmatpush.bf16.msra.mxu0 %v5650
  %6159 = vmatpush.bf16.msra.mxu0 %v5649
  %6160 = vmatpush.bf16.msra.mxu0 %v5648
  %6161 = vmatpush.bf16.msra.mxu0 %v5647
  %6162 = vmatpush.bf16.msra.mxu0 %v5646
  %6163 = vmatmul.bf16.gmra.mxu0 %v4158
  %v6164 = vpop.f32.mrf.mxu0
  %v6165 = vadd.f32 %v6152, %v6164
  %v6166 = vpop.f32.mrf.mxu0
  %6167 = vdwg.mxu0
  %6168 = vmatpush.bf16.msra.mxu0 %v5661
  %6169 = vmatpush.bf16.msra.mxu0 %v5660
  %6170 = vmatpush.bf16.msra.mxu0 %v5659
  %6171 = vmatpush.bf16.msra.mxu0 %v5658
  %6172 = vmatpush.bf16.msra.mxu0 %v5657
  %6173 = vmatpush.bf16.msra.mxu0 %v5656
  %6174 = vmatpush.bf16.msra.mxu0 %v5655
  %6175 = vmatpush.bf16.msra.mxu0 %v5654
  %6176 = vmatmul.bf16.gmra.mxu0 %v4159
  %v6177 = vpop.f32.mrf.mxu0
  %v6178 = vadd.f32 %v6165, %v6177
  %v6179 = vpop.f32.mrf.mxu0
  %6180 = vdwg.mxu0
  %6181 = vmatpush.bf16.msra.mxu0 %v5669
  %6182 = vmatpush.bf16.msra.mxu0 %v5668
  %6183 = vmatpush.bf16.msra.mxu0 %v5667
  %6184 = vmatpush.bf16.msra.mxu0 %v5666
  %6185 = vmatpush.bf16.msra.mxu0 %v5665
  %6186 = vmatpush.bf16.msra.mxu0 %v5664
  %6187 = vmatpush.bf16.msra.mxu0 %v5663
  %6188 = vmatpush.bf16.msra.mxu0 %v5662
  %6189 = vmatmul.bf16.gmra.mxu0 %v4160
  %v6190 = vpop.f32.mrf.mxu0
  %v6191 = vadd.f32 %v6178, %v6190
  %v6192 = vpop.f32.mrf.mxu0
  %6193 = vdwg.mxu0
  %6194 = vmatpush.bf16.msra.mxu0 %v5677
  %6195 = vmatpush.bf16.msra.mxu0 %v5676
  %6196 = vmatpush.bf16.msra.mxu0 %v5675
  %6197 = vmatpush.bf16.msra.mxu0 %v5674
  %6198 = vmatpush.bf16.msra.mxu0 %v5673
  %6199 = vmatpush.bf16.msra.mxu0 %v5672
  %6200 = vmatpush.bf16.msra.mxu0 %v5671
  %6201 = vmatpush.bf16.msra.mxu0 %v5670
  %6202 = vmatmul.bf16.gmra.mxu0 %v4161
  %v6203 = vpop.f32.mrf.mxu0
  %v6204 = vadd.f32 %v6191, %v6203
  %v6205 = vpop.f32.mrf.mxu0
  %6206 = vdwg.mxu0
  %6207 = vmatpush.bf16.msra.mxu0 %v5685
  %6208 = vmatpush.bf16.msra.mxu0 %v5684
  %6209 = vmatpush.bf16.msra.mxu0 %v5683
  %6210 = vmatpush.bf16.msra.mxu0 %v5682
  %6211 = vmatpush.bf16.msra.mxu0 %v5681
  %6212 = vmatpush.bf16.msra.mxu0 %v5680
  %6213 = vmatpush.bf16.msra.mxu0 %v5679
  %6214 = vmatpush.bf16.msra.mxu0 %v5678
  %6215 = vmatmul.bf16.gmra.mxu0 %v4162
  %v6216 = vpop.f32.mrf.mxu0
  %v6217 = vadd.f32 %v6204, %v6216
  %v6218 = vpop.f32.mrf.mxu0
  %6219 = vdwg.mxu0
  %6220 = vmatpush.bf16.msra.mxu0 %v5693
  %6221 = vmatpush.bf16.msra.mxu0 %v5692
  %6222 = vmatpush.bf16.msra.mxu0 %v5691
  %6223 = vmatpush.bf16.msra.mxu0 %v5690
  %6224 = vmatpush.bf16.msra.mxu0 %v5689
  %6225 = vmatpush.bf16.msra.mxu0 %v5688
  %6226 = vmatpush.bf16.msra.mxu0 %v5687
  %6227 = vmatpush.bf16.msra.mxu0 %v5686
  %6228 = vmatmul.bf16.gmra.mxu0 %v4163
  %v6229 = vpop.f32.mrf.mxu0
  %v6230 = vadd.f32 %v6217, %v6229
  %v6231 = vpop.f32.mrf.mxu0
  %6232 = vdwg.mxu0
  %6233 = vmatpush.bf16.msra.mxu0 %v5701
  %6234 = vmatpush.bf16.msra.mxu0 %v5700
  %6235 = vmatpush.bf16.msra.mxu0 %v5699
  %6236 = vmatpush.bf16.msra.mxu0 %v5698
  %6237 = vmatpush.bf16.msra.mxu0 %v5697
  %6238 = vmatpush.bf16.msra.mxu0 %v5696
  %6239 = vmatpush.bf16.msra.mxu0 %v5695
  %6240 = vmatpush.bf16.msra.mxu0 %v5694
  %6241 = vmatmul.bf16.gmra.mxu0 %v4164
  %v6242 = vpop.f32.mrf.mxu0
  %v6243 = vadd.f32 %v6230, %v6242
  %v6244 = vpop.f32.mrf.mxu0
  %6245 = vdwg.mxu0
  %6246 = vmatpush.bf16.msra.mxu0 %v5709
  %6247 = vmatpush.bf16.msra.mxu0 %v5708
  %6248 = vmatpush.bf16.msra.mxu0 %v5707
  %6249 = vmatpush.bf16.msra.mxu0 %v5706
  %6250 = vmatpush.bf16.msra.mxu0 %v5705
  %6251 = vmatpush.bf16.msra.mxu0 %v5704
  %6252 = vmatpush.bf16.msra.mxu0 %v5703
  %6253 = vmatpush.bf16.msra.mxu0 %v5702
  %6254 = vmatmul.bf16.gmra.mxu0 %v4165
  %v6255 = vpop.f32.mrf.mxu0
  %v6256 = vadd.f32 %v6243, %v6255
  %v6257 = vpop.f32.mrf.mxu0
  %6258 = vdwg.mxu0
  %6259 = vmatpush.bf16.msra.mxu0 %v5717
  %6260 = vmatpush.bf16.msra.mxu0 %v5716
  %6261 = vmatpush.bf16.msra.mxu0 %v5715
  %6262 = vmatpush.bf16.msra.mxu0 %v5714
  %6263 = vmatpush.bf16.msra.mxu0 %v5713
  %6264 = vmatpush.bf16.msra.mxu0 %v5712
  %6265 = vmatpush.bf16.msra.mxu0 %v5711
  %6266 = vmatpush.bf16.msra.mxu0 %v5710
  %6267 = vmatmul.bf16.gmra.mxu0 %v4166
  %v6268 = vpop.f32.mrf.mxu0
  %v6269 = vadd.f32 %v6256, %v6268
  %v6270 = vpop.f32.mrf.mxu0
  %6271 = vdwg.mxu0
  %6272 = vmatpush.bf16.msra.mxu0 %v5725
  %6273 = vmatpush.bf16.msra.mxu0 %v5724
  %6274 = vmatpush.bf16.msra.mxu0 %v5723
  %6275 = vmatpush.bf16.msra.mxu0 %v5722
  %6276 = vmatpush.bf16.msra.mxu0 %v5721
  %6277 = vmatpush.bf16.msra.mxu0 %v5720
  %6278 = vmatpush.bf16.msra.mxu0 %v5719
  %6279 = vmatpush.bf16.msra.mxu0 %v5718
  %6280 = vmatmul.bf16.gmra.mxu0 %v4167
  %v6281 = vpop.f32.mrf.mxu0
  %v6282 = vadd.f32 %v6269, %v6281
  %v6283 = vpop.f32.mrf.mxu0
  %6284 = vdwg.mxu0
  %6285 = vmatpush.bf16.msra.mxu0 %v5733
  %6286 = vmatpush.bf16.msra.mxu0 %v5732
  %6287 = vmatpush.bf16.msra.mxu0 %v5731
  %6288 = vmatpush.bf16.msra.mxu0 %v5730
  %6289 = vmatpush.bf16.msra.mxu0 %v5729
  %6290 = vmatpush.bf16.msra.mxu0 %v5728
  %6291 = vmatpush.bf16.msra.mxu0 %v5727
  %6292 = vmatpush.bf16.msra.mxu0 %v5726
  %6293 = vmatmul.bf16.gmra.mxu0 %v4168
  %v6294 = vpop.f32.mrf.mxu0
  %v6295 = vadd.f32 %v6282, %v6294
  %v6296 = vpop.f32.mrf.mxu0
  %6297 = vdwg.mxu0
  %6298 = vmatpush.bf16.msra.mxu0 %v5741
  %6299 = vmatpush.bf16.msra.mxu0 %v5740
  %6300 = vmatpush.bf16.msra.mxu0 %v5739
  %6301 = vmatpush.bf16.msra.mxu0 %v5738
  %6302 = vmatpush.bf16.msra.mxu0 %v5737
  %6303 = vmatpush.bf16.msra.mxu0 %v5736
  %6304 = vmatpush.bf16.msra.mxu0 %v5735
  %6305 = vmatpush.bf16.msra.mxu0 %v5734
  %6306 = vmatmul.bf16.gmra.mxu0 %v4169
  %v6307 = vpop.f32.mrf.mxu0
  %v6308 = vadd.f32 %v6295, %v6307
  %v6309 = vpop.f32.mrf.mxu0
  %6310 = vdwg.mxu0
  %6311 = vmatpush.bf16.msra.mxu0 %v5749
  %6312 = vmatpush.bf16.msra.mxu0 %v5748
  %6313 = vmatpush.bf16.msra.mxu0 %v5747
  %6314 = vmatpush.bf16.msra.mxu0 %v5746
  %6315 = vmatpush.bf16.msra.mxu0 %v5745
  %6316 = vmatpush.bf16.msra.mxu0 %v5744
  %6317 = vmatpush.bf16.msra.mxu0 %v5743
  %6318 = vmatpush.bf16.msra.mxu0 %v5742
  %6319 = vmatmul.bf16.gmra.mxu0 %v4170
  %v6320 = vpop.f32.mrf.mxu0
  %v6321 = vadd.f32 %v6308, %v6320
  %v6322 = vpop.f32.mrf.mxu0
  %6323 = vdwg.mxu0
  %6324 = vmatpush.bf16.msra.mxu0 %v5757
  %6325 = vmatpush.bf16.msra.mxu0 %v5756
  %6326 = vmatpush.bf16.msra.mxu0 %v5755
  %6327 = vmatpush.bf16.msra.mxu0 %v5754
  %6328 = vmatpush.bf16.msra.mxu0 %v5753
  %6329 = vmatpush.bf16.msra.mxu0 %v5752
  %6330 = vmatpush.bf16.msra.mxu0 %v5751
  %6331 = vmatpush.bf16.msra.mxu0 %v5750
  %6332 = vmatmul.bf16.gmra.mxu0 %v4171
  %v6333 = vpop.f32.mrf.mxu0
  %v6334 = vadd.f32 %v6321, %v6333
  %v6335 = vpop.f32.mrf.mxu0
  %6336 = vdwg.mxu0
  %6337 = vmatpush.bf16.msra.mxu0 %v5765
  %6338 = vmatpush.bf16.msra.mxu0 %v5764
  %6339 = vmatpush.bf16.msra.mxu0 %v5763
  %6340 = vmatpush.bf16.msra.mxu0 %v5762
  %6341 = vmatpush.bf16.msra.mxu0 %v5761
  %6342 = vmatpush.bf16.msra.mxu0 %v5760
  %6343 = vmatpush.bf16.msra.mxu0 %v5759
  %6344 = vmatpush.bf16.msra.mxu0 %v5758
  %6345 = vmatmul.bf16.gmra.mxu0 %v4172
  %v6346 = vpop.f32.mrf.mxu0
  %v6347 = vadd.f32 %v6334, %v6346
  %v6348 = vpop.f32.mrf.mxu0
  %6349 = vdwg.mxu0
  %6350 = vmatpush.bf16.msra.mxu0 %v5773
  %6351 = vmatpush.bf16.msra.mxu0 %v5772
  %6352 = vmatpush.bf16.msra.mxu0 %v5771
  %6353 = vmatpush.bf16.msra.mxu0 %v5770
  %6354 = vmatpush.bf16.msra.mxu0 %v5769
  %6355 = vmatpush.bf16.msra.mxu0 %v5768
  %6356 = vmatpush.bf16.msra.mxu0 %v5767
  %6357 = vmatpush.bf16.msra.mxu0 %v5766
  %6358 = vmatmul.bf16.gmra.mxu0 %v4173
  %v6359 = vpop.f32.mrf.mxu0
  %v6360 = vadd.f32 %v6347, %v6359
  %v6361 = vpop.f32.mrf.mxu0
  %6362 = vdwg.mxu0
  %6363 = vmatpush.bf16.msra.mxu0 %v5781
  %6364 = vmatpush.bf16.msra.mxu0 %v5780
  %6365 = vmatpush.bf16.msra.mxu0 %v5779
  %6366 = vmatpush.bf16.msra.mxu0 %v5778
  %6367 = vmatpush.bf16.msra.mxu0 %v5777
  %6368 = vmatpush.bf16.msra.mxu0 %v5776
  %6369 = vmatpush.bf16.msra.mxu0 %v5775
  %6370 = vmatpush.bf16.msra.mxu0 %v5774
  %6371 = vmatmul.bf16.gmra.mxu0 %v4174
  %v6372 = vpop.f32.mrf.mxu0
  %v6373 = vadd.f32 %v6360, %v6372
  %v6374 = vpop.f32.mrf.mxu0
  %6375 = vdwg.mxu0
  %6376 = vmatpush.bf16.msra.mxu0 %v5789
  %6377 = vmatpush.bf16.msra.mxu0 %v5788
  %6378 = vmatpush.bf16.msra.mxu0 %v5787
  %6379 = vmatpush.bf16.msra.mxu0 %v5786
  %6380 = vmatpush.bf16.msra.mxu0 %v5785
  %6381 = vmatpush.bf16.msra.mxu0 %v5784
  %6382 = vmatpush.bf16.msra.mxu0 %v5783
  %6383 = vmatpush.bf16.msra.mxu0 %v5782
  %6384 = vmatmul.bf16.gmra.mxu0 %v4175
  %v6385 = vpop.f32.mrf.mxu0
  %v6386 = vadd.f32 %v6373, %v6385
  %v6387 = vpop.f32.mrf.mxu0
  %6388 = vdwg.mxu0
  %6389 = vmatpush.bf16.msra.mxu0 %v5797
  %6390 = vmatpush.bf16.msra.mxu0 %v5796
  %6391 = vmatpush.bf16.msra.mxu0 %v5795
  %6392 = vmatpush.bf16.msra.mxu0 %v5794
  %6393 = vmatpush.bf16.msra.mxu0 %v5793
  %6394 = vmatpush.bf16.msra.mxu0 %v5792
  %6395 = vmatpush.bf16.msra.mxu0 %v5791
  %6396 = vmatpush.bf16.msra.mxu0 %v5790
  %6397 = vmatmul.bf16.gmra.mxu0 %v4176
  %v6398 = vpop.f32.mrf.mxu0
  %v6399 = vadd.f32 %v6386, %v6398
  %v6400 = vpop.f32.mrf.mxu0
  %6401 = vdwg.mxu0
  %6402 = vmatpush.bf16.msra.mxu0 %v5805
  %6403 = vmatpush.bf16.msra.mxu0 %v5804
  %6404 = vmatpush.bf16.msra.mxu0 %v5803
  %6405 = vmatpush.bf16.msra.mxu0 %v5802
  %6406 = vmatpush.bf16.msra.mxu0 %v5801
  %6407 = vmatpush.bf16.msra.mxu0 %v5800
  %6408 = vmatpush.bf16.msra.mxu0 %v5799
  %6409 = vmatpush.bf16.msra.mxu0 %v5798
  %6410 = vmatmul.bf16.gmra.mxu0 %v4177
  %v6411 = vpop.f32.mrf.mxu0
  %v6412 = vadd.f32 %v6399, %v6411
  %v6413 = vpop.f32.mrf.mxu0
  %6414 = vdwg.mxu0
  %v6415 = vmax.f32 %v6412, 0.0
  %v6416 = vpack.c.bf16 %v6415, %v6415
  %v6417 = vld [vmem:[%s7] sm:$0xf]
  %v6418 = vld [vmem:[%s7 + $0x4] sm:$0xf]
  %v6419 = vld [vmem:[%s7 + $0x8] sm:$0xf]
  %v6420 = vld [vmem:[%s7 + $0xc] sm:$0xf]
  %v6421 = vld [vmem:[%s7 + $0x10] sm:$0xf]
  %v6422 = vld [vmem:[%s7 + $0x14] sm:$0xf]
  %v6423 = vld [vmem:[%s7 + $0x18] sm:$0xf]
  %v6424 = vld [vmem:[%s7 + $0x1c] sm:$0xf]
  %v6425 = vld [vmem:[%s7 + $0x20] sm:$0xf]
  %v6426 = vld [vmem:[%s7 + $0x24] sm:$0xf]
  %v6427 = vld [vmem:[%s7 + $0x28] sm:$0xf]
  %v6428 = vld [vmem:[%s7 + $0x2c] sm:$0xf]
  %v6429 = vld [vmem:[%s7 + $0x30] sm:$0xf]
  %v6430 = vld [vmem:[%s7 + $0x34] sm:$0xf]
  %v6431 = vld [vmem:[%s7 + $0x38] sm:$0xf]
  %v6432 = vld [vmem:[%s8] sm:$0x1]
  %v6434 = vperm.slane %v6432, 0
  %v6451 = vunpack.c.l.b16 %v6417
  %v6452 = vunpack.c.l.b16 %v6418
  %v6453 = vunpack.c.l.b16 %v6419
  %v6454 = vunpack.c.l.b16 %v6420
  %v6455 = vunpack.c.l.b16 %v6421
  %v6456 = vunpack.c.l.b16 %v6422
  %v6457 = vunpack.c.l.b16 %v6423
  %v6458 = vunpack.c.l.b16 %v6424
  %v6459 = vunpack.c.l.b16 %v6425
  %v6460 = vunpack.c.l.b16 %v6426
  %v6461 = vunpack.c.l.b16 %v6427
  %v6462 = vunpack.c.l.b16 %v6428
  %v6463 = vunpack.c.l.b16 %v6429
  %v6464 = vunpack.c.l.b16 %v6430
  %v6465 = vunpack.c.l.b16 %v6431
  %v6466 = vpack.c.b16 %v6452, %v6451
  %v6467 = vpack.c.b16 %v6454, %v6453
  %v6468 = vpack.c.b16 %v6456, %v6455
  %v6469 = vpack.c.b16 %v6458, %v6457
  %v6470 = vpack.c.b16 %v6460, %v6459
  %v6471 = vpack.c.b16 %v6462, %v6461
  %v6472 = vpack.c.b16 %v6464, %v6463
  %v6473 = vpack.c.b16 %v6465, %v6465
  %vm6481 = vcmask 982016
  %v6483 = vsel %vm6481, %v6416, 0
  %vm6485 = vcmask 1043456
  %v6487 = vsel %vm6485, %v6473, 0
  %6489 = vmatpush.bf16.msra.mxu0 %v6487
  %6490 = vmatpush.bf16.msra.mxu0 %v6472
  %6491 = vmatpush.bf16.msra.mxu0 %v6471
  %6492 = vmatpush.bf16.msra.mxu0 %v6470
  %6493 = vmatpush.bf16.msra.mxu0 %v6469
  %6494 = vmatpush.bf16.msra.mxu0 %v6468
  %6495 = vmatpush.bf16.msra.mxu0 %v6467
  %6496 = vmatpush.bf16.msra.mxu0 %v6466
  %6497 = vmatmul.bf16.gmra.mxu0 %v6483
  %v6498 = vpop.f32.mrf.mxu0
  %v6499 = vadd.f32 %v6434, %v6498
  %v6500 = vpop.f32.mrf.mxu0
  %6501 = vdwg.mxu0
  %v6502 = vmax.f32 %v6499, 0.0
  %v6503 = vld [vmem:[%s9] sm:$0x1]
  %v6505 = vperm.slane %v6503, 0
  %v6507 = vmul.f32 %v6502, %v6505
  %vm6508 = vcmask 680960
  %v6509 = vsel %vm6508, %v6507, 0.0
  %6510 = vadd.xlane.f32.xlu0 %v6509
  %v6511 = vpop.xlane.xlu0 %6510
  %v6512 = vld [vmem:[#allocation2] sm:$0x1]
  %v6514 = vperm.slane %v6512, 0
  %v6516 = vadd.f32 %v6511, %v6514
  %vm6517 = vcmask 1024
  %6518 = vst.msk [vmem:[%s11] sm:$0x3] %vm6517, %v6516
  // Predicated region
  $region46: #{lenet_forward.1} parent=0 // pred_check
    _
  $region47: #{lenet_forward.1} parent=0 // pred_check_branch
    %6520 = sbr.rel (0) target = $region49
  $region48: #{lenet_forward.1} parent=0 // pred_region
    _
  $region49: #{lenet_forward.1} parent=0 // pred_fallthru
    _
  // Predicated region
  $region50: #{lenet_forward.1} parent=0 // pred_check
    _
  $region51: #{lenet_forward.1} parent=0 // pred_check_branch
    %6522 = sbr.rel (0) target = $region53
  $region52: #{lenet_forward.1} parent=0 // pred_region
    _
  $region53: #{lenet_forward.1} parent=0 // pred_fallthru
    _

</llo_original>
